<compile_context>
chip_gen: v7x
topology: tpu7x:2x2x1
jax: 0.10.0
libtpu: 0.0.40
codegen_flags: <defaults>
</compile_context>

<pallas_src>
import functools

import jax
import jax.numpy as jnp
from jax.experimental import pallas as pl
from jax.experimental.pallas import tpu as pltpu


def _round_up(x: int, m: int) -> int:
    return ((x + m - 1) // m) * m


def _luong_kernel(src_ref, tgt_ref, w_ref, out_ref, *, target_dim: int):
    """One batch-tile of Luong attention.

    src_ref: (bt, S, Ds)     source_hidden_sequence tile
    tgt_ref: (bt, 1, Dt)     target_hidden tile (Ds == Dt required by the score matmul)
    w_ref:   (Dt+Ds, U)      attention_weights (full)
    out_ref: (bt, 1, U)      tanh output tile
    """
    src = src_ref[...]                                  # (bt, S, D) f32
    tgt = tgt_ref[...]                                  # (bt, 1, D) f32

    # attention_score: batched MXU contraction (flash-style, q-tile = 1) -> (bt, 1, S)
    score = jnp.einsum('bqd,bkd->bqk', tgt, src,
                       preferred_element_type=jnp.float32)

    # softmax over the sequence axis (torch dim=1); lane-dense layout, exact divide
    m = jnp.max(score, axis=-1, keepdims=True)          # (bt, 1, 1)
    e = jnp.exp(score - m)                              # (bt, 1, S)
    denom = jnp.sum(e, axis=-1, keepdims=True)          # (bt, 1, 1)
    weights = e / denom                                 # (bt, 1, S)

    # weighted = sum_s weights * src : second batched MXU contraction (p @ V style)
    weighted = jnp.einsum('bqk,bkd->bqd', weights, src,
                          preferred_element_type=jnp.float32)   # (bt, 1, D)

    # tanh(cat([tgt, weighted], -1) @ W) == tanh(tgt @ W[:Dt] + weighted @ W[Dt:])
    pre = (jnp.dot(tgt, w_ref[:target_dim, :], preferred_element_type=jnp.float32)
           + jnp.dot(weighted, w_ref[target_dim:, :], preferred_element_type=jnp.float32))
    out_ref[...] = jnp.tanh(pre).astype(out_ref.dtype)


def luong_attention_pallas(source_hidden_sequence, target_hidden, attention_weights,
                           *, block_b: int | None = None):
    """source_hidden_sequence: (B, S, Ds) f32; target_hidden: (B, Dt) f32 (Ds == Dt);
    attention_weights: (Dt+Ds, U) f32.  Returns (B, U) f32."""
    B, S, Ds = source_hidden_sequence.shape
    B2, Dt = target_hidden.shape
    DW, U = attention_weights.shape
    assert B2 == B
    assert Ds == Dt, "the score matmul requires source_dim == target_dim"
    assert DW == Dt + Ds

    itemsize = jnp.dtype(source_hidden_sequence.dtype).itemsize

    # --- batch-tile selection: big tiles (multi-MiB src blocks) amortize the per-step
    # pipeline overhead; budget keeps the double-buffered src tile ~16 MiB, safe within
    # v7x's 64 MiB physical VMEM and v5e/v6e defaults once vmem_limit_bytes is raised.
    if block_b is None:
        src_row_bytes = S * Ds * itemsize
        budget = 8 << 20                                   # per src buffer (x2 for double buffering)
        block_b = max(8, (budget // max(src_row_bytes, 1)) // 8 * 8)
    bt = min(block_b, _round_up(B, 8))
    if bt >= B and B > 8:
        # keep >= 2 grid steps so the "parallel" axis can shard over v7x's two TensorCores
        bt = _round_up(pl.cdiv(B, 2), 8)

    pad = (-B) % bt
    src = source_hidden_sequence
    tgt = target_hidden
    if pad:
        # Padded rows are well-defined: zero scores -> uniform softmax -> zero weighted
        # -> zero output, sliced off at the end.
        src = jnp.pad(src, ((0, pad), (0, 0), (0, 0)))
        tgt = jnp.pad(tgt, ((0, pad), (0, 0)))
    Bp = B + pad
    tgt3 = tgt.reshape(Bp, 1, Dt)                          # free XLA reshape outside the kernel

    # scoped-VMEM budget: src/tgt/out double-buffered, W block constant; 2x headroom.
    vmem_bytes = (2 * bt * S * Ds * itemsize
                  + 2 * bt * Dt * itemsize
                  + 2 * DW * U * itemsize
                  + 2 * bt * U * 4)
    vmem_limit = int(min(max(2 * vmem_bytes, 32 << 20), 48 << 20))

    kernel = functools.partial(_luong_kernel, target_dim=Dt)

    out3 = pl.pallas_call(
        kernel,
        out_shape=jax.ShapeDtypeStruct((Bp, 1, U), jnp.float32),
        grid_spec=pltpu.PrefetchScalarGridSpec(
            num_scalar_prefetch=0,
            grid=(Bp // bt,),
            in_specs=[
                pl.BlockSpec((bt, S, Ds), lambda i: (i, 0, 0)),
                pl.BlockSpec((bt, 1, Dt), lambda i: (i, 0, 0)),
                pl.BlockSpec((DW, U), lambda i: (0, 0)),
            ],
            out_specs=pl.BlockSpec((bt, 1, U), lambda i: (i, 0, 0)),
        ),
        compiler_params=pltpu.CompilerParams(
            dimension_semantics=("parallel",),
            vmem_limit_bytes=vmem_limit,
        ),
    )(src, tgt3, attention_weights)
    return out3.reshape(Bp, U)[:B]


def luong_attention_reference(source_hidden_sequence, target_hidden, attention_weights):
    """Pure-JAX mirror of the PyTorch forward (full-precision matmuls for validation)."""
    score = jnp.matmul(source_hidden_sequence, target_hidden[:, :, None],
                       precision=jax.lax.Precision.HIGHEST)          # (B, S, 1)
    weights = jax.nn.softmax(score, axis=1)
    weighted = jnp.sum(source_hidden_sequence * weights, axis=1)      # (B, Ds)
    concat = jnp.concatenate([target_hidden, weighted], axis=1)       # (B, Dt+Ds)
    return jnp.tanh(jnp.matmul(concat, attention_weights,
                               precision=jax.lax.Precision.HIGHEST))


if __name__ == "__main__":
    # source_dim == target_dim (required by the score matmul in the original module);
    # feature dims are multiples of the 128-lane width, sequence a multiple of 8.
    B, S, D, U = 32, 64, 128, 128   # batch, seq, source/target dim, output_units

    key = jax.random.PRNGKey(0)
    ks, kt, kw = jax.random.split(key, 3)
    src = jax.random.normal(ks, (B, S, D), jnp.float32)
    tgt = jax.random.normal(kt, (B, D), jnp.float32)
    # Small weight scale keeps tanh out of saturation so the comparison is meaningful.
    w = 0.05 * jax.random.normal(kw, (2 * D, U), jnp.float32)

    out = luong_attention_pallas(src, tgt, w)
    out = jax.block_until_ready(out)

    ref = luong_attention_reference(src, tgt, w)
    assert out.shape == (B, U)
    # Tolerance accounts for MXU f32 multi-pass emulation inside the kernel vs XLA's
    # HIGHEST-precision f32 matmuls in the reference; real semantic errors are >= 5e-2.
    err = float(jnp.max(jnp.abs(out - ref)))
    assert jnp.allclose(out, ref, atol=5e-3, rtol=5e-3), f"max abs diff = {err}"

    print("KERNEL_OK")
</pallas_src>

<mosaic_0001>
module attributes {stable_mosaic.version = 11 : i64} {
  func.func @_luong_kernel(%arg0: i32, %arg1: memref<16x64x128xf32, #tpu.memory_space<vmem>>, %arg2: memref<16x1x128xf32, #tpu.memory_space<vmem>>, %arg3: memref<256x128xf32, #tpu.memory_space<vmem>>, %arg4: memref<16x1x128xf32, #tpu.memory_space<vmem>>) attributes {dimension_semantics = [#tpu.dimension_semantics<parallel>], iteration_bounds = array<i64: 2>, scalar_prefetch = 0 : i64, scratch_operands = 0 : i64, tpu.core_type = #tpu.core_type<tc>, window_params = [{transform_indices = @transform_0, window_bounds = array<i64: 16, 64, 128>}, {transform_indices = @transform_1, window_bounds = array<i64: 16, 1, 128>}, {pipeline_mode = #tpu.pipeline_mode<synchronous>, transform_indices = @transform_2, window_bounds = array<i64: 256, 128>}, {transform_indices = @transform_3, window_bounds = array<i64: 16, 1, 128>}]} {
    %c0 = arith.constant 0 : index
    %c0_0 = arith.constant 0 : index
    %c0_1 = arith.constant 0 : index
    %0 = vector.load %arg1[%c0, %c0_0, %c0_1] : memref<16x64x128xf32, #tpu.memory_space<vmem>>, vector<16x64x128xf32>
    %c0_2 = arith.constant 0 : index
    %c0_3 = arith.constant 0 : index
    %c0_4 = arith.constant 0 : index
    %1 = vector.load %arg2[%c0_2, %c0_3, %c0_4] : memref<16x1x128xf32, #tpu.memory_space<vmem>>, vector<16x1x128xf32>
    "tpu.trace_start"() <{level = 10 : i32, message = "bqd,bkd->bqk"}> : () -> ()
    %cst = arith.constant dense<0.000000e+00> : vector<16x1x64xf32>
    %2 = tpu.matmul %1, %0, %cst {dimension_numbers = #tpu.dot_dimension_numbers<[2], [2], [1], [1], [0, 0, 0, 1, 1, 1], [0], [0]>} : vector<16x1x128xf32>, vector<16x64x128xf32>, vector<16x1x64xf32> -> vector<16x1x64xf32>
    "tpu.trace_stop"() : () -> ()
    %cst_5 = arith.constant dense<0xFF800000> : vector<16x1xf32>
    %3 = vector.multi_reduction <maximumf>, %2, %cst_5 [2] : vector<16x1x64xf32> to vector<16x1xf32>
    %4 = vector.shape_cast %3 : vector<16x1xf32> to vector<16x1x1xf32>
    %5 = vector.broadcast %4 : vector<16x1x1xf32> to vector<16x1x64xf32>
    %6 = arith.subf %2, %5 : vector<16x1x64xf32>
    %7 = math.exp %6 : vector<16x1x64xf32>
    %cst_6 = arith.constant dense<0.000000e+00> : vector<16x1xf32>
    %8 = vector.multi_reduction <add>, %7, %cst_6 [2] : vector<16x1x64xf32> to vector<16x1xf32>
    %9 = vector.shape_cast %8 : vector<16x1xf32> to vector<16x1x1xf32>
    %10 = vector.broadcast %9 : vector<16x1x1xf32> to vector<16x1x64xf32>
    %11 = arith.divf %7, %10 : vector<16x1x64xf32>
    "tpu.trace_start"() <{level = 10 : i32, message = "bqk,bkd->bqd"}> : () -> ()
    %cst_7 = arith.constant dense<0.000000e+00> : vector<16x1x128xf32>
    %12 = tpu.matmul %11, %0, %cst_7 {dimension_numbers = #tpu.dot_dimension_numbers<[2], [1], [1], [2], [0, 0, 0, 1, 1, 2], [0], [0]>} : vector<16x1x64xf32>, vector<16x64x128xf32>, vector<16x1x128xf32> -> vector<16x1x128xf32>
    "tpu.trace_stop"() : () -> ()
    %c0_8 = arith.constant 0 : index
    %c0_9 = arith.constant 0 : index
    %13 = vector.load %arg3[%c0_8, %c0_9] : memref<256x128xf32, #tpu.memory_space<vmem>>, vector<128x128xf32>
    %cst_10 = arith.constant dense<0.000000e+00> : vector<16x1x128xf32>
    %14 = tpu.matmul %1, %13, %cst_10 {dimension_numbers = #tpu.dot_dimension_numbers<[2], [0], [0, 1], [1], [0, 0, 0, 1, 1, 1], [], []>} : vector<16x1x128xf32>, vector<128x128xf32>, vector<16x1x128xf32> -> vector<16x1x128xf32>
    %c128 = arith.constant 128 : index
    %c0_11 = arith.constant 0 : index
    %15 = vector.load %arg3[%c128, %c0_11] : memref<256x128xf32, #tpu.memory_space<vmem>>, vector<128x128xf32>
    %cst_12 = arith.constant dense<0.000000e+00> : vector<16x1x128xf32>
    %16 = tpu.matmul %12, %15, %cst_12 {dimension_numbers = #tpu.dot_dimension_numbers<[2], [0], [0, 1], [1], [0, 0, 0, 1, 1, 1], [], []>} : vector<16x1x128xf32>, vector<128x128xf32>, vector<16x1x128xf32> -> vector<16x1x128xf32>
    %17 = arith.addf %14, %16 : vector<16x1x128xf32>
    %18 = math.tanh %17 : vector<16x1x128xf32>
    %c0_13 = arith.constant 0 : index
    %c0_14 = arith.constant 0 : index
    %c0_15 = arith.constant 0 : index
    %19 = vector.load %arg4[%c0_13, %c0_14, %c0_15] : memref<16x1x128xf32, #tpu.memory_space<vmem>>, vector<16x1x128xf32>
    tpu.vector_store %arg4[%c0_13, %c0_14, %c0_15], %18 {strides = array<i32>} : memref<16x1x128xf32, #tpu.memory_space<vmem>>, vector<16x1x128xf32>,
    return
  }
  func.func @transform_0(%arg0: i32) -> (i32, i32, i32) {
    %c0_i32 = arith.constant 0 : i32
    %c0_i32_0 = arith.constant 0 : i32
    %c0_i32_1 = arith.constant 0 : i32
    return %arg0, %c0_i32, %c0_i32_0 : i32, i32, i32
  }
  func.func @transform_1(%arg0: i32) -> (i32, i32, i32) {
    %c0_i32 = arith.constant 0 : i32
    %c0_i32_0 = arith.constant 0 : i32
    %c0_i32_1 = arith.constant 0 : i32
    return %arg0, %c0_i32, %c0_i32_0 : i32, i32, i32
  }
  func.func @transform_2(%arg0: i32) -> (i32, i32) {
    %c0_i32 = arith.constant 0 : i32
    %c0_i32_0 = arith.constant 0 : i32
    %c0_i32_1 = arith.constant 0 : i32
    return %c0_i32, %c0_i32_0 : i32, i32
  }
  func.func @transform_3(%arg0: i32) -> (i32, i32, i32) {
    %c0_i32 = arith.constant 0 : i32
    %c0_i32_0 = arith.constant 0 : i32
    %c0_i32_1 = arith.constant 0 : i32
    return %arg0, %c0_i32, %c0_i32_0 : i32, i32, i32
  }
}

</mosaic_0001>

<llo_original>
// kernel: tpu_custom_call.1
$region0: #{tpu_custom_call.1}
  #allocation0 [shape = 'u32[]', space=smem, size = 0x4, offset = 0x4, fixed_abs, tag = 'smem constant byte address 0x4 - core index']
  #allocation1 [shape = 'u32[144,128]{1,0:T(1,128)}', space=vmem, size = 0x12000, scoped, tag = 'internal scratch']
  %s0 = inlined_call_operand.hbm [shape: f32[32,64,128], index: 0, kind: input, shape index: {}]
  %s1 = inlined_call_operand.hbm [shape: f32[32,1,128], index: 1, kind: input, shape index: {}]
  %s2 = inlined_call_operand.hbm [shape: f32[256,128], index: 2, kind: input, shape index: {}]
  %s3 = inlined_call_operand.hbm [shape: f32[32,1,128], index: 3, kind: output, shape index: {}]
  %s4 = sld [smem:[#allocation0]]
  $region57: #{tpu_custom_call.1} parent=0
    _
  %s6 = ssub.s32 1, %s4
  %s7 = scalar_select 0, %s6, %s4
  $region1: #{tpu_custom_call.1} parent=0
    #allocation2 [shape = 'u8[1048576]{0}', space=vmem, size = 0x100000, scoped, tag = 'input window, operand 0']
    #allocation3 [shape = 's32[2]{0}', space=sflag, size = 0x8, scoped, tag = 'scoped memory for tpu_custom_call.1']
    #allocation4 [shape = 's32[2]{0}', space=sflag, size = 0x8, scoped, tag = 'scoped memory for tpu_custom_call.1']
    #allocation5 [shape = 'u8[16384]{0}', space=vmem, size = 0x4000, scoped, tag = 'input window, operand 1']
    #allocation6 [shape = 's32[2]{0}', space=sflag, size = 0x8, scoped, tag = 'scoped memory for tpu_custom_call.1']
    #allocation7 [shape = 'u8[131072]{0}', space=vmem, size = 0x20000, scoped, tag = 'input window, operand 2, single buffered']
    #allocation8 [shape = 'u8[16384]{0}', space=vmem, size = 0x4000, scoped, tag = 'output window, operand 0']
    %8 = vsyncpa [#allocation3], 0
    %s9 = scalar_lea.sflag [#allocation3], 1
    %10 = vsyncpa %s9, 0
    %11 = vsyncpa [#allocation6], 0
    %s12 = scalar_lea.sflag [#allocation6], 1
    %13 = vsyncpa %s12, 0
    %14 = vsyncpa [#allocation4], 0
    %s15 = scalar_lea.sflag [#allocation4], 1
    %16 = vsyncpa %s15, 0
    loop: start=0, step=1, limit=4
    $region2: #{tpu_custom_call.1} parent=1 // loop_pre_header
      _
    $region3: #{tpu_custom_call.1} parent=1 // loop_header
      %s18 = sphi 0, %s22
      %p19 = scmp.ge.s32.totalorder %s18, 4
      %s28 = sphi 0, %s30
      %s31 = sphi 0, %s28
      %s32 = sphi 0, %s31
      %s48 = sphi 0, %s32
      %s54 = sphi 0, %s56
      %s57 = sphi 0, %s54
      %s58 = sphi 0, %s57
      %s74 = sphi 0, %s58
      %s78 = sphi 0, %s78
      %s80 = sphi 0, %s78
      %s81 = sphi 0, %s80
      %s95 = sphi 0, %s81
      %s101 = sphi 0, %s103
      %s104 = sphi 0, %s101
      %s105 = sphi 0, %s104
      %s121 = sphi 0, %s105
    $region4: #{tpu_custom_call.1} parent=1 // loop_header_branch
      %21 = sbr.rel (%p19) target = $region8
    $region5: #{tpu_custom_call.1} parent=1 // loop_body
      %s23 = ssub.s32 %s18, 1
      %s24 = ssub.s32 %s18, 2
      %s25 = sadd.s32 %s18, 1
      %s26 = ssub.s32 %s18, %s25
      %p27 = scmp.eq.s32.totalorder %s26, 0
      %s29 = sadd.s32 %s28, 1
      %s30 = scalar_select %p27, %s28, %s29
      %p33 = pneg %p27
      %p34 = scmp.eq.s32.totalorder %s18, 1
      %p35 = por %p33, %p34
      %p36 = scmp.ne.s32.totalorder %s28, %s31
      %p37 = scmp.eq.s32.totalorder %s18, 0
      %p38 = por %p36, %p37
      %p39 = scmp.ne.s32.totalorder %s28, %s31
      %p40 = scmp.eq.s32.totalorder %s23, 1
      %p41 = por %p39, %p40
      %p42 = scmp.ne.s32.totalorder %s31, %s32
      %p43 = scmp.eq.s32.totalorder %s23, 0
      %p44 = por %p42, %p43
      %p45 = scmp.ne.s32.totalorder %s31, %s32
      %p46 = scmp.eq.s32.totalorder %s24, 1
      %p47 = por %p45, %p46
      %p49 = scmp.ne.s32.totalorder %s32, %s48
      %p50 = scmp.eq.s32.totalorder %s24, 0
      %p51 = por %p49, %p50
      %s52 = ssub.s32 %s18, %s25
      %p53 = scmp.eq.s32.totalorder %s52, 0
      %s55 = sadd.s32 %s54, 1
      %s56 = scalar_select %p53, %s54, %s55
      %p59 = pneg %p53
      %p60 = scmp.eq.s32.totalorder %s18, 1
      %p61 = por %p59, %p60
      %p62 = scmp.ne.s32.totalorder %s54, %s57
      %p63 = scmp.eq.s32.totalorder %s18, 0
      %p64 = por %p62, %p63
      %p65 = scmp.ne.s32.totalorder %s54, %s57
      %p66 = scmp.eq.s32.totalorder %s23, 1
      %p67 = por %p65, %p66
      %p68 = scmp.ne.s32.totalorder %s57, %s58
      %p69 = scmp.eq.s32.totalorder %s23, 0
      %p70 = por %p68, %p69
      %p71 = scmp.ne.s32.totalorder %s57, %s58
      %p72 = scmp.eq.s32.totalorder %s24, 1
      %p73 = por %p71, %p72
      %p75 = scmp.ne.s32.totalorder %s58, %s74
      %p76 = scmp.eq.s32.totalorder %s24, 0
      %p77 = por %p75, %p76
      %s79 = sadd.s32 %s78, 1
      %p82 = scmp.eq.s32.totalorder %s18, 1
      %p83 = scmp.ne.s32.totalorder %s78, %s80
      %p84 = scmp.eq.s32.totalorder %s18, 0
      %p85 = por %p83, %p84
      %p86 = scmp.ne.s32.totalorder %s78, %s80
      %p87 = scmp.eq.s32.totalorder %s23, 1
      %p88 = por %p86, %p87
      %p89 = scmp.ne.s32.totalorder %s80, %s81
      %p90 = scmp.eq.s32.totalorder %s23, 0
      %p91 = por %p89, %p90
      %p92 = scmp.ne.s32.totalorder %s80, %s81
      %p93 = scmp.eq.s32.totalorder %s24, 1
      %p94 = por %p92, %p93
      %p96 = scmp.ne.s32.totalorder %s81, %s95
      %p97 = scmp.eq.s32.totalorder %s24, 0
      %p98 = por %p96, %p97
      %s99 = ssub.s32 %s18, %s25
      %p100 = scmp.eq.s32.totalorder %s99, 0
      %s102 = sadd.s32 %s101, 1
      %s103 = scalar_select %p100, %s101, %s102
      %p106 = pneg %p100
      %p107 = scmp.eq.s32.totalorder %s18, 1
      %p108 = por %p106, %p107
      %p109 = scmp.ne.s32.totalorder %s101, %s104
      %p110 = scmp.eq.s32.totalorder %s18, 0
      %p111 = por %p109, %p110
      %p112 = scmp.ne.s32.totalorder %s101, %s104
      %p113 = scmp.eq.s32.totalorder %s23, 1
      %p114 = por %p112, %p113
      %p115 = scmp.ne.s32.totalorder %s104, %s105
      %p116 = scmp.eq.s32.totalorder %s23, 0
      %p117 = por %p115, %p116
      %p118 = scmp.ne.s32.totalorder %s104, %s105
      %p119 = scmp.eq.s32.totalorder %s24, 1
      %p120 = por %p118, %p119
      %p122 = scmp.ne.s32.totalorder %s105, %s121
      %p123 = scmp.eq.s32.totalorder %s24, 0
      %p124 = por %p122, %p123
      %p125 = scmp.le.s32.totalorder 1, %s18
      %p126 = scmp.lt.s32.totalorder %s18, 3
      %p127 = pnand %p125, %p126
      %p128 = pneg %p127
      // Predicated region
      $region9: #{tpu_custom_call.1} parent=5 // pred_check
        _
      $region10: #{tpu_custom_call.1} parent=5 // pred_check_branch
        %130 = sbr.rel (%p127) target = $region12
      $region11: #{tpu_custom_call.1} parent=5 // pred_region
        %s131 = ssub.s32 %s18, 1
        // Predicated region
        $region13: #{tpu_custom_call.1} parent=11 // pred_check
          %p132 = pneg %p91
        $region14: #{tpu_custom_call.1} parent=11 // pred_check_branch
          %134 = sbr.rel (%p132) target = $region16
        $region15: #{tpu_custom_call.1} parent=11 // pred_region
          %s136 = ssub.s32 4096, 4096
          %137 = vsyncadd [#allocation6], %s136
          %s138 = sshll.u32 [#allocation7], 4
          %s139 = int_to_ptr.vmem [resolvable:$true] %s138
          %144 = dma.hbm_to_vmem [thread:$0]  %s2, 4096, %s139, [#allocation6], 128, 128, 8
        $region16: #{tpu_custom_call.1} parent=11 // pred_fallthru
          _
      $region12: #{tpu_custom_call.1} parent=5 // pred_fallthru
        _
      %p145 = scmp.lt.s32.totalorder %s18, 2
      // Predicated region
      $region17: #{tpu_custom_call.1} parent=5 // pred_check
        %p146 = pneg %p145
      $region18: #{tpu_custom_call.1} parent=5 // pred_check_branch
        %148 = sbr.rel (%p146) target = $region20
      $region19: #{tpu_custom_call.1} parent=5 // pred_region
        // Predicated region
        $region21: #{tpu_custom_call.1} parent=19 // pred_check
          %p149 = pneg %p38
        $region22: #{tpu_custom_call.1} parent=19 // pred_check_branch
          %151 = sbr.rel (%p149) target = $region24
        $region23: #{tpu_custom_call.1} parent=19 // pred_region
          %s152 = sand.u32 %s28, 1
          %s153 = scalar_lea.sflag [#allocation3], %s152
          %s154 = sand.u32 %s28, 1
          %s155 = smul.addr %s154, 1024
          %s156 = scalar_lea.vmem [#allocation2], %s155
          %s157 = smul.u32 16, %s18
          %s159 = ssub.s32 16384, 16384
          %160 = vsyncadd %s153, %s159
          %s161 = smul.addr %s157, 8
          %s162 = smul.addr %s161, 128
          %s163 = scalar_lea.hbm %s0, %s162
          %s164 = sshll.u32 %s156, 4
          %s165 = int_to_ptr.vmem [resolvable:$true] %s164
          %170 = dma.hbm_to_vmem [thread:$0]  %s163, 16384, %s165, %s153, 128, 128, 8
        $region24: #{tpu_custom_call.1} parent=19 // pred_fallthru
          _
        // Predicated region
        $region25: #{tpu_custom_call.1} parent=19 // pred_check
          %p171 = pneg %p64
        $region26: #{tpu_custom_call.1} parent=19 // pred_check_branch
          %173 = sbr.rel (%p171) target = $region28
        $region27: #{tpu_custom_call.1} parent=19 // pred_region
          %s174 = sand.u32 %s18, 1
          %s175 = scalar_lea.sflag [#allocation6], %s174
          %s176 = sand.u32 %s54, 1
          %s177 = smul.addr %s176, 16
          %s178 = scalar_lea.vmem [#allocation5], %s177
          %s179 = smul.u32 16, %s18
          %s181 = ssub.s32 256, 256
          %182 = vsyncadd %s175, %s181
          %s183 = smul.addr %s179, 16
          %s184 = scalar_lea.hbm %s1, %s183
          %s185 = sshll.u32 %s178, 4
          %s186 = int_to_ptr.vmem [resolvable:$true] %s185
          %191 = dma.hbm_to_vmem [thread:$0]  %s184, 256, %s186, %s175, 16, 16, 1
        $region28: #{tpu_custom_call.1} parent=19 // pred_fallthru
          _
      $region20: #{tpu_custom_call.1} parent=5 // pred_fallthru
        _
      %p192 = scmp.le.s32.totalorder 1, %s18
      %p193 = scmp.lt.s32.totalorder %s18, 3
      %p194 = pnand %p192, %p193
      %p195 = pneg %p194
      // Predicated region
      $region29: #{tpu_custom_call.1} parent=5 // pred_check
        _
      $region30: #{tpu_custom_call.1} parent=5 // pred_check_branch
        %197 = sbr.rel (%p194) target = $region32
      $region31: #{tpu_custom_call.1} parent=5 // pred_region
        %s198 = ssub.s32 %s18, 1
        %s199 = sand.u32 %s31, 1
        %s200 = scalar_lea.sflag [#allocation3], %s199
        %s201 = sand.u32 %s31, 1
        %s202 = smul.addr %s201, 1024
        %s203 = scalar_lea.vmem [#allocation2], %s202
        // Predicated region
        $region33: #{tpu_custom_call.1} parent=31 // pred_check
          %p204 = pneg %p44
        $region34: #{tpu_custom_call.1} parent=31 // pred_check_branch
          %206 = sbr.rel (%p204) target = $region36
        $region35: #{tpu_custom_call.1} parent=31 // pred_region
          %207 = dma.done %s200, 16384
        $region36: #{tpu_custom_call.1} parent=31 // pred_fallthru
          _
        %s208 = sand.u32 %s23, 1
        %s209 = scalar_lea.sflag [#allocation6], %s208
        %s210 = sand.u32 %s57, 1
        %s211 = smul.addr %s210, 16
        %s212 = scalar_lea.vmem [#allocation5], %s211
        // Predicated region
        $region37: #{tpu_custom_call.1} parent=31 // pred_check
          %p213 = pneg %p70
        $region38: #{tpu_custom_call.1} parent=31 // pred_check_branch
          %215 = sbr.rel (%p213) target = $region40
        $region39: #{tpu_custom_call.1} parent=31 // pred_region
          %216 = dma.done %s209, 256
        $region40: #{tpu_custom_call.1} parent=31 // pred_fallthru
          _
        // Predicated region
        $region41: #{tpu_custom_call.1} parent=31 // pred_check
          %p217 = pneg %p91
        $region42: #{tpu_custom_call.1} parent=31 // pred_check_branch
          %219 = sbr.rel (%p217) target = $region44
        $region43: #{tpu_custom_call.1} parent=31 // pred_region
          %220 = dma.done [#allocation6], 4096
        $region44: #{tpu_custom_call.1} parent=31 // pred_fallthru
          _
        %s221 = sand.u32 %s31, 1
        %s222 = scalar_lea.sflag [#allocation3], %s221
        %s223 = sand.u32 %s31, 1
        %s224 = smul.addr %s223, 1024
        %s225 = scalar_lea.vmem [#allocation2], %s224
        %p226 = pneg %p44
        %p227 = pneg %p41
        %s228 = sand.u32 %s23, 1
        %s229 = scalar_lea.sflag [#allocation6], %s228
        %s230 = sand.u32 %s57, 1
        %s231 = smul.addr %s230, 16
        %s232 = scalar_lea.vmem [#allocation5], %s231
        %p233 = pneg %p70
        %p234 = pneg %p67
        %p235 = pneg %p91
        %p236 = pneg %p88
        %p237 = pneg %p117
        %p238 = pneg %p114
        %s239 = sand.u32 %s104, 1
        %s240 = scalar_lea.sflag [#allocation4], %s239
        %s241 = sand.u32 %s104, 1
        %s242 = smul.addr %s241, 16
        %s243 = scalar_lea.vmem [#allocation8], %s242
        %s244 = smul.u32 16, %s23
        %s245 = smul.u32 16, %s23
        %s246 = smul.u32 16, %s23
        %v247 = vld [vmem:[%s203] sm:$0xff]
        %v248 = vld [vmem:[%s203 + $0x8] sm:$0xff]
        %v249 = vld [vmem:[%s203 + $0x10] sm:$0xff]
        %v250 = vld [vmem:[%s203 + $0x18] sm:$0xff]
        %v251 = vld [vmem:[%s203 + $0x20] sm:$0xff]
        %v252 = vld [vmem:[%s203 + $0x28] sm:$0xff]
        %v253 = vld [vmem:[%s203 + $0x30] sm:$0xff]
        %v254 = vld [vmem:[%s203 + $0x38] sm:$0xff]
        %v255 = vld [vmem:[%s203 + $0x40] sm:$0xff]
        %v256 = vld [vmem:[%s203 + $0x48] sm:$0xff]
        %v257 = vld [vmem:[%s203 + $0x50] sm:$0xff]
        %v258 = vld [vmem:[%s203 + $0x58] sm:$0xff]
        %v259 = vld [vmem:[%s203 + $0x60] sm:$0xff]
        %v260 = vld [vmem:[%s203 + $0x68] sm:$0xff]
        %v261 = vld [vmem:[%s203 + $0x70] sm:$0xff]
        %v262 = vld [vmem:[%s203 + $0x78] sm:$0xff]
        %v263 = vld [vmem:[%s203 + $0x80] sm:$0xff]
        %v264 = vld [vmem:[%s203 + $0x88] sm:$0xff]
        %v265 = vld [vmem:[%s203 + $0x90] sm:$0xff]
        %v266 = vld [vmem:[%s203 + $0x98] sm:$0xff]
        %v267 = vld [vmem:[%s203 + $0xa0] sm:$0xff]
        %v268 = vld [vmem:[%s203 + $0xa8] sm:$0xff]
        %v269 = vld [vmem:[%s203 + $0xb0] sm:$0xff]
        %v270 = vld [vmem:[%s203 + $0xb8] sm:$0xff]
        %v271 = vld [vmem:[%s203 + $0xc0] sm:$0xff]
        %v272 = vld [vmem:[%s203 + $0xc8] sm:$0xff]
        %v273 = vld [vmem:[%s203 + $0xd0] sm:$0xff]
        %v274 = vld [vmem:[%s203 + $0xd8] sm:$0xff]
        %v275 = vld [vmem:[%s203 + $0xe0] sm:$0xff]
        %v276 = vld [vmem:[%s203 + $0xe8] sm:$0xff]
        %v277 = vld [vmem:[%s203 + $0xf0] sm:$0xff]
        %v278 = vld [vmem:[%s203 + $0xf8] sm:$0xff]
        %v279 = vld [vmem:[%s203 + $0x100] sm:$0xff]
        %v280 = vld [vmem:[%s203 + $0x108] sm:$0xff]
        %v281 = vld [vmem:[%s203 + $0x110] sm:$0xff]
        %v282 = vld [vmem:[%s203 + $0x118] sm:$0xff]
        %v283 = vld [vmem:[%s203 + $0x120] sm:$0xff]
        %v284 = vld [vmem:[%s203 + $0x128] sm:$0xff]
        %v285 = vld [vmem:[%s203 + $0x130] sm:$0xff]
        %v286 = vld [vmem:[%s203 + $0x138] sm:$0xff]
        %v287 = vld [vmem:[%s203 + $0x140] sm:$0xff]
        %v288 = vld [vmem:[%s203 + $0x148] sm:$0xff]
        %v289 = vld [vmem:[%s203 + $0x150] sm:$0xff]
        %v290 = vld [vmem:[%s203 + $0x158] sm:$0xff]
        %v291 = vld [vmem:[%s203 + $0x160] sm:$0xff]
        %v292 = vld [vmem:[%s203 + $0x168] sm:$0xff]
        %v293 = vld [vmem:[%s203 + $0x170] sm:$0xff]
        %v294 = vld [vmem:[%s203 + $0x178] sm:$0xff]
        %v295 = vld [vmem:[%s203 + $0x180] sm:$0xff]
        %v296 = vld [vmem:[%s203 + $0x188] sm:$0xff]
        %v297 = vld [vmem:[%s203 + $0x190] sm:$0xff]
        %v298 = vld [vmem:[%s203 + $0x198] sm:$0xff]
        %v299 = vld [vmem:[%s203 + $0x1a0] sm:$0xff]
        %v300 = vld [vmem:[%s203 + $0x1a8] sm:$0xff]
        %v301 = vld [vmem:[%s203 + $0x1b0] sm:$0xff]
        %v302 = vld [vmem:[%s203 + $0x1b8] sm:$0xff]
        %v303 = vld [vmem:[%s203 + $0x1c0] sm:$0xff]
        %v304 = vld [vmem:[%s203 + $0x1c8] sm:$0xff]
        %v305 = vld [vmem:[%s203 + $0x1d0] sm:$0xff]
        %v306 = vld [vmem:[%s203 + $0x1d8] sm:$0xff]
        %v307 = vld [vmem:[%s203 + $0x1e0] sm:$0xff]
        %v308 = vld [vmem:[%s203 + $0x1e8] sm:$0xff]
        %v309 = vld [vmem:[%s203 + $0x1f0] sm:$0xff]
        %v310 = vld [vmem:[%s203 + $0x1f8] sm:$0xff]
        %v311 = vld [vmem:[%s203 + $0x200] sm:$0xff]
        %v312 = vld [vmem:[%s203 + $0x208] sm:$0xff]
        %v313 = vld [vmem:[%s203 + $0x210] sm:$0xff]
        %v314 = vld [vmem:[%s203 + $0x218] sm:$0xff]
        %v315 = vld [vmem:[%s203 + $0x220] sm:$0xff]
        %v316 = vld [vmem:[%s203 + $0x228] sm:$0xff]
        %v317 = vld [vmem:[%s203 + $0x230] sm:$0xff]
        %v318 = vld [vmem:[%s203 + $0x238] sm:$0xff]
        %v319 = vld [vmem:[%s203 + $0x240] sm:$0xff]
        %v320 = vld [vmem:[%s203 + $0x248] sm:$0xff]
        %v321 = vld [vmem:[%s203 + $0x250] sm:$0xff]
        %v322 = vld [vmem:[%s203 + $0x258] sm:$0xff]
        %v323 = vld [vmem:[%s203 + $0x260] sm:$0xff]
        %v324 = vld [vmem:[%s203 + $0x268] sm:$0xff]
        %v325 = vld [vmem:[%s203 + $0x270] sm:$0xff]
        %v326 = vld [vmem:[%s203 + $0x278] sm:$0xff]
        %v327 = vld [vmem:[%s203 + $0x280] sm:$0xff]
        %v328 = vld [vmem:[%s203 + $0x288] sm:$0xff]
        %v329 = vld [vmem:[%s203 + $0x290] sm:$0xff]
        %v330 = vld [vmem:[%s203 + $0x298] sm:$0xff]
        %v331 = vld [vmem:[%s203 + $0x2a0] sm:$0xff]
        %v332 = vld [vmem:[%s203 + $0x2a8] sm:$0xff]
        %v333 = vld [vmem:[%s203 + $0x2b0] sm:$0xff]
        %v334 = vld [vmem:[%s203 + $0x2b8] sm:$0xff]
        %v335 = vld [vmem:[%s203 + $0x2c0] sm:$0xff]
        %v336 = vld [vmem:[%s203 + $0x2c8] sm:$0xff]
        %v337 = vld [vmem:[%s203 + $0x2d0] sm:$0xff]
        %v338 = vld [vmem:[%s203 + $0x2d8] sm:$0xff]
        %v339 = vld [vmem:[%s203 + $0x2e0] sm:$0xff]
        %v340 = vld [vmem:[%s203 + $0x2e8] sm:$0xff]
        %v341 = vld [vmem:[%s203 + $0x2f0] sm:$0xff]
        %v342 = vld [vmem:[%s203 + $0x2f8] sm:$0xff]
        %v343 = vld [vmem:[%s203 + $0x300] sm:$0xff]
        %v344 = vld [vmem:[%s203 + $0x308] sm:$0xff]
        %v345 = vld [vmem:[%s203 + $0x310] sm:$0xff]
        %v346 = vld [vmem:[%s203 + $0x318] sm:$0xff]
        %v347 = vld [vmem:[%s203 + $0x320] sm:$0xff]
        %v348 = vld [vmem:[%s203 + $0x328] sm:$0xff]
        %v349 = vld [vmem:[%s203 + $0x330] sm:$0xff]
        %v350 = vld [vmem:[%s203 + $0x338] sm:$0xff]
        %v351 = vld [vmem:[%s203 + $0x340] sm:$0xff]
        %v352 = vld [vmem:[%s203 + $0x348] sm:$0xff]
        %v353 = vld [vmem:[%s203 + $0x350] sm:$0xff]
        %v354 = vld [vmem:[%s203 + $0x358] sm:$0xff]
        %v355 = vld [vmem:[%s203 + $0x360] sm:$0xff]
        %v356 = vld [vmem:[%s203 + $0x368] sm:$0xff]
        %v357 = vld [vmem:[%s203 + $0x370] sm:$0xff]
        %v358 = vld [vmem:[%s203 + $0x378] sm:$0xff]
        %v359 = vld [vmem:[%s203 + $0x380] sm:$0xff]
        %v360 = vld [vmem:[%s203 + $0x388] sm:$0xff]
        %v361 = vld [vmem:[%s203 + $0x390] sm:$0xff]
        %v362 = vld [vmem:[%s203 + $0x398] sm:$0xff]
        %v363 = vld [vmem:[%s203 + $0x3a0] sm:$0xff]
        %v364 = vld [vmem:[%s203 + $0x3a8] sm:$0xff]
        %v365 = vld [vmem:[%s203 + $0x3b0] sm:$0xff]
        %v366 = vld [vmem:[%s203 + $0x3b8] sm:$0xff]
        %v367 = vld [vmem:[%s203 + $0x3c0] sm:$0xff]
        %v368 = vld [vmem:[%s203 + $0x3c8] sm:$0xff]
        %v369 = vld [vmem:[%s203 + $0x3d0] sm:$0xff]
        %v370 = vld [vmem:[%s203 + $0x3d8] sm:$0xff]
        %v371 = vld [vmem:[%s203 + $0x3e0] sm:$0xff]
        %v372 = vld [vmem:[%s203 + $0x3e8] sm:$0xff]
        %v373 = vld [vmem:[%s203 + $0x3f0] sm:$0xff]
        %v374 = vld [vmem:[%s203 + $0x3f8] sm:$0xff]
        %v375 = vld [vmem:[%s212] sm:$0x1]
        %v376 = vld [vmem:[%s212 + $0x1] sm:$0x1]
        %v377 = vld [vmem:[%s212 + $0x2] sm:$0x1]
        %v378 = vld [vmem:[%s212 + $0x3] sm:$0x1]
        %v379 = vld [vmem:[%s212 + $0x4] sm:$0x1]
        %v380 = vld [vmem:[%s212 + $0x5] sm:$0x1]
        %v381 = vld [vmem:[%s212 + $0x6] sm:$0x1]
        %v382 = vld [vmem:[%s212 + $0x7] sm:$0x1]
        %v383 = vld [vmem:[%s212 + $0x8] sm:$0x1]
        %v384 = vld [vmem:[%s212 + $0x9] sm:$0x1]
        %v385 = vld [vmem:[%s212 + $0xa] sm:$0x1]
        %v386 = vld [vmem:[%s212 + $0xb] sm:$0x1]
        %v387 = vld [vmem:[%s212 + $0xc] sm:$0x1]
        %v388 = vld [vmem:[%s212 + $0xd] sm:$0x1]
        %v389 = vld [vmem:[%s212 + $0xe] sm:$0x1]
        %v390 = vld [vmem:[%s212 + $0xf] sm:$0x1]
        %391 = vmatprep.subr.mxu0 0.0
        %392 = vmatpush1.xpose.msra.mxu0 %v247
        %393 = vmatprep.subr.mxu0 0.0
        %394 = vmatpush1.xpose.msra.mxu0 %v248
        %395 = vmatprep.subr.mxu0 0.0
        %396 = vmatpush1.xpose.msra.mxu0 %v249
        %397 = vmatprep.subr.mxu0 0.0
        %398 = vmatpush1.xpose.msra.mxu0 %v250
        %399 = vmatprep.subr.mxu0 0.0
        %400 = vmatpush1.xpose.msra.mxu0 %v251
        %401 = vmatprep.subr.mxu0 0.0
        %402 = vmatpush1.xpose.msra.mxu0 %v252
        %403 = vmatprep.subr.mxu0 0.0
        %404 = vmatpush1.xpose.msra.mxu0 %v253
        %405 = vmatprep.subr.mxu0 0.0
        %406 = vmatpush1.xpose.msra.mxu0 %v254
        %407 = vmatprep.subr.mxu0 0.0
        %408 = vmatpush1.xpose.msra.mxu0 0.0
        %409 = vmatprep.subr.mxu0 0.0
        %410 = vmatpush1.xpose.msra.mxu0 0.0
        %411 = vmatprep.subr.mxu0 0.0
        %412 = vmatpush1.xpose.msra.mxu0 0.0
        %413 = vmatprep.subr.mxu0 0.0
        %414 = vmatpush1.xpose.msra.mxu0 0.0
        %415 = vmatprep.subr.mxu0 0.0
        %416 = vmatpush1.xpose.msra.mxu0 0.0
        %417 = vmatprep.subr.mxu0 0.0
        %418 = vmatpush1.xpose.msra.mxu0 0.0
        %419 = vmatprep.subr.mxu0 0.0
        %420 = vmatpush1.xpose.msra.mxu0 0.0
        %421 = vmatprep.subr.mxu0 0.0
        %422 = vmatpush1.xpose.msra.mxu0 0.0
        %423 = vmatprep.subr.mxu0 0.0
        %424 = vmatpush1.xpose.msra.mxu0 0.0
        %425 = vmatprep.subr.mxu0 0.0
        %426 = vmatpush1.xpose.msra.mxu0 0.0
        %427 = vmatprep.subr.mxu0 0.0
        %428 = vmatpush1.xpose.msra.mxu0 0.0
        %429 = vmatprep.subr.mxu0 0.0
        %430 = vmatpush1.xpose.msra.mxu0 0.0
        %431 = vmatprep.subr.mxu0 0.0
        %432 = vmatpush1.xpose.msra.mxu0 0.0
        %433 = vmatprep.subr.mxu0 0.0
        %434 = vmatpush1.xpose.msra.mxu0 0.0
        %435 = vmatprep.subr.mxu0 0.0
        %436 = vmatpush1.xpose.msra.mxu0 0.0
        %437 = vmatprep.subr.mxu0 0.0
        %438 = vmatpush1.xpose.msra.mxu0 0.0
        %439 = vmatprep.subr.mxu0 0.0
        %440 = vmatpush1.xpose.msra.mxu0 0.0
        %441 = vmatprep.subr.mxu0 0.0
        %442 = vmatpush1.xpose.msra.mxu0 0.0
        %443 = vmatprep.subr.mxu0 0.0
        %444 = vmatpush1.xpose.msra.mxu0 0.0
        %445 = vmatprep.subr.mxu0 0.0
        %446 = vmatpush1.xpose.msra.mxu0 0.0
        %447 = vmatprep.subr.mxu0 0.0
        %448 = vmatpush1.xpose.msra.mxu0 0.0
        %449 = vmatprep.subr.mxu0 0.0
        %450 = vmatpush1.xpose.msra.mxu0 0.0
        %451 = vmatprep.subr.mxu0 0.0
        %452 = vmatpush1.xpose.msra.mxu0 0.0
        %453 = vmatprep.subr.mxu0 0.0
        %454 = vmatpush1.xpose.msra.mxu0 0.0
        %455 = vmatprep.mubr.f32.mxu0 0.0
        %456 = vmatmul.mubr.f32.gmra.mrb[0].mxu0 %v375
        %v457 = vpop.f32.mrb[0].mxu0
        %v458 = vadd.f32 0.0, %v457
        %v459 = vpop.f32.mrb[0].mxu0
        %460 = vdwg.mxu0
        %461 = vmatprep.subr.mxu0 0.0
        %462 = vmatpush1.xpose.msra.mxu0 %v255
        %463 = vmatprep.subr.mxu0 0.0
        %464 = vmatpush1.xpose.msra.mxu0 %v256
        %465 = vmatprep.subr.mxu0 0.0
        %466 = vmatpush1.xpose.msra.mxu0 %v257
        %467 = vmatprep.subr.mxu0 0.0
        %468 = vmatpush1.xpose.msra.mxu0 %v258
        %469 = vmatprep.subr.mxu0 0.0
        %470 = vmatpush1.xpose.msra.mxu0 %v259
        %471 = vmatprep.subr.mxu0 0.0
        %472 = vmatpush1.xpose.msra.mxu0 %v260
        %473 = vmatprep.subr.mxu0 0.0
        %474 = vmatpush1.xpose.msra.mxu0 %v261
        %475 = vmatprep.subr.mxu0 0.0
        %476 = vmatpush1.xpose.msra.mxu0 %v262
        %477 = vmatprep.subr.mxu0 0.0
        %478 = vmatpush1.xpose.msra.mxu0 0.0
        %479 = vmatprep.subr.mxu0 0.0
        %480 = vmatpush1.xpose.msra.mxu0 0.0
        %481 = vmatprep.subr.mxu0 0.0
        %482 = vmatpush1.xpose.msra.mxu0 0.0
        %483 = vmatprep.subr.mxu0 0.0
        %484 = vmatpush1.xpose.msra.mxu0 0.0
        %485 = vmatprep.subr.mxu0 0.0
        %486 = vmatpush1.xpose.msra.mxu0 0.0
        %487 = vmatprep.subr.mxu0 0.0
        %488 = vmatpush1.xpose.msra.mxu0 0.0
        %489 = vmatprep.subr.mxu0 0.0
        %490 = vmatpush1.xpose.msra.mxu0 0.0
        %491 = vmatprep.subr.mxu0 0.0
        %492 = vmatpush1.xpose.msra.mxu0 0.0
        %493 = vmatprep.subr.mxu0 0.0
        %494 = vmatpush1.xpose.msra.mxu0 0.0
        %495 = vmatprep.subr.mxu0 0.0
        %496 = vmatpush1.xpose.msra.mxu0 0.0
        %497 = vmatprep.subr.mxu0 0.0
        %498 = vmatpush1.xpose.msra.mxu0 0.0
        %499 = vmatprep.subr.mxu0 0.0
        %500 = vmatpush1.xpose.msra.mxu0 0.0
        %501 = vmatprep.subr.mxu0 0.0
        %502 = vmatpush1.xpose.msra.mxu0 0.0
        %503 = vmatprep.subr.mxu0 0.0
        %504 = vmatpush1.xpose.msra.mxu0 0.0
        %505 = vmatprep.subr.mxu0 0.0
        %506 = vmatpush1.xpose.msra.mxu0 0.0
        %507 = vmatprep.subr.mxu0 0.0
        %508 = vmatpush1.xpose.msra.mxu0 0.0
        %509 = vmatprep.subr.mxu0 0.0
        %510 = vmatpush1.xpose.msra.mxu0 0.0
        %511 = vmatprep.subr.mxu0 0.0
        %512 = vmatpush1.xpose.msra.mxu0 0.0
        %513 = vmatprep.subr.mxu0 0.0
        %514 = vmatpush1.xpose.msra.mxu0 0.0
        %515 = vmatprep.subr.mxu0 0.0
        %516 = vmatpush1.xpose.msra.mxu0 0.0
        %517 = vmatprep.subr.mxu0 0.0
        %518 = vmatpush1.xpose.msra.mxu0 0.0
        %519 = vmatprep.subr.mxu0 0.0
        %520 = vmatpush1.xpose.msra.mxu0 0.0
        %521 = vmatprep.subr.mxu0 0.0
        %522 = vmatpush1.xpose.msra.mxu0 0.0
        %523 = vmatprep.subr.mxu0 0.0
        %524 = vmatpush1.xpose.msra.mxu0 0.0
        %525 = vmatprep.mubr.f32.mxu0 0.0
        %526 = vmatmul.mubr.f32.gmra.mrb[0].mxu0 %v376
        %v527 = vpop.f32.mrb[0].mxu0
        %v528 = vadd.f32 0.0, %v527
        %v529 = vpop.f32.mrb[0].mxu0
        %530 = vdwg.mxu0
        %531 = vmatprep.subr.mxu0 0.0
        %532 = vmatpush1.xpose.msra.mxu0 %v263
        %533 = vmatprep.subr.mxu0 0.0
        %534 = vmatpush1.xpose.msra.mxu0 %v264
        %535 = vmatprep.subr.mxu0 0.0
        %536 = vmatpush1.xpose.msra.mxu0 %v265
        %537 = vmatprep.subr.mxu0 0.0
        %538 = vmatpush1.xpose.msra.mxu0 %v266
        %539 = vmatprep.subr.mxu0 0.0
        %540 = vmatpush1.xpose.msra.mxu0 %v267
        %541 = vmatprep.subr.mxu0 0.0
        %542 = vmatpush1.xpose.msra.mxu0 %v268
        %543 = vmatprep.subr.mxu0 0.0
        %544 = vmatpush1.xpose.msra.mxu0 %v269
        %545 = vmatprep.subr.mxu0 0.0
        %546 = vmatpush1.xpose.msra.mxu0 %v270
        %547 = vmatprep.subr.mxu0 0.0
        %548 = vmatpush1.xpose.msra.mxu0 0.0
        %549 = vmatprep.subr.mxu0 0.0
        %550 = vmatpush1.xpose.msra.mxu0 0.0
        %551 = vmatprep.subr.mxu0 0.0
        %552 = vmatpush1.xpose.msra.mxu0 0.0
        %553 = vmatprep.subr.mxu0 0.0
        %554 = vmatpush1.xpose.msra.mxu0 0.0
        %555 = vmatprep.subr.mxu0 0.0
        %556 = vmatpush1.xpose.msra.mxu0 0.0
        %557 = vmatprep.subr.mxu0 0.0
        %558 = vmatpush1.xpose.msra.mxu0 0.0
        %559 = vmatprep.subr.mxu0 0.0
        %560 = vmatpush1.xpose.msra.mxu0 0.0
        %561 = vmatprep.subr.mxu0 0.0
        %562 = vmatpush1.xpose.msra.mxu0 0.0
        %563 = vmatprep.subr.mxu0 0.0
        %564 = vmatpush1.xpose.msra.mxu0 0.0
        %565 = vmatprep.subr.mxu0 0.0
        %566 = vmatpush1.xpose.msra.mxu0 0.0
        %567 = vmatprep.subr.mxu0 0.0
        %568 = vmatpush1.xpose.msra.mxu0 0.0
        %569 = vmatprep.subr.mxu0 0.0
        %570 = vmatpush1.xpose.msra.mxu0 0.0
        %571 = vmatprep.subr.mxu0 0.0
        %572 = vmatpush1.xpose.msra.mxu0 0.0
        %573 = vmatprep.subr.mxu0 0.0
        %574 = vmatpush1.xpose.msra.mxu0 0.0
        %575 = vmatprep.subr.mxu0 0.0
        %576 = vmatpush1.xpose.msra.mxu0 0.0
        %577 = vmatprep.subr.mxu0 0.0
        %578 = vmatpush1.xpose.msra.mxu0 0.0
        %579 = vmatprep.subr.mxu0 0.0
        %580 = vmatpush1.xpose.msra.mxu0 0.0
        %581 = vmatprep.subr.mxu0 0.0
        %582 = vmatpush1.xpose.msra.mxu0 0.0
        %583 = vmatprep.subr.mxu0 0.0
        %584 = vmatpush1.xpose.msra.mxu0 0.0
        %585 = vmatprep.subr.mxu0 0.0
        %586 = vmatpush1.xpose.msra.mxu0 0.0
        %587 = vmatprep.subr.mxu0 0.0
        %588 = vmatpush1.xpose.msra.mxu0 0.0
        %589 = vmatprep.subr.mxu0 0.0
        %590 = vmatpush1.xpose.msra.mxu0 0.0
        %591 = vmatprep.subr.mxu0 0.0
        %592 = vmatpush1.xpose.msra.mxu0 0.0
        %593 = vmatprep.subr.mxu0 0.0
        %594 = vmatpush1.xpose.msra.mxu0 0.0
        %595 = vmatprep.mubr.f32.mxu0 0.0
        %596 = vmatmul.mubr.f32.gmra.mrb[0].mxu0 %v377
        %v597 = vpop.f32.mrb[0].mxu0
        %v598 = vadd.f32 0.0, %v597
        %v599 = vpop.f32.mrb[0].mxu0
        %600 = vdwg.mxu0
        %601 = vmatprep.subr.mxu0 0.0
        %602 = vmatpush1.xpose.msra.mxu0 %v271
        %603 = vmatprep.subr.mxu0 0.0
        %604 = vmatpush1.xpose.msra.mxu0 %v272
        %605 = vmatprep.subr.mxu0 0.0
        %606 = vmatpush1.xpose.msra.mxu0 %v273
        %607 = vmatprep.subr.mxu0 0.0
        %608 = vmatpush1.xpose.msra.mxu0 %v274
        %609 = vmatprep.subr.mxu0 0.0
        %610 = vmatpush1.xpose.msra.mxu0 %v275
        %611 = vmatprep.subr.mxu0 0.0
        %612 = vmatpush1.xpose.msra.mxu0 %v276
        %613 = vmatprep.subr.mxu0 0.0
        %614 = vmatpush1.xpose.msra.mxu0 %v277
        %615 = vmatprep.subr.mxu0 0.0
        %616 = vmatpush1.xpose.msra.mxu0 %v278
        %617 = vmatprep.subr.mxu0 0.0
        %618 = vmatpush1.xpose.msra.mxu0 0.0
        %619 = vmatprep.subr.mxu0 0.0
        %620 = vmatpush1.xpose.msra.mxu0 0.0
        %621 = vmatprep.subr.mxu0 0.0
        %622 = vmatpush1.xpose.msra.mxu0 0.0
        %623 = vmatprep.subr.mxu0 0.0
        %624 = vmatpush1.xpose.msra.mxu0 0.0
        %625 = vmatprep.subr.mxu0 0.0
        %626 = vmatpush1.xpose.msra.mxu0 0.0
        %627 = vmatprep.subr.mxu0 0.0
        %628 = vmatpush1.xpose.msra.mxu0 0.0
        %629 = vmatprep.subr.mxu0 0.0
        %630 = vmatpush1.xpose.msra.mxu0 0.0
        %631 = vmatprep.subr.mxu0 0.0
        %632 = vmatpush1.xpose.msra.mxu0 0.0
        %633 = vmatprep.subr.mxu0 0.0
        %634 = vmatpush1.xpose.msra.mxu0 0.0
        %635 = vmatprep.subr.mxu0 0.0
        %636 = vmatpush1.xpose.msra.mxu0 0.0
        %637 = vmatprep.subr.mxu0 0.0
        %638 = vmatpush1.xpose.msra.mxu0 0.0
        %639 = vmatprep.subr.mxu0 0.0
        %640 = vmatpush1.xpose.msra.mxu0 0.0
        %641 = vmatprep.subr.mxu0 0.0
        %642 = vmatpush1.xpose.msra.mxu0 0.0
        %643 = vmatprep.subr.mxu0 0.0
        %644 = vmatpush1.xpose.msra.mxu0 0.0
        %645 = vmatprep.subr.mxu0 0.0
        %646 = vmatpush1.xpose.msra.mxu0 0.0
        %647 = vmatprep.subr.mxu0 0.0
        %648 = vmatpush1.xpose.msra.mxu0 0.0
        %649 = vmatprep.subr.mxu0 0.0
        %650 = vmatpush1.xpose.msra.mxu0 0.0
        %651 = vmatprep.subr.mxu0 0.0
        %652 = vmatpush1.xpose.msra.mxu0 0.0
        %653 = vmatprep.subr.mxu0 0.0
        %654 = vmatpush1.xpose.msra.mxu0 0.0
        %655 = vmatprep.subr.mxu0 0.0
        %656 = vmatpush1.xpose.msra.mxu0 0.0
        %657 = vmatprep.subr.mxu0 0.0
        %658 = vmatpush1.xpose.msra.mxu0 0.0
        %659 = vmatprep.subr.mxu0 0.0
        %660 = vmatpush1.xpose.msra.mxu0 0.0
        %661 = vmatprep.subr.mxu0 0.0
        %662 = vmatpush1.xpose.msra.mxu0 0.0
        %663 = vmatprep.subr.mxu0 0.0
        %664 = vmatpush1.xpose.msra.mxu0 0.0
        %665 = vmatprep.mubr.f32.mxu0 0.0
        %666 = vmatmul.mubr.f32.gmra.mrb[0].mxu0 %v378
        %v667 = vpop.f32.mrb[0].mxu0
        %v668 = vadd.f32 0.0, %v667
        %v669 = vpop.f32.mrb[0].mxu0
        %670 = vdwg.mxu0
        %671 = vmatprep.subr.mxu0 0.0
        %672 = vmatpush1.xpose.msra.mxu0 %v279
        %673 = vmatprep.subr.mxu0 0.0
        %674 = vmatpush1.xpose.msra.mxu0 %v280
        %675 = vmatprep.subr.mxu0 0.0
        %676 = vmatpush1.xpose.msra.mxu0 %v281
        %677 = vmatprep.subr.mxu0 0.0
        %678 = vmatpush1.xpose.msra.mxu0 %v282
        %679 = vmatprep.subr.mxu0 0.0
        %680 = vmatpush1.xpose.msra.mxu0 %v283
        %681 = vmatprep.subr.mxu0 0.0
        %682 = vmatpush1.xpose.msra.mxu0 %v284
        %683 = vmatprep.subr.mxu0 0.0
        %684 = vmatpush1.xpose.msra.mxu0 %v285
        %685 = vmatprep.subr.mxu0 0.0
        %686 = vmatpush1.xpose.msra.mxu0 %v286
        %687 = vmatprep.subr.mxu0 0.0
        %688 = vmatpush1.xpose.msra.mxu0 0.0
        %689 = vmatprep.subr.mxu0 0.0
        %690 = vmatpush1.xpose.msra.mxu0 0.0
        %691 = vmatprep.subr.mxu0 0.0
        %692 = vmatpush1.xpose.msra.mxu0 0.0
        %693 = vmatprep.subr.mxu0 0.0
        %694 = vmatpush1.xpose.msra.mxu0 0.0
        %695 = vmatprep.subr.mxu0 0.0
        %696 = vmatpush1.xpose.msra.mxu0 0.0
        %697 = vmatprep.subr.mxu0 0.0
        %698 = vmatpush1.xpose.msra.mxu0 0.0
        %699 = vmatprep.subr.mxu0 0.0
        %700 = vmatpush1.xpose.msra.mxu0 0.0
        %701 = vmatprep.subr.mxu0 0.0
        %702 = vmatpush1.xpose.msra.mxu0 0.0
        %703 = vmatprep.subr.mxu0 0.0
        %704 = vmatpush1.xpose.msra.mxu0 0.0
        %705 = vmatprep.subr.mxu0 0.0
        %706 = vmatpush1.xpose.msra.mxu0 0.0
        %707 = vmatprep.subr.mxu0 0.0
        %708 = vmatpush1.xpose.msra.mxu0 0.0
        %709 = vmatprep.subr.mxu0 0.0
        %710 = vmatpush1.xpose.msra.mxu0 0.0
        %711 = vmatprep.subr.mxu0 0.0
        %712 = vmatpush1.xpose.msra.mxu0 0.0
        %713 = vmatprep.subr.mxu0 0.0
        %714 = vmatpush1.xpose.msra.mxu0 0.0
        %715 = vmatprep.subr.mxu0 0.0
        %716 = vmatpush1.xpose.msra.mxu0 0.0
        %717 = vmatprep.subr.mxu0 0.0
        %718 = vmatpush1.xpose.msra.mxu0 0.0
        %719 = vmatprep.subr.mxu0 0.0
        %720 = vmatpush1.xpose.msra.mxu0 0.0
        %721 = vmatprep.subr.mxu0 0.0
        %722 = vmatpush1.xpose.msra.mxu0 0.0
        %723 = vmatprep.subr.mxu0 0.0
        %724 = vmatpush1.xpose.msra.mxu0 0.0
        %725 = vmatprep.subr.mxu0 0.0
        %726 = vmatpush1.xpose.msra.mxu0 0.0
        %727 = vmatprep.subr.mxu0 0.0
        %728 = vmatpush1.xpose.msra.mxu0 0.0
        %729 = vmatprep.subr.mxu0 0.0
        %730 = vmatpush1.xpose.msra.mxu0 0.0
        %731 = vmatprep.subr.mxu0 0.0
        %732 = vmatpush1.xpose.msra.mxu0 0.0
        %733 = vmatprep.subr.mxu0 0.0
        %734 = vmatpush1.xpose.msra.mxu0 0.0
        %735 = vmatprep.mubr.f32.mxu0 0.0
        %736 = vmatmul.mubr.f32.gmra.mrb[0].mxu0 %v379
        %v737 = vpop.f32.mrb[0].mxu0
        %v738 = vadd.f32 0.0, %v737
        %v739 = vpop.f32.mrb[0].mxu0
        %740 = vdwg.mxu0
        %741 = vmatprep.subr.mxu0 0.0
        %742 = vmatpush1.xpose.msra.mxu0 %v287
        %743 = vmatprep.subr.mxu0 0.0
        %744 = vmatpush1.xpose.msra.mxu0 %v288
        %745 = vmatprep.subr.mxu0 0.0
        %746 = vmatpush1.xpose.msra.mxu0 %v289
        %747 = vmatprep.subr.mxu0 0.0
        %748 = vmatpush1.xpose.msra.mxu0 %v290
        %749 = vmatprep.subr.mxu0 0.0
        %750 = vmatpush1.xpose.msra.mxu0 %v291
        %751 = vmatprep.subr.mxu0 0.0
        %752 = vmatpush1.xpose.msra.mxu0 %v292
        %753 = vmatprep.subr.mxu0 0.0
        %754 = vmatpush1.xpose.msra.mxu0 %v293
        %755 = vmatprep.subr.mxu0 0.0
        %756 = vmatpush1.xpose.msra.mxu0 %v294
        %757 = vmatprep.subr.mxu0 0.0
        %758 = vmatpush1.xpose.msra.mxu0 0.0
        %759 = vmatprep.subr.mxu0 0.0
        %760 = vmatpush1.xpose.msra.mxu0 0.0
        %761 = vmatprep.subr.mxu0 0.0
        %762 = vmatpush1.xpose.msra.mxu0 0.0
        %763 = vmatprep.subr.mxu0 0.0
        %764 = vmatpush1.xpose.msra.mxu0 0.0
        %765 = vmatprep.subr.mxu0 0.0
        %766 = vmatpush1.xpose.msra.mxu0 0.0
        %767 = vmatprep.subr.mxu0 0.0
        %768 = vmatpush1.xpose.msra.mxu0 0.0
        %769 = vmatprep.subr.mxu0 0.0
        %770 = vmatpush1.xpose.msra.mxu0 0.0
        %771 = vmatprep.subr.mxu0 0.0
        %772 = vmatpush1.xpose.msra.mxu0 0.0
        %773 = vmatprep.subr.mxu0 0.0
        %774 = vmatpush1.xpose.msra.mxu0 0.0
        %775 = vmatprep.subr.mxu0 0.0
        %776 = vmatpush1.xpose.msra.mxu0 0.0
        %777 = vmatprep.subr.mxu0 0.0
        %778 = vmatpush1.xpose.msra.mxu0 0.0
        %779 = vmatprep.subr.mxu0 0.0
        %780 = vmatpush1.xpose.msra.mxu0 0.0
        %781 = vmatprep.subr.mxu0 0.0
        %782 = vmatpush1.xpose.msra.mxu0 0.0
        %783 = vmatprep.subr.mxu0 0.0
        %784 = vmatpush1.xpose.msra.mxu0 0.0
        %785 = vmatprep.subr.mxu0 0.0
        %786 = vmatpush1.xpose.msra.mxu0 0.0
        %787 = vmatprep.subr.mxu0 0.0
        %788 = vmatpush1.xpose.msra.mxu0 0.0
        %789 = vmatprep.subr.mxu0 0.0
        %790 = vmatpush1.xpose.msra.mxu0 0.0
        %791 = vmatprep.subr.mxu0 0.0
        %792 = vmatpush1.xpose.msra.mxu0 0.0
        %793 = vmatprep.subr.mxu0 0.0
        %794 = vmatpush1.xpose.msra.mxu0 0.0
        %795 = vmatprep.subr.mxu0 0.0
        %796 = vmatpush1.xpose.msra.mxu0 0.0
        %797 = vmatprep.subr.mxu0 0.0
        %798 = vmatpush1.xpose.msra.mxu0 0.0
        %799 = vmatprep.subr.mxu0 0.0
        %800 = vmatpush1.xpose.msra.mxu0 0.0
        %801 = vmatprep.subr.mxu0 0.0
        %802 = vmatpush1.xpose.msra.mxu0 0.0
        %803 = vmatprep.subr.mxu0 0.0
        %804 = vmatpush1.xpose.msra.mxu0 0.0
        %805 = vmatprep.mubr.f32.mxu0 0.0
        %806 = vmatmul.mubr.f32.gmra.mrb[0].mxu0 %v380
        %v807 = vpop.f32.mrb[0].mxu0
        %v808 = vadd.f32 0.0, %v807
        %v809 = vpop.f32.mrb[0].mxu0
        %810 = vdwg.mxu0
        %811 = vmatprep.subr.mxu0 0.0
        %812 = vmatpush1.xpose.msra.mxu0 %v295
        %813 = vmatprep.subr.mxu0 0.0
        %814 = vmatpush1.xpose.msra.mxu0 %v296
        %815 = vmatprep.subr.mxu0 0.0
        %816 = vmatpush1.xpose.msra.mxu0 %v297
        %817 = vmatprep.subr.mxu0 0.0
        %818 = vmatpush1.xpose.msra.mxu0 %v298
        %819 = vmatprep.subr.mxu0 0.0
        %820 = vmatpush1.xpose.msra.mxu0 %v299
        %821 = vmatprep.subr.mxu0 0.0
        %822 = vmatpush1.xpose.msra.mxu0 %v300
        %823 = vmatprep.subr.mxu0 0.0
        %824 = vmatpush1.xpose.msra.mxu0 %v301
        %825 = vmatprep.subr.mxu0 0.0
        %826 = vmatpush1.xpose.msra.mxu0 %v302
        %827 = vmatprep.subr.mxu0 0.0
        %828 = vmatpush1.xpose.msra.mxu0 0.0
        %829 = vmatprep.subr.mxu0 0.0
        %830 = vmatpush1.xpose.msra.mxu0 0.0
        %831 = vmatprep.subr.mxu0 0.0
        %832 = vmatpush1.xpose.msra.mxu0 0.0
        %833 = vmatprep.subr.mxu0 0.0
        %834 = vmatpush1.xpose.msra.mxu0 0.0
        %835 = vmatprep.subr.mxu0 0.0
        %836 = vmatpush1.xpose.msra.mxu0 0.0
        %837 = vmatprep.subr.mxu0 0.0
        %838 = vmatpush1.xpose.msra.mxu0 0.0
        %839 = vmatprep.subr.mxu0 0.0
        %840 = vmatpush1.xpose.msra.mxu0 0.0
        %841 = vmatprep.subr.mxu0 0.0
        %842 = vmatpush1.xpose.msra.mxu0 0.0
        %843 = vmatprep.subr.mxu0 0.0
        %844 = vmatpush1.xpose.msra.mxu0 0.0
        %845 = vmatprep.subr.mxu0 0.0
        %846 = vmatpush1.xpose.msra.mxu0 0.0
        %847 = vmatprep.subr.mxu0 0.0
        %848 = vmatpush1.xpose.msra.mxu0 0.0
        %849 = vmatprep.subr.mxu0 0.0
        %850 = vmatpush1.xpose.msra.mxu0 0.0
        %851 = vmatprep.subr.mxu0 0.0
        %852 = vmatpush1.xpose.msra.mxu0 0.0
        %853 = vmatprep.subr.mxu0 0.0
        %854 = vmatpush1.xpose.msra.mxu0 0.0
        %855 = vmatprep.subr.mxu0 0.0
        %856 = vmatpush1.xpose.msra.mxu0 0.0
        %857 = vmatprep.subr.mxu0 0.0
        %858 = vmatpush1.xpose.msra.mxu0 0.0
        %859 = vmatprep.subr.mxu0 0.0
        %860 = vmatpush1.xpose.msra.mxu0 0.0
        %861 = vmatprep.subr.mxu0 0.0
        %862 = vmatpush1.xpose.msra.mxu0 0.0
        %863 = vmatprep.subr.mxu0 0.0
        %864 = vmatpush1.xpose.msra.mxu0 0.0
        %865 = vmatprep.subr.mxu0 0.0
        %866 = vmatpush1.xpose.msra.mxu0 0.0
        %867 = vmatprep.subr.mxu0 0.0
        %868 = vmatpush1.xpose.msra.mxu0 0.0
        %869 = vmatprep.subr.mxu0 0.0
        %870 = vmatpush1.xpose.msra.mxu0 0.0
        %871 = vmatprep.subr.mxu0 0.0
        %872 = vmatpush1.xpose.msra.mxu0 0.0
        %873 = vmatprep.subr.mxu0 0.0
        %874 = vmatpush1.xpose.msra.mxu0 0.0
        %875 = vmatprep.mubr.f32.mxu0 0.0
        %876 = vmatmul.mubr.f32.gmra.mrb[0].mxu0 %v381
        %v877 = vpop.f32.mrb[0].mxu0
        %v878 = vadd.f32 0.0, %v877
        %v879 = vpop.f32.mrb[0].mxu0
        %880 = vdwg.mxu0
        %881 = vmatprep.subr.mxu0 0.0
        %882 = vmatpush1.xpose.msra.mxu0 %v303
        %883 = vmatprep.subr.mxu0 0.0
        %884 = vmatpush1.xpose.msra.mxu0 %v304
        %885 = vmatprep.subr.mxu0 0.0
        %886 = vmatpush1.xpose.msra.mxu0 %v305
        %887 = vmatprep.subr.mxu0 0.0
        %888 = vmatpush1.xpose.msra.mxu0 %v306
        %889 = vmatprep.subr.mxu0 0.0
        %890 = vmatpush1.xpose.msra.mxu0 %v307
        %891 = vmatprep.subr.mxu0 0.0
        %892 = vmatpush1.xpose.msra.mxu0 %v308
        %893 = vmatprep.subr.mxu0 0.0
        %894 = vmatpush1.xpose.msra.mxu0 %v309
        %895 = vmatprep.subr.mxu0 0.0
        %896 = vmatpush1.xpose.msra.mxu0 %v310
        %897 = vmatprep.subr.mxu0 0.0
        %898 = vmatpush1.xpose.msra.mxu0 0.0
        %899 = vmatprep.subr.mxu0 0.0
        %900 = vmatpush1.xpose.msra.mxu0 0.0
        %901 = vmatprep.subr.mxu0 0.0
        %902 = vmatpush1.xpose.msra.mxu0 0.0
        %903 = vmatprep.subr.mxu0 0.0
        %904 = vmatpush1.xpose.msra.mxu0 0.0
        %905 = vmatprep.subr.mxu0 0.0
        %906 = vmatpush1.xpose.msra.mxu0 0.0
        %907 = vmatprep.subr.mxu0 0.0
        %908 = vmatpush1.xpose.msra.mxu0 0.0
        %909 = vmatprep.subr.mxu0 0.0
        %910 = vmatpush1.xpose.msra.mxu0 0.0
        %911 = vmatprep.subr.mxu0 0.0
        %912 = vmatpush1.xpose.msra.mxu0 0.0
        %913 = vmatprep.subr.mxu0 0.0
        %914 = vmatpush1.xpose.msra.mxu0 0.0
        %915 = vmatprep.subr.mxu0 0.0
        %916 = vmatpush1.xpose.msra.mxu0 0.0
        %917 = vmatprep.subr.mxu0 0.0
        %918 = vmatpush1.xpose.msra.mxu0 0.0
        %919 = vmatprep.subr.mxu0 0.0
        %920 = vmatpush1.xpose.msra.mxu0 0.0
        %921 = vmatprep.subr.mxu0 0.0
        %922 = vmatpush1.xpose.msra.mxu0 0.0
        %923 = vmatprep.subr.mxu0 0.0
        %924 = vmatpush1.xpose.msra.mxu0 0.0
        %925 = vmatprep.subr.mxu0 0.0
        %926 = vmatpush1.xpose.msra.mxu0 0.0
        %927 = vmatprep.subr.mxu0 0.0
        %928 = vmatpush1.xpose.msra.mxu0 0.0
        %929 = vmatprep.subr.mxu0 0.0
        %930 = vmatpush1.xpose.msra.mxu0 0.0
        %931 = vmatprep.subr.mxu0 0.0
        %932 = vmatpush1.xpose.msra.mxu0 0.0
        %933 = vmatprep.subr.mxu0 0.0
        %934 = vmatpush1.xpose.msra.mxu0 0.0
        %935 = vmatprep.subr.mxu0 0.0
        %936 = vmatpush1.xpose.msra.mxu0 0.0
        %937 = vmatprep.subr.mxu0 0.0
        %938 = vmatpush1.xpose.msra.mxu0 0.0
        %939 = vmatprep.subr.mxu0 0.0
        %940 = vmatpush1.xpose.msra.mxu0 0.0
        %941 = vmatprep.subr.mxu0 0.0
        %942 = vmatpush1.xpose.msra.mxu0 0.0
        %943 = vmatprep.subr.mxu0 0.0
        %944 = vmatpush1.xpose.msra.mxu0 0.0
        %945 = vmatprep.mubr.f32.mxu0 0.0
        %946 = vmatmul.mubr.f32.gmra.mrb[0].mxu0 %v382
        %v947 = vpop.f32.mrb[0].mxu0
        %v948 = vadd.f32 0.0, %v947
        %v949 = vpop.f32.mrb[0].mxu0
        %950 = vdwg.mxu0
        %951 = vmatprep.subr.mxu0 0.0
        %952 = vmatpush1.xpose.msra.mxu0 %v311
        %953 = vmatprep.subr.mxu0 0.0
        %954 = vmatpush1.xpose.msra.mxu0 %v312
        %955 = vmatprep.subr.mxu0 0.0
        %956 = vmatpush1.xpose.msra.mxu0 %v313
        %957 = vmatprep.subr.mxu0 0.0
        %958 = vmatpush1.xpose.msra.mxu0 %v314
        %959 = vmatprep.subr.mxu0 0.0
        %960 = vmatpush1.xpose.msra.mxu0 %v315
        %961 = vmatprep.subr.mxu0 0.0
        %962 = vmatpush1.xpose.msra.mxu0 %v316
        %963 = vmatprep.subr.mxu0 0.0
        %964 = vmatpush1.xpose.msra.mxu0 %v317
        %965 = vmatprep.subr.mxu0 0.0
        %966 = vmatpush1.xpose.msra.mxu0 %v318
        %967 = vmatprep.subr.mxu0 0.0
        %968 = vmatpush1.xpose.msra.mxu0 0.0
        %969 = vmatprep.subr.mxu0 0.0
        %970 = vmatpush1.xpose.msra.mxu0 0.0
        %971 = vmatprep.subr.mxu0 0.0
        %972 = vmatpush1.xpose.msra.mxu0 0.0
        %973 = vmatprep.subr.mxu0 0.0
        %974 = vmatpush1.xpose.msra.mxu0 0.0
        %975 = vmatprep.subr.mxu0 0.0
        %976 = vmatpush1.xpose.msra.mxu0 0.0
        %977 = vmatprep.subr.mxu0 0.0
        %978 = vmatpush1.xpose.msra.mxu0 0.0
        %979 = vmatprep.subr.mxu0 0.0
        %980 = vmatpush1.xpose.msra.mxu0 0.0
        %981 = vmatprep.subr.mxu0 0.0
        %982 = vmatpush1.xpose.msra.mxu0 0.0
        %983 = vmatprep.subr.mxu0 0.0
        %984 = vmatpush1.xpose.msra.mxu0 0.0
        %985 = vmatprep.subr.mxu0 0.0
        %986 = vmatpush1.xpose.msra.mxu0 0.0
        %987 = vmatprep.subr.mxu0 0.0
        %988 = vmatpush1.xpose.msra.mxu0 0.0
        %989 = vmatprep.subr.mxu0 0.0
        %990 = vmatpush1.xpose.msra.mxu0 0.0
        %991 = vmatprep.subr.mxu0 0.0
        %992 = vmatpush1.xpose.msra.mxu0 0.0
        %993 = vmatprep.subr.mxu0 0.0
        %994 = vmatpush1.xpose.msra.mxu0 0.0
        %995 = vmatprep.subr.mxu0 0.0
        %996 = vmatpush1.xpose.msra.mxu0 0.0
        %997 = vmatprep.subr.mxu0 0.0
        %998 = vmatpush1.xpose.msra.mxu0 0.0
        %999 = vmatprep.subr.mxu0 0.0
        %1000 = vmatpush1.xpose.msra.mxu0 0.0
        %1001 = vmatprep.subr.mxu0 0.0
        %1002 = vmatpush1.xpose.msra.mxu0 0.0
        %1003 = vmatprep.subr.mxu0 0.0
        %1004 = vmatpush1.xpose.msra.mxu0 0.0
        %1005 = vmatprep.subr.mxu0 0.0
        %1006 = vmatpush1.xpose.msra.mxu0 0.0
        %1007 = vmatprep.subr.mxu0 0.0
        %1008 = vmatpush1.xpose.msra.mxu0 0.0
        %1009 = vmatprep.subr.mxu0 0.0
        %1010 = vmatpush1.xpose.msra.mxu0 0.0
        %1011 = vmatprep.subr.mxu0 0.0
        %1012 = vmatpush1.xpose.msra.mxu0 0.0
        %1013 = vmatprep.subr.mxu0 0.0
        %1014 = vmatpush1.xpose.msra.mxu0 0.0
        %1015 = vmatprep.mubr.f32.mxu0 0.0
        %1016 = vmatmul.mubr.f32.gmra.mrb[0].mxu0 %v383
        %v1017 = vpop.f32.mrb[0].mxu0
        %v1018 = vadd.f32 0.0, %v1017
        %v1019 = vpop.f32.mrb[0].mxu0
        %1020 = vdwg.mxu0
        %1021 = vmatprep.subr.mxu0 0.0
        %1022 = vmatpush1.xpose.msra.mxu0 %v319
        %1023 = vmatprep.subr.mxu0 0.0
        %1024 = vmatpush1.xpose.msra.mxu0 %v320
        %1025 = vmatprep.subr.mxu0 0.0
        %1026 = vmatpush1.xpose.msra.mxu0 %v321
        %1027 = vmatprep.subr.mxu0 0.0
        %1028 = vmatpush1.xpose.msra.mxu0 %v322
        %1029 = vmatprep.subr.mxu0 0.0
        %1030 = vmatpush1.xpose.msra.mxu0 %v323
        %1031 = vmatprep.subr.mxu0 0.0
        %1032 = vmatpush1.xpose.msra.mxu0 %v324
        %1033 = vmatprep.subr.mxu0 0.0
        %1034 = vmatpush1.xpose.msra.mxu0 %v325
        %1035 = vmatprep.subr.mxu0 0.0
        %1036 = vmatpush1.xpose.msra.mxu0 %v326
        %1037 = vmatprep.subr.mxu0 0.0
        %1038 = vmatpush1.xpose.msra.mxu0 0.0
        %1039 = vmatprep.subr.mxu0 0.0
        %1040 = vmatpush1.xpose.msra.mxu0 0.0
        %1041 = vmatprep.subr.mxu0 0.0
        %1042 = vmatpush1.xpose.msra.mxu0 0.0
        %1043 = vmatprep.subr.mxu0 0.0
        %1044 = vmatpush1.xpose.msra.mxu0 0.0
        %1045 = vmatprep.subr.mxu0 0.0
        %1046 = vmatpush1.xpose.msra.mxu0 0.0
        %1047 = vmatprep.subr.mxu0 0.0
        %1048 = vmatpush1.xpose.msra.mxu0 0.0
        %1049 = vmatprep.subr.mxu0 0.0
        %1050 = vmatpush1.xpose.msra.mxu0 0.0
        %1051 = vmatprep.subr.mxu0 0.0
        %1052 = vmatpush1.xpose.msra.mxu0 0.0
        %1053 = vmatprep.subr.mxu0 0.0
        %1054 = vmatpush1.xpose.msra.mxu0 0.0
        %1055 = vmatprep.subr.mxu0 0.0
        %1056 = vmatpush1.xpose.msra.mxu0 0.0
        %1057 = vmatprep.subr.mxu0 0.0
        %1058 = vmatpush1.xpose.msra.mxu0 0.0
        %1059 = vmatprep.subr.mxu0 0.0
        %1060 = vmatpush1.xpose.msra.mxu0 0.0
        %1061 = vmatprep.subr.mxu0 0.0
        %1062 = vmatpush1.xpose.msra.mxu0 0.0
        %1063 = vmatprep.subr.mxu0 0.0
        %1064 = vmatpush1.xpose.msra.mxu0 0.0
        %1065 = vmatprep.subr.mxu0 0.0
        %1066 = vmatpush1.xpose.msra.mxu0 0.0
        %1067 = vmatprep.subr.mxu0 0.0
        %1068 = vmatpush1.xpose.msra.mxu0 0.0
        %1069 = vmatprep.subr.mxu0 0.0
        %1070 = vmatpush1.xpose.msra.mxu0 0.0
        %1071 = vmatprep.subr.mxu0 0.0
        %1072 = vmatpush1.xpose.msra.mxu0 0.0
        %1073 = vmatprep.subr.mxu0 0.0
        %1074 = vmatpush1.xpose.msra.mxu0 0.0
        %1075 = vmatprep.subr.mxu0 0.0
        %1076 = vmatpush1.xpose.msra.mxu0 0.0
        %1077 = vmatprep.subr.mxu0 0.0
        %1078 = vmatpush1.xpose.msra.mxu0 0.0
        %1079 = vmatprep.subr.mxu0 0.0
        %1080 = vmatpush1.xpose.msra.mxu0 0.0
        %1081 = vmatprep.subr.mxu0 0.0
        %1082 = vmatpush1.xpose.msra.mxu0 0.0
        %1083 = vmatprep.subr.mxu0 0.0
        %1084 = vmatpush1.xpose.msra.mxu0 0.0
        %1085 = vmatprep.mubr.f32.mxu0 0.0
        %1086 = vmatmul.mubr.f32.gmra.mrb[0].mxu0 %v384
        %v1087 = vpop.f32.mrb[0].mxu0
        %v1088 = vadd.f32 0.0, %v1087
        %v1089 = vpop.f32.mrb[0].mxu0
        %1090 = vdwg.mxu0
        %1091 = vmatprep.subr.mxu0 0.0
        %1092 = vmatpush1.xpose.msra.mxu0 %v327
        %1093 = vmatprep.subr.mxu0 0.0
        %1094 = vmatpush1.xpose.msra.mxu0 %v328
        %1095 = vmatprep.subr.mxu0 0.0
        %1096 = vmatpush1.xpose.msra.mxu0 %v329
        %1097 = vmatprep.subr.mxu0 0.0
        %1098 = vmatpush1.xpose.msra.mxu0 %v330
        %1099 = vmatprep.subr.mxu0 0.0
        %1100 = vmatpush1.xpose.msra.mxu0 %v331
        %1101 = vmatprep.subr.mxu0 0.0
        %1102 = vmatpush1.xpose.msra.mxu0 %v332
        %1103 = vmatprep.subr.mxu0 0.0
        %1104 = vmatpush1.xpose.msra.mxu0 %v333
        %1105 = vmatprep.subr.mxu0 0.0
        %1106 = vmatpush1.xpose.msra.mxu0 %v334
        %1107 = vmatprep.subr.mxu0 0.0
        %1108 = vmatpush1.xpose.msra.mxu0 0.0
        %1109 = vmatprep.subr.mxu0 0.0
        %1110 = vmatpush1.xpose.msra.mxu0 0.0
        %1111 = vmatprep.subr.mxu0 0.0
        %1112 = vmatpush1.xpose.msra.mxu0 0.0
        %1113 = vmatprep.subr.mxu0 0.0
        %1114 = vmatpush1.xpose.msra.mxu0 0.0
        %1115 = vmatprep.subr.mxu0 0.0
        %1116 = vmatpush1.xpose.msra.mxu0 0.0
        %1117 = vmatprep.subr.mxu0 0.0
        %1118 = vmatpush1.xpose.msra.mxu0 0.0
        %1119 = vmatprep.subr.mxu0 0.0
        %1120 = vmatpush1.xpose.msra.mxu0 0.0
        %1121 = vmatprep.subr.mxu0 0.0
        %1122 = vmatpush1.xpose.msra.mxu0 0.0
        %1123 = vmatprep.subr.mxu0 0.0
        %1124 = vmatpush1.xpose.msra.mxu0 0.0
        %1125 = vmatprep.subr.mxu0 0.0
        %1126 = vmatpush1.xpose.msra.mxu0 0.0
        %1127 = vmatprep.subr.mxu0 0.0
        %1128 = vmatpush1.xpose.msra.mxu0 0.0
        %1129 = vmatprep.subr.mxu0 0.0
        %1130 = vmatpush1.xpose.msra.mxu0 0.0
        %1131 = vmatprep.subr.mxu0 0.0
        %1132 = vmatpush1.xpose.msra.mxu0 0.0
        %1133 = vmatprep.subr.mxu0 0.0
        %1134 = vmatpush1.xpose.msra.mxu0 0.0
        %1135 = vmatprep.subr.mxu0 0.0
        %1136 = vmatpush1.xpose.msra.mxu0 0.0
        %1137 = vmatprep.subr.mxu0 0.0
        %1138 = vmatpush1.xpose.msra.mxu0 0.0
        %1139 = vmatprep.subr.mxu0 0.0
        %1140 = vmatpush1.xpose.msra.mxu0 0.0
        %1141 = vmatprep.subr.mxu0 0.0
        %1142 = vmatpush1.xpose.msra.mxu0 0.0
        %1143 = vmatprep.subr.mxu0 0.0
        %1144 = vmatpush1.xpose.msra.mxu0 0.0
        %1145 = vmatprep.subr.mxu0 0.0
        %1146 = vmatpush1.xpose.msra.mxu0 0.0
        %1147 = vmatprep.subr.mxu0 0.0
        %1148 = vmatpush1.xpose.msra.mxu0 0.0
        %1149 = vmatprep.subr.mxu0 0.0
        %1150 = vmatpush1.xpose.msra.mxu0 0.0
        %1151 = vmatprep.subr.mxu0 0.0
        %1152 = vmatpush1.xpose.msra.mxu0 0.0
        %1153 = vmatprep.subr.mxu0 0.0
        %1154 = vmatpush1.xpose.msra.mxu0 0.0
        %1155 = vmatprep.mubr.f32.mxu0 0.0
        %1156 = vmatmul.mubr.f32.gmra.mrb[0].mxu0 %v385
        %v1157 = vpop.f32.mrb[0].mxu0
        %v1158 = vadd.f32 0.0, %v1157
        %v1159 = vpop.f32.mrb[0].mxu0
        %1160 = vdwg.mxu0
        %1161 = vmatprep.subr.mxu0 0.0
        %1162 = vmatpush1.xpose.msra.mxu0 %v335
        %1163 = vmatprep.subr.mxu0 0.0
        %1164 = vmatpush1.xpose.msra.mxu0 %v336
        %1165 = vmatprep.subr.mxu0 0.0
        %1166 = vmatpush1.xpose.msra.mxu0 %v337
        %1167 = vmatprep.subr.mxu0 0.0
        %1168 = vmatpush1.xpose.msra.mxu0 %v338
        %1169 = vmatprep.subr.mxu0 0.0
        %1170 = vmatpush1.xpose.msra.mxu0 %v339
        %1171 = vmatprep.subr.mxu0 0.0
        %1172 = vmatpush1.xpose.msra.mxu0 %v340
        %1173 = vmatprep.subr.mxu0 0.0
        %1174 = vmatpush1.xpose.msra.mxu0 %v341
        %1175 = vmatprep.subr.mxu0 0.0
        %1176 = vmatpush1.xpose.msra.mxu0 %v342
        %1177 = vmatprep.subr.mxu0 0.0
        %1178 = vmatpush1.xpose.msra.mxu0 0.0
        %1179 = vmatprep.subr.mxu0 0.0
        %1180 = vmatpush1.xpose.msra.mxu0 0.0
        %1181 = vmatprep.subr.mxu0 0.0
        %1182 = vmatpush1.xpose.msra.mxu0 0.0
        %1183 = vmatprep.subr.mxu0 0.0
        %1184 = vmatpush1.xpose.msra.mxu0 0.0
        %1185 = vmatprep.subr.mxu0 0.0
        %1186 = vmatpush1.xpose.msra.mxu0 0.0
        %1187 = vmatprep.subr.mxu0 0.0
        %1188 = vmatpush1.xpose.msra.mxu0 0.0
        %1189 = vmatprep.subr.mxu0 0.0
        %1190 = vmatpush1.xpose.msra.mxu0 0.0
        %1191 = vmatprep.subr.mxu0 0.0
        %1192 = vmatpush1.xpose.msra.mxu0 0.0
        %1193 = vmatprep.subr.mxu0 0.0
        %1194 = vmatpush1.xpose.msra.mxu0 0.0
        %1195 = vmatprep.subr.mxu0 0.0
        %1196 = vmatpush1.xpose.msra.mxu0 0.0
        %1197 = vmatprep.subr.mxu0 0.0
        %1198 = vmatpush1.xpose.msra.mxu0 0.0
        %1199 = vmatprep.subr.mxu0 0.0
        %1200 = vmatpush1.xpose.msra.mxu0 0.0
        %1201 = vmatprep.subr.mxu0 0.0
        %1202 = vmatpush1.xpose.msra.mxu0 0.0
        %1203 = vmatprep.subr.mxu0 0.0
        %1204 = vmatpush1.xpose.msra.mxu0 0.0
        %1205 = vmatprep.subr.mxu0 0.0
        %1206 = vmatpush1.xpose.msra.mxu0 0.0
        %1207 = vmatprep.subr.mxu0 0.0
        %1208 = vmatpush1.xpose.msra.mxu0 0.0
        %1209 = vmatprep.subr.mxu0 0.0
        %1210 = vmatpush1.xpose.msra.mxu0 0.0
        %1211 = vmatprep.subr.mxu0 0.0
        %1212 = vmatpush1.xpose.msra.mxu0 0.0
        %1213 = vmatprep.subr.mxu0 0.0
        %1214 = vmatpush1.xpose.msra.mxu0 0.0
        %1215 = vmatprep.subr.mxu0 0.0
        %1216 = vmatpush1.xpose.msra.mxu0 0.0
        %1217 = vmatprep.subr.mxu0 0.0
        %1218 = vmatpush1.xpose.msra.mxu0 0.0
        %1219 = vmatprep.subr.mxu0 0.0
        %1220 = vmatpush1.xpose.msra.mxu0 0.0
        %1221 = vmatprep.subr.mxu0 0.0
        %1222 = vmatpush1.xpose.msra.mxu0 0.0
        %1223 = vmatprep.subr.mxu0 0.0
        %1224 = vmatpush1.xpose.msra.mxu0 0.0
        %1225 = vmatprep.mubr.f32.mxu0 0.0
        %1226 = vmatmul.mubr.f32.gmra.mrb[0].mxu0 %v386
        %v1227 = vpop.f32.mrb[0].mxu0
        %v1228 = vadd.f32 0.0, %v1227
        %v1229 = vpop.f32.mrb[0].mxu0
        %1230 = vdwg.mxu0
        %1231 = vmatprep.subr.mxu0 0.0
        %1232 = vmatpush1.xpose.msra.mxu0 %v343
        %1233 = vmatprep.subr.mxu0 0.0
        %1234 = vmatpush1.xpose.msra.mxu0 %v344
        %1235 = vmatprep.subr.mxu0 0.0
        %1236 = vmatpush1.xpose.msra.mxu0 %v345
        %1237 = vmatprep.subr.mxu0 0.0
        %1238 = vmatpush1.xpose.msra.mxu0 %v346
        %1239 = vmatprep.subr.mxu0 0.0
        %1240 = vmatpush1.xpose.msra.mxu0 %v347
        %1241 = vmatprep.subr.mxu0 0.0
        %1242 = vmatpush1.xpose.msra.mxu0 %v348
        %1243 = vmatprep.subr.mxu0 0.0
        %1244 = vmatpush1.xpose.msra.mxu0 %v349
        %1245 = vmatprep.subr.mxu0 0.0
        %1246 = vmatpush1.xpose.msra.mxu0 %v350
        %1247 = vmatprep.subr.mxu0 0.0
        %1248 = vmatpush1.xpose.msra.mxu0 0.0
        %1249 = vmatprep.subr.mxu0 0.0
        %1250 = vmatpush1.xpose.msra.mxu0 0.0
        %1251 = vmatprep.subr.mxu0 0.0
        %1252 = vmatpush1.xpose.msra.mxu0 0.0
        %1253 = vmatprep.subr.mxu0 0.0
        %1254 = vmatpush1.xpose.msra.mxu0 0.0
        %1255 = vmatprep.subr.mxu0 0.0
        %1256 = vmatpush1.xpose.msra.mxu0 0.0
        %1257 = vmatprep.subr.mxu0 0.0
        %1258 = vmatpush1.xpose.msra.mxu0 0.0
        %1259 = vmatprep.subr.mxu0 0.0
        %1260 = vmatpush1.xpose.msra.mxu0 0.0
        %1261 = vmatprep.subr.mxu0 0.0
        %1262 = vmatpush1.xpose.msra.mxu0 0.0
        %1263 = vmatprep.subr.mxu0 0.0
        %1264 = vmatpush1.xpose.msra.mxu0 0.0
        %1265 = vmatprep.subr.mxu0 0.0
        %1266 = vmatpush1.xpose.msra.mxu0 0.0
        %1267 = vmatprep.subr.mxu0 0.0
        %1268 = vmatpush1.xpose.msra.mxu0 0.0
        %1269 = vmatprep.subr.mxu0 0.0
        %1270 = vmatpush1.xpose.msra.mxu0 0.0
        %1271 = vmatprep.subr.mxu0 0.0
        %1272 = vmatpush1.xpose.msra.mxu0 0.0
        %1273 = vmatprep.subr.mxu0 0.0
        %1274 = vmatpush1.xpose.msra.mxu0 0.0
        %1275 = vmatprep.subr.mxu0 0.0
        %1276 = vmatpush1.xpose.msra.mxu0 0.0
        %1277 = vmatprep.subr.mxu0 0.0
        %1278 = vmatpush1.xpose.msra.mxu0 0.0
        %1279 = vmatprep.subr.mxu0 0.0
        %1280 = vmatpush1.xpose.msra.mxu0 0.0
        %1281 = vmatprep.subr.mxu0 0.0
        %1282 = vmatpush1.xpose.msra.mxu0 0.0
        %1283 = vmatprep.subr.mxu0 0.0
        %1284 = vmatpush1.xpose.msra.mxu0 0.0
        %1285 = vmatprep.subr.mxu0 0.0
        %1286 = vmatpush1.xpose.msra.mxu0 0.0
        %1287 = vmatprep.subr.mxu0 0.0
        %1288 = vmatpush1.xpose.msra.mxu0 0.0
        %1289 = vmatprep.subr.mxu0 0.0
        %1290 = vmatpush1.xpose.msra.mxu0 0.0
        %1291 = vmatprep.subr.mxu0 0.0
        %1292 = vmatpush1.xpose.msra.mxu0 0.0
        %1293 = vmatprep.subr.mxu0 0.0
        %1294 = vmatpush1.xpose.msra.mxu0 0.0
        %1295 = vmatprep.mubr.f32.mxu0 0.0
        %1296 = vmatmul.mubr.f32.gmra.mrb[0].mxu0 %v387
        %v1297 = vpop.f32.mrb[0].mxu0
        %v1298 = vadd.f32 0.0, %v1297
        %v1299 = vpop.f32.mrb[0].mxu0
        %1300 = vdwg.mxu0
        %1301 = vmatprep.subr.mxu0 0.0
        %1302 = vmatpush1.xpose.msra.mxu0 %v351
        %1303 = vmatprep.subr.mxu0 0.0
        %1304 = vmatpush1.xpose.msra.mxu0 %v352
        %1305 = vmatprep.subr.mxu0 0.0
        %1306 = vmatpush1.xpose.msra.mxu0 %v353
        %1307 = vmatprep.subr.mxu0 0.0
        %1308 = vmatpush1.xpose.msra.mxu0 %v354
        %1309 = vmatprep.subr.mxu0 0.0
        %1310 = vmatpush1.xpose.msra.mxu0 %v355
        %1311 = vmatprep.subr.mxu0 0.0
        %1312 = vmatpush1.xpose.msra.mxu0 %v356
        %1313 = vmatprep.subr.mxu0 0.0
        %1314 = vmatpush1.xpose.msra.mxu0 %v357
        %1315 = vmatprep.subr.mxu0 0.0
        %1316 = vmatpush1.xpose.msra.mxu0 %v358
        %1317 = vmatprep.subr.mxu0 0.0
        %1318 = vmatpush1.xpose.msra.mxu0 0.0
        %1319 = vmatprep.subr.mxu0 0.0
        %1320 = vmatpush1.xpose.msra.mxu0 0.0
        %1321 = vmatprep.subr.mxu0 0.0
        %1322 = vmatpush1.xpose.msra.mxu0 0.0
        %1323 = vmatprep.subr.mxu0 0.0
        %1324 = vmatpush1.xpose.msra.mxu0 0.0
        %1325 = vmatprep.subr.mxu0 0.0
        %1326 = vmatpush1.xpose.msra.mxu0 0.0
        %1327 = vmatprep.subr.mxu0 0.0
        %1328 = vmatpush1.xpose.msra.mxu0 0.0
        %1329 = vmatprep.subr.mxu0 0.0
        %1330 = vmatpush1.xpose.msra.mxu0 0.0
        %1331 = vmatprep.subr.mxu0 0.0
        %1332 = vmatpush1.xpose.msra.mxu0 0.0
        %1333 = vmatprep.subr.mxu0 0.0
        %1334 = vmatpush1.xpose.msra.mxu0 0.0
        %1335 = vmatprep.subr.mxu0 0.0
        %1336 = vmatpush1.xpose.msra.mxu0 0.0
        %1337 = vmatprep.subr.mxu0 0.0
        %1338 = vmatpush1.xpose.msra.mxu0 0.0
        %1339 = vmatprep.subr.mxu0 0.0
        %1340 = vmatpush1.xpose.msra.mxu0 0.0
        %1341 = vmatprep.subr.mxu0 0.0
        %1342 = vmatpush1.xpose.msra.mxu0 0.0
        %1343 = vmatprep.subr.mxu0 0.0
        %1344 = vmatpush1.xpose.msra.mxu0 0.0
        %1345 = vmatprep.subr.mxu0 0.0
        %1346 = vmatpush1.xpose.msra.mxu0 0.0
        %1347 = vmatprep.subr.mxu0 0.0
        %1348 = vmatpush1.xpose.msra.mxu0 0.0
        %1349 = vmatprep.subr.mxu0 0.0
        %1350 = vmatpush1.xpose.msra.mxu0 0.0
        %1351 = vmatprep.subr.mxu0 0.0
        %1352 = vmatpush1.xpose.msra.mxu0 0.0
        %1353 = vmatprep.subr.mxu0 0.0
        %1354 = vmatpush1.xpose.msra.mxu0 0.0
        %1355 = vmatprep.subr.mxu0 0.0
        %1356 = vmatpush1.xpose.msra.mxu0 0.0
        %1357 = vmatprep.subr.mxu0 0.0
        %1358 = vmatpush1.xpose.msra.mxu0 0.0
        %1359 = vmatprep.subr.mxu0 0.0
        %1360 = vmatpush1.xpose.msra.mxu0 0.0
        %1361 = vmatprep.subr.mxu0 0.0
        %1362 = vmatpush1.xpose.msra.mxu0 0.0
        %1363 = vmatprep.subr.mxu0 0.0
        %1364 = vmatpush1.xpose.msra.mxu0 0.0
        %1365 = vmatprep.mubr.f32.mxu0 0.0
        %1366 = vmatmul.mubr.f32.gmra.mrb[0].mxu0 %v388
        %v1367 = vpop.f32.mrb[0].mxu0
        %v1368 = vadd.f32 0.0, %v1367
        %v1369 = vpop.f32.mrb[0].mxu0
        %1370 = vdwg.mxu0
        %1371 = vmatprep.subr.mxu0 0.0
        %1372 = vmatpush1.xpose.msra.mxu0 %v359
        %1373 = vmatprep.subr.mxu0 0.0
        %1374 = vmatpush1.xpose.msra.mxu0 %v360
        %1375 = vmatprep.subr.mxu0 0.0
        %1376 = vmatpush1.xpose.msra.mxu0 %v361
        %1377 = vmatprep.subr.mxu0 0.0
        %1378 = vmatpush1.xpose.msra.mxu0 %v362
        %1379 = vmatprep.subr.mxu0 0.0
        %1380 = vmatpush1.xpose.msra.mxu0 %v363
        %1381 = vmatprep.subr.mxu0 0.0
        %1382 = vmatpush1.xpose.msra.mxu0 %v364
        %1383 = vmatprep.subr.mxu0 0.0
        %1384 = vmatpush1.xpose.msra.mxu0 %v365
        %1385 = vmatprep.subr.mxu0 0.0
        %1386 = vmatpush1.xpose.msra.mxu0 %v366
        %1387 = vmatprep.subr.mxu0 0.0
        %1388 = vmatpush1.xpose.msra.mxu0 0.0
        %1389 = vmatprep.subr.mxu0 0.0
        %1390 = vmatpush1.xpose.msra.mxu0 0.0
        %1391 = vmatprep.subr.mxu0 0.0
        %1392 = vmatpush1.xpose.msra.mxu0 0.0
        %1393 = vmatprep.subr.mxu0 0.0
        %1394 = vmatpush1.xpose.msra.mxu0 0.0
        %1395 = vmatprep.subr.mxu0 0.0
        %1396 = vmatpush1.xpose.msra.mxu0 0.0
        %1397 = vmatprep.subr.mxu0 0.0
        %1398 = vmatpush1.xpose.msra.mxu0 0.0
        %1399 = vmatprep.subr.mxu0 0.0
        %1400 = vmatpush1.xpose.msra.mxu0 0.0
        %1401 = vmatprep.subr.mxu0 0.0
        %1402 = vmatpush1.xpose.msra.mxu0 0.0
        %1403 = vmatprep.subr.mxu0 0.0
        %1404 = vmatpush1.xpose.msra.mxu0 0.0
        %1405 = vmatprep.subr.mxu0 0.0
        %1406 = vmatpush1.xpose.msra.mxu0 0.0
        %1407 = vmatprep.subr.mxu0 0.0
        %1408 = vmatpush1.xpose.msra.mxu0 0.0
        %1409 = vmatprep.subr.mxu0 0.0
        %1410 = vmatpush1.xpose.msra.mxu0 0.0
        %1411 = vmatprep.subr.mxu0 0.0
        %1412 = vmatpush1.xpose.msra.mxu0 0.0
        %1413 = vmatprep.subr.mxu0 0.0
        %1414 = vmatpush1.xpose.msra.mxu0 0.0
        %1415 = vmatprep.subr.mxu0 0.0
        %1416 = vmatpush1.xpose.msra.mxu0 0.0
        %1417 = vmatprep.subr.mxu0 0.0
        %1418 = vmatpush1.xpose.msra.mxu0 0.0
        %1419 = vmatprep.subr.mxu0 0.0
        %1420 = vmatpush1.xpose.msra.mxu0 0.0
        %1421 = vmatprep.subr.mxu0 0.0
        %1422 = vmatpush1.xpose.msra.mxu0 0.0
        %1423 = vmatprep.subr.mxu0 0.0
        %1424 = vmatpush1.xpose.msra.mxu0 0.0
        %1425 = vmatprep.subr.mxu0 0.0
        %1426 = vmatpush1.xpose.msra.mxu0 0.0
        %1427 = vmatprep.subr.mxu0 0.0
        %1428 = vmatpush1.xpose.msra.mxu0 0.0
        %1429 = vmatprep.subr.mxu0 0.0
        %1430 = vmatpush1.xpose.msra.mxu0 0.0
        %1431 = vmatprep.subr.mxu0 0.0
        %1432 = vmatpush1.xpose.msra.mxu0 0.0
        %1433 = vmatprep.subr.mxu0 0.0
        %1434 = vmatpush1.xpose.msra.mxu0 0.0
        %1435 = vmatprep.mubr.f32.mxu0 0.0
        %1436 = vmatmul.mubr.f32.gmra.mrb[0].mxu0 %v389
        %v1437 = vpop.f32.mrb[0].mxu0
        %v1438 = vadd.f32 0.0, %v1437
        %v1439 = vpop.f32.mrb[0].mxu0
        %1440 = vdwg.mxu0
        %1441 = vmatprep.subr.mxu0 0.0
        %1442 = vmatpush1.xpose.msra.mxu0 %v367
        %1443 = vmatprep.subr.mxu0 0.0
        %1444 = vmatpush1.xpose.msra.mxu0 %v368
        %1445 = vmatprep.subr.mxu0 0.0
        %1446 = vmatpush1.xpose.msra.mxu0 %v369
        %1447 = vmatprep.subr.mxu0 0.0
        %1448 = vmatpush1.xpose.msra.mxu0 %v370
        %1449 = vmatprep.subr.mxu0 0.0
        %1450 = vmatpush1.xpose.msra.mxu0 %v371
        %1451 = vmatprep.subr.mxu0 0.0
        %1452 = vmatpush1.xpose.msra.mxu0 %v372
        %1453 = vmatprep.subr.mxu0 0.0
        %1454 = vmatpush1.xpose.msra.mxu0 %v373
        %1455 = vmatprep.subr.mxu0 0.0
        %1456 = vmatpush1.xpose.msra.mxu0 %v374
        %1457 = vmatprep.subr.mxu0 0.0
        %1458 = vmatpush1.xpose.msra.mxu0 0.0
        %1459 = vmatprep.subr.mxu0 0.0
        %1460 = vmatpush1.xpose.msra.mxu0 0.0
        %1461 = vmatprep.subr.mxu0 0.0
        %1462 = vmatpush1.xpose.msra.mxu0 0.0
        %1463 = vmatprep.subr.mxu0 0.0
        %1464 = vmatpush1.xpose.msra.mxu0 0.0
        %1465 = vmatprep.subr.mxu0 0.0
        %1466 = vmatpush1.xpose.msra.mxu0 0.0
        %1467 = vmatprep.subr.mxu0 0.0
        %1468 = vmatpush1.xpose.msra.mxu0 0.0
        %1469 = vmatprep.subr.mxu0 0.0
        %1470 = vmatpush1.xpose.msra.mxu0 0.0
        %1471 = vmatprep.subr.mxu0 0.0
        %1472 = vmatpush1.xpose.msra.mxu0 0.0
        %1473 = vmatprep.subr.mxu0 0.0
        %1474 = vmatpush1.xpose.msra.mxu0 0.0
        %1475 = vmatprep.subr.mxu0 0.0
        %1476 = vmatpush1.xpose.msra.mxu0 0.0
        %1477 = vmatprep.subr.mxu0 0.0
        %1478 = vmatpush1.xpose.msra.mxu0 0.0
        %1479 = vmatprep.subr.mxu0 0.0
        %1480 = vmatpush1.xpose.msra.mxu0 0.0
        %1481 = vmatprep.subr.mxu0 0.0
        %1482 = vmatpush1.xpose.msra.mxu0 0.0
        %1483 = vmatprep.subr.mxu0 0.0
        %1484 = vmatpush1.xpose.msra.mxu0 0.0
        %1485 = vmatprep.subr.mxu0 0.0
        %1486 = vmatpush1.xpose.msra.mxu0 0.0
        %1487 = vmatprep.subr.mxu0 0.0
        %1488 = vmatpush1.xpose.msra.mxu0 0.0
        %1489 = vmatprep.subr.mxu0 0.0
        %1490 = vmatpush1.xpose.msra.mxu0 0.0
        %1491 = vmatprep.subr.mxu0 0.0
        %1492 = vmatpush1.xpose.msra.mxu0 0.0
        %1493 = vmatprep.subr.mxu0 0.0
        %1494 = vmatpush1.xpose.msra.mxu0 0.0
        %1495 = vmatprep.subr.mxu0 0.0
        %1496 = vmatpush1.xpose.msra.mxu0 0.0
        %1497 = vmatprep.subr.mxu0 0.0
        %1498 = vmatpush1.xpose.msra.mxu0 0.0
        %1499 = vmatprep.subr.mxu0 0.0
        %1500 = vmatpush1.xpose.msra.mxu0 0.0
        %1501 = vmatprep.subr.mxu0 0.0
        %1502 = vmatpush1.xpose.msra.mxu0 0.0
        %1503 = vmatprep.subr.mxu0 0.0
        %1504 = vmatpush1.xpose.msra.mxu0 0.0
        %1505 = vmatprep.mubr.f32.mxu0 0.0
        %1506 = vmatmul.mubr.f32.gmra.mrb[0].mxu0 %v390
        %v1507 = vpop.f32.mrb[0].mxu0
        %v1508 = vadd.f32 0.0, %v1507
        %v1509 = vpop.f32.mrb[0].mxu0
        %1510 = vdwg.mxu0
        %vm1511 = vcmask 516096
        %v1512 = vsel %vm1511, %v458, -inf
        %1513 = vmax.xlane.f32.xlu0 %v1512
        %v1514 = vpop.xlane.xlu0 %1513
        %v1515 = vsel %vm1511, %v528, -inf
        %1516 = vmax.xlane.f32.xlu0 %v1515
        %v1517 = vpop.xlane.xlu0 %1516
        %v1518 = vsel %vm1511, %v598, -inf
        %1519 = vmax.xlane.f32.xlu0 %v1518
        %v1520 = vpop.xlane.xlu0 %1519
        %v1521 = vsel %vm1511, %v668, -inf
        %1522 = vmax.xlane.f32.xlu0 %v1521
        %v1523 = vpop.xlane.xlu0 %1522
        %v1524 = vsel %vm1511, %v738, -inf
        %1525 = vmax.xlane.f32.xlu0 %v1524
        %v1526 = vpop.xlane.xlu0 %1525
        %v1527 = vsel %vm1511, %v808, -inf
        %1528 = vmax.xlane.f32.xlu0 %v1527
        %v1529 = vpop.xlane.xlu0 %1528
        %v1530 = vsel %vm1511, %v878, -inf
        %1531 = vmax.xlane.f32.xlu0 %v1530
        %v1532 = vpop.xlane.xlu0 %1531
        %v1533 = vsel %vm1511, %v948, -inf
        %1534 = vmax.xlane.f32.xlu0 %v1533
        %v1535 = vpop.xlane.xlu0 %1534
        %v1536 = vsel %vm1511, %v1018, -inf
        %1537 = vmax.xlane.f32.xlu0 %v1536
        %v1538 = vpop.xlane.xlu0 %1537
        %v1539 = vsel %vm1511, %v1088, -inf
        %1540 = vmax.xlane.f32.xlu0 %v1539
        %v1541 = vpop.xlane.xlu0 %1540
        %v1542 = vsel %vm1511, %v1158, -inf
        %1543 = vmax.xlane.f32.xlu0 %v1542
        %v1544 = vpop.xlane.xlu0 %1543
        %v1545 = vsel %vm1511, %v1228, -inf
        %1546 = vmax.xlane.f32.xlu0 %v1545
        %v1547 = vpop.xlane.xlu0 %1546
        %v1548 = vsel %vm1511, %v1298, -inf
        %1549 = vmax.xlane.f32.xlu0 %v1548
        %v1550 = vpop.xlane.xlu0 %1549
        %v1551 = vsel %vm1511, %v1368, -inf
        %1552 = vmax.xlane.f32.xlu0 %v1551
        %v1553 = vpop.xlane.xlu0 %1552
        %v1554 = vsel %vm1511, %v1438, -inf
        %1555 = vmax.xlane.f32.xlu0 %v1554
        %v1556 = vpop.xlane.xlu0 %1555
        %v1557 = vsel %vm1511, %v1508, -inf
        %1558 = vmax.xlane.f32.xlu0 %v1557
        %v1559 = vpop.xlane.xlu0 %1558
        %v1560 = vsub.f32 %v458, %v1514
        %v1561 = vsub.f32 %v528, %v1517
        %v1562 = vsub.f32 %v598, %v1520
        %v1563 = vsub.f32 %v668, %v1523
        %v1564 = vsub.f32 %v738, %v1526
        %v1565 = vsub.f32 %v808, %v1529
        %v1566 = vsub.f32 %v878, %v1532
        %v1567 = vsub.f32 %v948, %v1535
        %v1568 = vsub.f32 %v1018, %v1538
        %v1569 = vsub.f32 %v1088, %v1541
        %v1570 = vsub.f32 %v1158, %v1544
        %v1571 = vsub.f32 %v1228, %v1547
        %v1572 = vsub.f32 %v1298, %v1550
        %v1573 = vsub.f32 %v1368, %v1553
        %v1574 = vsub.f32 %v1438, %v1556
        %v1575 = vsub.f32 %v1508, %v1559
        %v1576 = vmul.f32 %v1560, 1.442695
        %v1577 = vpow.pop %v1576
        %v1578 = vmul.f32 %v1561, 1.442695
        %v1579 = vpow.pop %v1578
        %v1580 = vmul.f32 %v1562, 1.442695
        %v1581 = vpow.pop %v1580
        %v1582 = vmul.f32 %v1563, 1.442695
        %v1583 = vpow.pop %v1582
        %v1584 = vmul.f32 %v1564, 1.442695
        %v1585 = vpow.pop %v1584
        %v1586 = vmul.f32 %v1565, 1.442695
        %v1587 = vpow.pop %v1586
        %v1588 = vmul.f32 %v1566, 1.442695
        %v1589 = vpow.pop %v1588
        %v1590 = vmul.f32 %v1567, 1.442695
        %v1591 = vpow.pop %v1590
        %v1592 = vmul.f32 %v1568, 1.442695
        %v1593 = vpow.pop %v1592
        %v1594 = vmul.f32 %v1569, 1.442695
        %v1595 = vpow.pop %v1594
        %v1596 = vmul.f32 %v1570, 1.442695
        %v1597 = vpow.pop %v1596
        %v1598 = vmul.f32 %v1571, 1.442695
        %v1599 = vpow.pop %v1598
        %v1600 = vmul.f32 %v1572, 1.442695
        %v1601 = vpow.pop %v1600
        %v1602 = vmul.f32 %v1573, 1.442695
        %v1603 = vpow.pop %v1602
        %v1604 = vmul.f32 %v1574, 1.442695
        %v1605 = vpow.pop %v1604
        %v1606 = vmul.f32 %v1575, 1.442695
        %v1607 = vpow.pop %v1606
        %v1608 = vsel %vm1511, %v1577, 0.0
        %1609 = vadd.xlane.f32.xlu0 %v1608
        %v1610 = vpop.xlane.xlu0 %1609
        %v1611 = vsel %vm1511, %v1579, 0.0
        %1612 = vadd.xlane.f32.xlu0 %v1611
        %v1613 = vpop.xlane.xlu0 %1612
        %v1614 = vsel %vm1511, %v1581, 0.0
        %1615 = vadd.xlane.f32.xlu0 %v1614
        %v1616 = vpop.xlane.xlu0 %1615
        %v1617 = vsel %vm1511, %v1583, 0.0
        %1618 = vadd.xlane.f32.xlu0 %v1617
        %v1619 = vpop.xlane.xlu0 %1618
        %v1620 = vsel %vm1511, %v1585, 0.0
        %1621 = vadd.xlane.f32.xlu0 %v1620
        %v1622 = vpop.xlane.xlu0 %1621
        %v1623 = vsel %vm1511, %v1587, 0.0
        %1624 = vadd.xlane.f32.xlu0 %v1623
        %v1625 = vpop.xlane.xlu0 %1624
        %v1626 = vsel %vm1511, %v1589, 0.0
        %1627 = vadd.xlane.f32.xlu0 %v1626
        %v1628 = vpop.xlane.xlu0 %1627
        %v1629 = vsel %vm1511, %v1591, 0.0
        %1630 = vadd.xlane.f32.xlu0 %v1629
        %v1631 = vpop.xlane.xlu0 %1630
        %v1632 = vsel %vm1511, %v1593, 0.0
        %1633 = vadd.xlane.f32.xlu0 %v1632
        %v1634 = vpop.xlane.xlu0 %1633
        %v1635 = vsel %vm1511, %v1595, 0.0
        %1636 = vadd.xlane.f32.xlu0 %v1635
        %v1637 = vpop.xlane.xlu0 %1636
        %v1638 = vsel %vm1511, %v1597, 0.0
        %1639 = vadd.xlane.f32.xlu0 %v1638
        %v1640 = vpop.xlane.xlu0 %1639
        %v1641 = vsel %vm1511, %v1599, 0.0
        %1642 = vadd.xlane.f32.xlu0 %v1641
        %v1643 = vpop.xlane.xlu0 %1642
        %v1644 = vsel %vm1511, %v1601, 0.0
        %1645 = vadd.xlane.f32.xlu0 %v1644
        %v1646 = vpop.xlane.xlu0 %1645
        %v1647 = vsel %vm1511, %v1603, 0.0
        %1648 = vadd.xlane.f32.xlu0 %v1647
        %v1649 = vpop.xlane.xlu0 %1648
        %v1650 = vsel %vm1511, %v1605, 0.0
        %1651 = vadd.xlane.f32.xlu0 %v1650
        %v1652 = vpop.xlane.xlu0 %1651
        %v1653 = vsel %vm1511, %v1607, 0.0
        %1654 = vadd.xlane.f32.xlu0 %v1653
        %v1655 = vpop.xlane.xlu0 %1654
        %v1656 = vrcp.pop %v1610
        %v1657 = vmul.f32 %v1577, %v1656
        %v1658 = vrcp.pop %v1613
        %v1659 = vmul.f32 %v1579, %v1658
        %v1660 = vrcp.pop %v1616
        %v1661 = vmul.f32 %v1581, %v1660
        %v1662 = vrcp.pop %v1619
        %v1663 = vmul.f32 %v1583, %v1662
        %v1664 = vrcp.pop %v1622
        %v1665 = vmul.f32 %v1585, %v1664
        %v1666 = vrcp.pop %v1625
        %v1667 = vmul.f32 %v1587, %v1666
        %v1668 = vrcp.pop %v1628
        %v1669 = vmul.f32 %v1589, %v1668
        %v1670 = vrcp.pop %v1631
        %v1671 = vmul.f32 %v1591, %v1670
        %v1672 = vrcp.pop %v1634
        %v1673 = vmul.f32 %v1593, %v1672
        %v1674 = vrcp.pop %v1637
        %v1675 = vmul.f32 %v1595, %v1674
        %v1676 = vrcp.pop %v1640
        %v1677 = vmul.f32 %v1597, %v1676
        %v1678 = vrcp.pop %v1643
        %v1679 = vmul.f32 %v1599, %v1678
        %v1680 = vrcp.pop %v1646
        %v1681 = vmul.f32 %v1601, %v1680
        %v1682 = vrcp.pop %v1649
        %v1683 = vmul.f32 %v1603, %v1682
        %v1684 = vrcp.pop %v1652
        %v1685 = vmul.f32 %v1605, %v1684
        %v1686 = vrcp.pop %v1655
        %v1687 = vmul.f32 %v1607, %v1686
        %vm1688 = vcmask 523264
        %v1690 = vsel %vm1688, %v1657, 0
        %1692 = vmatprep.subr.mxu0 0.0
        %1693 = vmatpush1.msra.mxu0 %v247
        %1694 = vmatprep.subr.mxu0 0.0
        %1695 = vmatpush1.msra.mxu0 %v248
        %1696 = vmatprep.subr.mxu0 0.0
        %1697 = vmatpush1.msra.mxu0 %v249
        %1698 = vmatprep.subr.mxu0 0.0
        %1699 = vmatpush1.msra.mxu0 %v250
        %1700 = vmatprep.subr.mxu0 0.0
        %1701 = vmatpush1.msra.mxu0 %v251
        %1702 = vmatprep.subr.mxu0 0.0
        %1703 = vmatpush1.msra.mxu0 %v252
        %1704 = vmatprep.subr.mxu0 0.0
        %1705 = vmatpush1.msra.mxu0 %v253
        %1706 = vmatprep.subr.mxu0 0.0
        %1707 = vmatpush1.msra.mxu0 %v254
        %1708 = vmatprep.subr.mxu0 0.0
        %1709 = vmatpush1.msra.mxu0 0.0
        %1710 = vmatprep.subr.mxu0 0.0
        %1711 = vmatpush1.msra.mxu0 0.0
        %1712 = vmatprep.subr.mxu0 0.0
        %1713 = vmatpush1.msra.mxu0 0.0
        %1714 = vmatprep.subr.mxu0 0.0
        %1715 = vmatpush1.msra.mxu0 0.0
        %1716 = vmatprep.subr.mxu0 0.0
        %1717 = vmatpush1.msra.mxu0 0.0
        %1718 = vmatprep.subr.mxu0 0.0
        %1719 = vmatpush1.msra.mxu0 0.0
        %1720 = vmatprep.subr.mxu0 0.0
        %1721 = vmatpush1.msra.mxu0 0.0
        %1722 = vmatprep.subr.mxu0 0.0
        %1723 = vmatpush1.msra.mxu0 0.0
        %1724 = vmatprep.subr.mxu0 0.0
        %1725 = vmatpush1.msra.mxu0 0.0
        %1726 = vmatprep.subr.mxu0 0.0
        %1727 = vmatpush1.msra.mxu0 0.0
        %1728 = vmatprep.subr.mxu0 0.0
        %1729 = vmatpush1.msra.mxu0 0.0
        %1730 = vmatprep.subr.mxu0 0.0
        %1731 = vmatpush1.msra.mxu0 0.0
        %1732 = vmatprep.subr.mxu0 0.0
        %1733 = vmatpush1.msra.mxu0 0.0
        %1734 = vmatprep.subr.mxu0 0.0
        %1735 = vmatpush1.msra.mxu0 0.0
        %1736 = vmatprep.subr.mxu0 0.0
        %1737 = vmatpush1.msra.mxu0 0.0
        %1738 = vmatprep.subr.mxu0 0.0
        %1739 = vmatpush1.msra.mxu0 0.0
        %1740 = vmatprep.subr.mxu0 0.0
        %1741 = vmatpush1.msra.mxu0 0.0
        %1742 = vmatprep.subr.mxu0 0.0
        %1743 = vmatpush1.msra.mxu0 0.0
        %1744 = vmatprep.subr.mxu0 0.0
        %1745 = vmatpush1.msra.mxu0 0.0
        %1746 = vmatprep.subr.mxu0 0.0
        %1747 = vmatpush1.msra.mxu0 0.0
        %1748 = vmatprep.subr.mxu0 0.0
        %1749 = vmatpush1.msra.mxu0 0.0
        %1750 = vmatprep.subr.mxu0 0.0
        %1751 = vmatpush1.msra.mxu0 0.0
        %1752 = vmatprep.subr.mxu0 0.0
        %1753 = vmatpush1.msra.mxu0 0.0
        %1754 = vmatprep.subr.mxu0 0.0
        %1755 = vmatpush1.msra.mxu0 0.0
        %1756 = vmatprep.mubr.f32.mxu0 0.0
        %1757 = vmatmul.mubr.f32.gmra.mrb[0].mxu0 %v1690
        %v1758 = vpop.f32.mrb[0].mxu0
        %v1759 = vadd.f32 0.0, %v1758
        %v1760 = vpop.f32.mrb[0].mxu0
        %1761 = vdwg.mxu0
        %v1763 = vsel %vm1688, %v1659, 0
        %1765 = vmatprep.subr.mxu0 0.0
        %1766 = vmatpush1.msra.mxu0 %v255
        %1767 = vmatprep.subr.mxu0 0.0
        %1768 = vmatpush1.msra.mxu0 %v256
        %1769 = vmatprep.subr.mxu0 0.0
        %1770 = vmatpush1.msra.mxu0 %v257
        %1771 = vmatprep.subr.mxu0 0.0
        %1772 = vmatpush1.msra.mxu0 %v258
        %1773 = vmatprep.subr.mxu0 0.0
        %1774 = vmatpush1.msra.mxu0 %v259
        %1775 = vmatprep.subr.mxu0 0.0
        %1776 = vmatpush1.msra.mxu0 %v260
        %1777 = vmatprep.subr.mxu0 0.0
        %1778 = vmatpush1.msra.mxu0 %v261
        %1779 = vmatprep.subr.mxu0 0.0
        %1780 = vmatpush1.msra.mxu0 %v262
        %1781 = vmatprep.subr.mxu0 0.0
        %1782 = vmatpush1.msra.mxu0 0.0
        %1783 = vmatprep.subr.mxu0 0.0
        %1784 = vmatpush1.msra.mxu0 0.0
        %1785 = vmatprep.subr.mxu0 0.0
        %1786 = vmatpush1.msra.mxu0 0.0
        %1787 = vmatprep.subr.mxu0 0.0
        %1788 = vmatpush1.msra.mxu0 0.0
        %1789 = vmatprep.subr.mxu0 0.0
        %1790 = vmatpush1.msra.mxu0 0.0
        %1791 = vmatprep.subr.mxu0 0.0
        %1792 = vmatpush1.msra.mxu0 0.0
        %1793 = vmatprep.subr.mxu0 0.0
        %1794 = vmatpush1.msra.mxu0 0.0
        %1795 = vmatprep.subr.mxu0 0.0
        %1796 = vmatpush1.msra.mxu0 0.0
        %1797 = vmatprep.subr.mxu0 0.0
        %1798 = vmatpush1.msra.mxu0 0.0
        %1799 = vmatprep.subr.mxu0 0.0
        %1800 = vmatpush1.msra.mxu0 0.0
        %1801 = vmatprep.subr.mxu0 0.0
        %1802 = vmatpush1.msra.mxu0 0.0
        %1803 = vmatprep.subr.mxu0 0.0
        %1804 = vmatpush1.msra.mxu0 0.0
        %1805 = vmatprep.subr.mxu0 0.0
        %1806 = vmatpush1.msra.mxu0 0.0
        %1807 = vmatprep.subr.mxu0 0.0
        %1808 = vmatpush1.msra.mxu0 0.0
        %1809 = vmatprep.subr.mxu0 0.0
        %1810 = vmatpush1.msra.mxu0 0.0
        %1811 = vmatprep.subr.mxu0 0.0
        %1812 = vmatpush1.msra.mxu0 0.0
        %1813 = vmatprep.subr.mxu0 0.0
        %1814 = vmatpush1.msra.mxu0 0.0
        %1815 = vmatprep.subr.mxu0 0.0
        %1816 = vmatpush1.msra.mxu0 0.0
        %1817 = vmatprep.subr.mxu0 0.0
        %1818 = vmatpush1.msra.mxu0 0.0
        %1819 = vmatprep.subr.mxu0 0.0
        %1820 = vmatpush1.msra.mxu0 0.0
        %1821 = vmatprep.subr.mxu0 0.0
        %1822 = vmatpush1.msra.mxu0 0.0
        %1823 = vmatprep.subr.mxu0 0.0
        %1824 = vmatpush1.msra.mxu0 0.0
        %1825 = vmatprep.subr.mxu0 0.0
        %1826 = vmatpush1.msra.mxu0 0.0
        %1827 = vmatprep.subr.mxu0 0.0
        %1828 = vmatpush1.msra.mxu0 0.0
        %1829 = vmatprep.mubr.f32.mxu0 0.0
        %1830 = vmatmul.mubr.f32.gmra.mrb[0].mxu0 %v1763
        %v1831 = vpop.f32.mrb[0].mxu0
        %v1832 = vadd.f32 0.0, %v1831
        %v1833 = vpop.f32.mrb[0].mxu0
        %1834 = vdwg.mxu0
        %v1836 = vsel %vm1688, %v1661, 0
        %1838 = vmatprep.subr.mxu0 0.0
        %1839 = vmatpush1.msra.mxu0 %v263
        %1840 = vmatprep.subr.mxu0 0.0
        %1841 = vmatpush1.msra.mxu0 %v264
        %1842 = vmatprep.subr.mxu0 0.0
        %1843 = vmatpush1.msra.mxu0 %v265
        %1844 = vmatprep.subr.mxu0 0.0
        %1845 = vmatpush1.msra.mxu0 %v266
        %1846 = vmatprep.subr.mxu0 0.0
        %1847 = vmatpush1.msra.mxu0 %v267
        %1848 = vmatprep.subr.mxu0 0.0
        %1849 = vmatpush1.msra.mxu0 %v268
        %1850 = vmatprep.subr.mxu0 0.0
        %1851 = vmatpush1.msra.mxu0 %v269
        %1852 = vmatprep.subr.mxu0 0.0
        %1853 = vmatpush1.msra.mxu0 %v270
        %1854 = vmatprep.subr.mxu0 0.0
        %1855 = vmatpush1.msra.mxu0 0.0
        %1856 = vmatprep.subr.mxu0 0.0
        %1857 = vmatpush1.msra.mxu0 0.0
        %1858 = vmatprep.subr.mxu0 0.0
        %1859 = vmatpush1.msra.mxu0 0.0
        %1860 = vmatprep.subr.mxu0 0.0
        %1861 = vmatpush1.msra.mxu0 0.0
        %1862 = vmatprep.subr.mxu0 0.0
        %1863 = vmatpush1.msra.mxu0 0.0
        %1864 = vmatprep.subr.mxu0 0.0
        %1865 = vmatpush1.msra.mxu0 0.0
        %1866 = vmatprep.subr.mxu0 0.0
        %1867 = vmatpush1.msra.mxu0 0.0
        %1868 = vmatprep.subr.mxu0 0.0
        %1869 = vmatpush1.msra.mxu0 0.0
        %1870 = vmatprep.subr.mxu0 0.0
        %1871 = vmatpush1.msra.mxu0 0.0
        %1872 = vmatprep.subr.mxu0 0.0
        %1873 = vmatpush1.msra.mxu0 0.0
        %1874 = vmatprep.subr.mxu0 0.0
        %1875 = vmatpush1.msra.mxu0 0.0
        %1876 = vmatprep.subr.mxu0 0.0
        %1877 = vmatpush1.msra.mxu0 0.0
        %1878 = vmatprep.subr.mxu0 0.0
        %1879 = vmatpush1.msra.mxu0 0.0
        %1880 = vmatprep.subr.mxu0 0.0
        %1881 = vmatpush1.msra.mxu0 0.0
        %1882 = vmatprep.subr.mxu0 0.0
        %1883 = vmatpush1.msra.mxu0 0.0
        %1884 = vmatprep.subr.mxu0 0.0
        %1885 = vmatpush1.msra.mxu0 0.0
        %1886 = vmatprep.subr.mxu0 0.0
        %1887 = vmatpush1.msra.mxu0 0.0
        %1888 = vmatprep.subr.mxu0 0.0
        %1889 = vmatpush1.msra.mxu0 0.0
        %1890 = vmatprep.subr.mxu0 0.0
        %1891 = vmatpush1.msra.mxu0 0.0
        %1892 = vmatprep.subr.mxu0 0.0
        %1893 = vmatpush1.msra.mxu0 0.0
        %1894 = vmatprep.subr.mxu0 0.0
        %1895 = vmatpush1.msra.mxu0 0.0
        %1896 = vmatprep.subr.mxu0 0.0
        %1897 = vmatpush1.msra.mxu0 0.0
        %1898 = vmatprep.subr.mxu0 0.0
        %1899 = vmatpush1.msra.mxu0 0.0
        %1900 = vmatprep.subr.mxu0 0.0
        %1901 = vmatpush1.msra.mxu0 0.0
        %1902 = vmatprep.mubr.f32.mxu0 0.0
        %1903 = vmatmul.mubr.f32.gmra.mrb[0].mxu0 %v1836
        %v1904 = vpop.f32.mrb[0].mxu0
        %v1905 = vadd.f32 0.0, %v1904
        %v1906 = vpop.f32.mrb[0].mxu0
        %1907 = vdwg.mxu0
        %v1909 = vsel %vm1688, %v1663, 0
        %1911 = vmatprep.subr.mxu0 0.0
        %1912 = vmatpush1.msra.mxu0 %v271
        %1913 = vmatprep.subr.mxu0 0.0
        %1914 = vmatpush1.msra.mxu0 %v272
        %1915 = vmatprep.subr.mxu0 0.0
        %1916 = vmatpush1.msra.mxu0 %v273
        %1917 = vmatprep.subr.mxu0 0.0
        %1918 = vmatpush1.msra.mxu0 %v274
        %1919 = vmatprep.subr.mxu0 0.0
        %1920 = vmatpush1.msra.mxu0 %v275
        %1921 = vmatprep.subr.mxu0 0.0
        %1922 = vmatpush1.msra.mxu0 %v276
        %1923 = vmatprep.subr.mxu0 0.0
        %1924 = vmatpush1.msra.mxu0 %v277
        %1925 = vmatprep.subr.mxu0 0.0
        %1926 = vmatpush1.msra.mxu0 %v278
        %1927 = vmatprep.subr.mxu0 0.0
        %1928 = vmatpush1.msra.mxu0 0.0
        %1929 = vmatprep.subr.mxu0 0.0
        %1930 = vmatpush1.msra.mxu0 0.0
        %1931 = vmatprep.subr.mxu0 0.0
        %1932 = vmatpush1.msra.mxu0 0.0
        %1933 = vmatprep.subr.mxu0 0.0
        %1934 = vmatpush1.msra.mxu0 0.0
        %1935 = vmatprep.subr.mxu0 0.0
        %1936 = vmatpush1.msra.mxu0 0.0
        %1937 = vmatprep.subr.mxu0 0.0
        %1938 = vmatpush1.msra.mxu0 0.0
        %1939 = vmatprep.subr.mxu0 0.0
        %1940 = vmatpush1.msra.mxu0 0.0
        %1941 = vmatprep.subr.mxu0 0.0
        %1942 = vmatpush1.msra.mxu0 0.0
        %1943 = vmatprep.subr.mxu0 0.0
        %1944 = vmatpush1.msra.mxu0 0.0
        %1945 = vmatprep.subr.mxu0 0.0
        %1946 = vmatpush1.msra.mxu0 0.0
        %1947 = vmatprep.subr.mxu0 0.0
        %1948 = vmatpush1.msra.mxu0 0.0
        %1949 = vmatprep.subr.mxu0 0.0
        %1950 = vmatpush1.msra.mxu0 0.0
        %1951 = vmatprep.subr.mxu0 0.0
        %1952 = vmatpush1.msra.mxu0 0.0
        %1953 = vmatprep.subr.mxu0 0.0
        %1954 = vmatpush1.msra.mxu0 0.0
        %1955 = vmatprep.subr.mxu0 0.0
        %1956 = vmatpush1.msra.mxu0 0.0
        %1957 = vmatprep.subr.mxu0 0.0
        %1958 = vmatpush1.msra.mxu0 0.0
        %1959 = vmatprep.subr.mxu0 0.0
        %1960 = vmatpush1.msra.mxu0 0.0
        %1961 = vmatprep.subr.mxu0 0.0
        %1962 = vmatpush1.msra.mxu0 0.0
        %1963 = vmatprep.subr.mxu0 0.0
        %1964 = vmatpush1.msra.mxu0 0.0
        %1965 = vmatprep.subr.mxu0 0.0
        %1966 = vmatpush1.msra.mxu0 0.0
        %1967 = vmatprep.subr.mxu0 0.0
        %1968 = vmatpush1.msra.mxu0 0.0
        %1969 = vmatprep.subr.mxu0 0.0
        %1970 = vmatpush1.msra.mxu0 0.0
        %1971 = vmatprep.subr.mxu0 0.0
        %1972 = vmatpush1.msra.mxu0 0.0
        %1973 = vmatprep.subr.mxu0 0.0
        %1974 = vmatpush1.msra.mxu0 0.0
        %1975 = vmatprep.mubr.f32.mxu0 0.0
        %1976 = vmatmul.mubr.f32.gmra.mrb[0].mxu0 %v1909
        %v1977 = vpop.f32.mrb[0].mxu0
        %v1978 = vadd.f32 0.0, %v1977
        %v1979 = vpop.f32.mrb[0].mxu0
        %1980 = vdwg.mxu0
        %v1982 = vsel %vm1688, %v1665, 0
        %1984 = vmatprep.subr.mxu0 0.0
        %1985 = vmatpush1.msra.mxu0 %v279
        %1986 = vmatprep.subr.mxu0 0.0
        %1987 = vmatpush1.msra.mxu0 %v280
        %1988 = vmatprep.subr.mxu0 0.0
        %1989 = vmatpush1.msra.mxu0 %v281
        %1990 = vmatprep.subr.mxu0 0.0
        %1991 = vmatpush1.msra.mxu0 %v282
        %1992 = vmatprep.subr.mxu0 0.0
        %1993 = vmatpush1.msra.mxu0 %v283
        %1994 = vmatprep.subr.mxu0 0.0
        %1995 = vmatpush1.msra.mxu0 %v284
        %1996 = vmatprep.subr.mxu0 0.0
        %1997 = vmatpush1.msra.mxu0 %v285
        %1998 = vmatprep.subr.mxu0 0.0
        %1999 = vmatpush1.msra.mxu0 %v286
        %2000 = vmatprep.subr.mxu0 0.0
        %2001 = vmatpush1.msra.mxu0 0.0
        %2002 = vmatprep.subr.mxu0 0.0
        %2003 = vmatpush1.msra.mxu0 0.0
        %2004 = vmatprep.subr.mxu0 0.0
        %2005 = vmatpush1.msra.mxu0 0.0
        %2006 = vmatprep.subr.mxu0 0.0
        %2007 = vmatpush1.msra.mxu0 0.0
        %2008 = vmatprep.subr.mxu0 0.0
        %2009 = vmatpush1.msra.mxu0 0.0
        %2010 = vmatprep.subr.mxu0 0.0
        %2011 = vmatpush1.msra.mxu0 0.0
        %2012 = vmatprep.subr.mxu0 0.0
        %2013 = vmatpush1.msra.mxu0 0.0
        %2014 = vmatprep.subr.mxu0 0.0
        %2015 = vmatpush1.msra.mxu0 0.0
        %2016 = vmatprep.subr.mxu0 0.0
        %2017 = vmatpush1.msra.mxu0 0.0
        %2018 = vmatprep.subr.mxu0 0.0
        %2019 = vmatpush1.msra.mxu0 0.0
        %2020 = vmatprep.subr.mxu0 0.0
        %2021 = vmatpush1.msra.mxu0 0.0
        %2022 = vmatprep.subr.mxu0 0.0
        %2023 = vmatpush1.msra.mxu0 0.0
        %2024 = vmatprep.subr.mxu0 0.0
        %2025 = vmatpush1.msra.mxu0 0.0
        %2026 = vmatprep.subr.mxu0 0.0
        %2027 = vmatpush1.msra.mxu0 0.0
        %2028 = vmatprep.subr.mxu0 0.0
        %2029 = vmatpush1.msra.mxu0 0.0
        %2030 = vmatprep.subr.mxu0 0.0
        %2031 = vmatpush1.msra.mxu0 0.0
        %2032 = vmatprep.subr.mxu0 0.0
        %2033 = vmatpush1.msra.mxu0 0.0
        %2034 = vmatprep.subr.mxu0 0.0
        %2035 = vmatpush1.msra.mxu0 0.0
        %2036 = vmatprep.subr.mxu0 0.0
        %2037 = vmatpush1.msra.mxu0 0.0
        %2038 = vmatprep.subr.mxu0 0.0
        %2039 = vmatpush1.msra.mxu0 0.0
        %2040 = vmatprep.subr.mxu0 0.0
        %2041 = vmatpush1.msra.mxu0 0.0
        %2042 = vmatprep.subr.mxu0 0.0
        %2043 = vmatpush1.msra.mxu0 0.0
        %2044 = vmatprep.subr.mxu0 0.0
        %2045 = vmatpush1.msra.mxu0 0.0
        %2046 = vmatprep.subr.mxu0 0.0
        %2047 = vmatpush1.msra.mxu0 0.0
        %2048 = vmatprep.mubr.f32.mxu0 0.0
        %2049 = vmatmul.mubr.f32.gmra.mrb[0].mxu0 %v1982
        %v2050 = vpop.f32.mrb[0].mxu0
        %v2051 = vadd.f32 0.0, %v2050
        %v2052 = vpop.f32.mrb[0].mxu0
        %2053 = vdwg.mxu0
        %v2055 = vsel %vm1688, %v1667, 0
        %2057 = vmatprep.subr.mxu0 0.0
        %2058 = vmatpush1.msra.mxu0 %v287
        %2059 = vmatprep.subr.mxu0 0.0
        %2060 = vmatpush1.msra.mxu0 %v288
        %2061 = vmatprep.subr.mxu0 0.0
        %2062 = vmatpush1.msra.mxu0 %v289
        %2063 = vmatprep.subr.mxu0 0.0
        %2064 = vmatpush1.msra.mxu0 %v290
        %2065 = vmatprep.subr.mxu0 0.0
        %2066 = vmatpush1.msra.mxu0 %v291
        %2067 = vmatprep.subr.mxu0 0.0
        %2068 = vmatpush1.msra.mxu0 %v292
        %2069 = vmatprep.subr.mxu0 0.0
        %2070 = vmatpush1.msra.mxu0 %v293
        %2071 = vmatprep.subr.mxu0 0.0
        %2072 = vmatpush1.msra.mxu0 %v294
        %2073 = vmatprep.subr.mxu0 0.0
        %2074 = vmatpush1.msra.mxu0 0.0
        %2075 = vmatprep.subr.mxu0 0.0
        %2076 = vmatpush1.msra.mxu0 0.0
        %2077 = vmatprep.subr.mxu0 0.0
        %2078 = vmatpush1.msra.mxu0 0.0
        %2079 = vmatprep.subr.mxu0 0.0
        %2080 = vmatpush1.msra.mxu0 0.0
        %2081 = vmatprep.subr.mxu0 0.0
        %2082 = vmatpush1.msra.mxu0 0.0
        %2083 = vmatprep.subr.mxu0 0.0
        %2084 = vmatpush1.msra.mxu0 0.0
        %2085 = vmatprep.subr.mxu0 0.0
        %2086 = vmatpush1.msra.mxu0 0.0
        %2087 = vmatprep.subr.mxu0 0.0
        %2088 = vmatpush1.msra.mxu0 0.0
        %2089 = vmatprep.subr.mxu0 0.0
        %2090 = vmatpush1.msra.mxu0 0.0
        %2091 = vmatprep.subr.mxu0 0.0
        %2092 = vmatpush1.msra.mxu0 0.0
        %2093 = vmatprep.subr.mxu0 0.0
        %2094 = vmatpush1.msra.mxu0 0.0
        %2095 = vmatprep.subr.mxu0 0.0
        %2096 = vmatpush1.msra.mxu0 0.0
        %2097 = vmatprep.subr.mxu0 0.0
        %2098 = vmatpush1.msra.mxu0 0.0
        %2099 = vmatprep.subr.mxu0 0.0
        %2100 = vmatpush1.msra.mxu0 0.0
        %2101 = vmatprep.subr.mxu0 0.0
        %2102 = vmatpush1.msra.mxu0 0.0
        %2103 = vmatprep.subr.mxu0 0.0
        %2104 = vmatpush1.msra.mxu0 0.0
        %2105 = vmatprep.subr.mxu0 0.0
        %2106 = vmatpush1.msra.mxu0 0.0
        %2107 = vmatprep.subr.mxu0 0.0
        %2108 = vmatpush1.msra.mxu0 0.0
        %2109 = vmatprep.subr.mxu0 0.0
        %2110 = vmatpush1.msra.mxu0 0.0
        %2111 = vmatprep.subr.mxu0 0.0
        %2112 = vmatpush1.msra.mxu0 0.0
        %2113 = vmatprep.subr.mxu0 0.0
        %2114 = vmatpush1.msra.mxu0 0.0
        %2115 = vmatprep.subr.mxu0 0.0
        %2116 = vmatpush1.msra.mxu0 0.0
        %2117 = vmatprep.subr.mxu0 0.0
        %2118 = vmatpush1.msra.mxu0 0.0
        %2119 = vmatprep.subr.mxu0 0.0
        %2120 = vmatpush1.msra.mxu0 0.0
        %2121 = vmatprep.mubr.f32.mxu0 0.0
        %2122 = vmatmul.mubr.f32.gmra.mrb[0].mxu0 %v2055
        %v2123 = vpop.f32.mrb[0].mxu0
        %v2124 = vadd.f32 0.0, %v2123
        %v2125 = vpop.f32.mrb[0].mxu0
        %2126 = vdwg.mxu0
        %v2128 = vsel %vm1688, %v1669, 0
        %2130 = vmatprep.subr.mxu0 0.0
        %2131 = vmatpush1.msra.mxu0 %v295
        %2132 = vmatprep.subr.mxu0 0.0
        %2133 = vmatpush1.msra.mxu0 %v296
        %2134 = vmatprep.subr.mxu0 0.0
        %2135 = vmatpush1.msra.mxu0 %v297
        %2136 = vmatprep.subr.mxu0 0.0
        %2137 = vmatpush1.msra.mxu0 %v298
        %2138 = vmatprep.subr.mxu0 0.0
        %2139 = vmatpush1.msra.mxu0 %v299
        %2140 = vmatprep.subr.mxu0 0.0
        %2141 = vmatpush1.msra.mxu0 %v300
        %2142 = vmatprep.subr.mxu0 0.0
        %2143 = vmatpush1.msra.mxu0 %v301
        %2144 = vmatprep.subr.mxu0 0.0
        %2145 = vmatpush1.msra.mxu0 %v302
        %2146 = vmatprep.subr.mxu0 0.0
        %2147 = vmatpush1.msra.mxu0 0.0
        %2148 = vmatprep.subr.mxu0 0.0
        %2149 = vmatpush1.msra.mxu0 0.0
        %2150 = vmatprep.subr.mxu0 0.0
        %2151 = vmatpush1.msra.mxu0 0.0
        %2152 = vmatprep.subr.mxu0 0.0
        %2153 = vmatpush1.msra.mxu0 0.0
        %2154 = vmatprep.subr.mxu0 0.0
        %2155 = vmatpush1.msra.mxu0 0.0
        %2156 = vmatprep.subr.mxu0 0.0
        %2157 = vmatpush1.msra.mxu0 0.0
        %2158 = vmatprep.subr.mxu0 0.0
        %2159 = vmatpush1.msra.mxu0 0.0
        %2160 = vmatprep.subr.mxu0 0.0
        %2161 = vmatpush1.msra.mxu0 0.0
        %2162 = vmatprep.subr.mxu0 0.0
        %2163 = vmatpush1.msra.mxu0 0.0
        %2164 = vmatprep.subr.mxu0 0.0
        %2165 = vmatpush1.msra.mxu0 0.0
        %2166 = vmatprep.subr.mxu0 0.0
        %2167 = vmatpush1.msra.mxu0 0.0
        %2168 = vmatprep.subr.mxu0 0.0
        %2169 = vmatpush1.msra.mxu0 0.0
        %2170 = vmatprep.subr.mxu0 0.0
        %2171 = vmatpush1.msra.mxu0 0.0
        %2172 = vmatprep.subr.mxu0 0.0
        %2173 = vmatpush1.msra.mxu0 0.0
        %2174 = vmatprep.subr.mxu0 0.0
        %2175 = vmatpush1.msra.mxu0 0.0
        %2176 = vmatprep.subr.mxu0 0.0
        %2177 = vmatpush1.msra.mxu0 0.0
        %2178 = vmatprep.subr.mxu0 0.0
        %2179 = vmatpush1.msra.mxu0 0.0
        %2180 = vmatprep.subr.mxu0 0.0
        %2181 = vmatpush1.msra.mxu0 0.0
        %2182 = vmatprep.subr.mxu0 0.0
        %2183 = vmatpush1.msra.mxu0 0.0
        %2184 = vmatprep.subr.mxu0 0.0
        %2185 = vmatpush1.msra.mxu0 0.0
        %2186 = vmatprep.subr.mxu0 0.0
        %2187 = vmatpush1.msra.mxu0 0.0
        %2188 = vmatprep.subr.mxu0 0.0
        %2189 = vmatpush1.msra.mxu0 0.0
        %2190 = vmatprep.subr.mxu0 0.0
        %2191 = vmatpush1.msra.mxu0 0.0
        %2192 = vmatprep.subr.mxu0 0.0
        %2193 = vmatpush1.msra.mxu0 0.0
        %2194 = vmatprep.mubr.f32.mxu0 0.0
        %2195 = vmatmul.mubr.f32.gmra.mrb[0].mxu0 %v2128
        %v2196 = vpop.f32.mrb[0].mxu0
        %v2197 = vadd.f32 0.0, %v2196
        %v2198 = vpop.f32.mrb[0].mxu0
        %2199 = vdwg.mxu0
        %v2201 = vsel %vm1688, %v1671, 0
        %2203 = vmatprep.subr.mxu0 0.0
        %2204 = vmatpush1.msra.mxu0 %v303
        %2205 = vmatprep.subr.mxu0 0.0
        %2206 = vmatpush1.msra.mxu0 %v304
        %2207 = vmatprep.subr.mxu0 0.0
        %2208 = vmatpush1.msra.mxu0 %v305
        %2209 = vmatprep.subr.mxu0 0.0
        %2210 = vmatpush1.msra.mxu0 %v306
        %2211 = vmatprep.subr.mxu0 0.0
        %2212 = vmatpush1.msra.mxu0 %v307
        %2213 = vmatprep.subr.mxu0 0.0
        %2214 = vmatpush1.msra.mxu0 %v308
        %2215 = vmatprep.subr.mxu0 0.0
        %2216 = vmatpush1.msra.mxu0 %v309
        %2217 = vmatprep.subr.mxu0 0.0
        %2218 = vmatpush1.msra.mxu0 %v310
        %2219 = vmatprep.subr.mxu0 0.0
        %2220 = vmatpush1.msra.mxu0 0.0
        %2221 = vmatprep.subr.mxu0 0.0
        %2222 = vmatpush1.msra.mxu0 0.0
        %2223 = vmatprep.subr.mxu0 0.0
        %2224 = vmatpush1.msra.mxu0 0.0
        %2225 = vmatprep.subr.mxu0 0.0
        %2226 = vmatpush1.msra.mxu0 0.0
        %2227 = vmatprep.subr.mxu0 0.0
        %2228 = vmatpush1.msra.mxu0 0.0
        %2229 = vmatprep.subr.mxu0 0.0
        %2230 = vmatpush1.msra.mxu0 0.0
        %2231 = vmatprep.subr.mxu0 0.0
        %2232 = vmatpush1.msra.mxu0 0.0
        %2233 = vmatprep.subr.mxu0 0.0
        %2234 = vmatpush1.msra.mxu0 0.0
        %2235 = vmatprep.subr.mxu0 0.0
        %2236 = vmatpush1.msra.mxu0 0.0
        %2237 = vmatprep.subr.mxu0 0.0
        %2238 = vmatpush1.msra.mxu0 0.0
        %2239 = vmatprep.subr.mxu0 0.0
        %2240 = vmatpush1.msra.mxu0 0.0
        %2241 = vmatprep.subr.mxu0 0.0
        %2242 = vmatpush1.msra.mxu0 0.0
        %2243 = vmatprep.subr.mxu0 0.0
        %2244 = vmatpush1.msra.mxu0 0.0
        %2245 = vmatprep.subr.mxu0 0.0
        %2246 = vmatpush1.msra.mxu0 0.0
        %2247 = vmatprep.subr.mxu0 0.0
        %2248 = vmatpush1.msra.mxu0 0.0
        %2249 = vmatprep.subr.mxu0 0.0
        %2250 = vmatpush1.msra.mxu0 0.0
        %2251 = vmatprep.subr.mxu0 0.0
        %2252 = vmatpush1.msra.mxu0 0.0
        %2253 = vmatprep.subr.mxu0 0.0
        %2254 = vmatpush1.msra.mxu0 0.0
        %2255 = vmatprep.subr.mxu0 0.0
        %2256 = vmatpush1.msra.mxu0 0.0
        %2257 = vmatprep.subr.mxu0 0.0
        %2258 = vmatpush1.msra.mxu0 0.0
        %2259 = vmatprep.subr.mxu0 0.0
        %2260 = vmatpush1.msra.mxu0 0.0
        %2261 = vmatprep.subr.mxu0 0.0
        %2262 = vmatpush1.msra.mxu0 0.0
        %2263 = vmatprep.subr.mxu0 0.0
        %2264 = vmatpush1.msra.mxu0 0.0
        %2265 = vmatprep.subr.mxu0 0.0
        %2266 = vmatpush1.msra.mxu0 0.0
        %2267 = vmatprep.mubr.f32.mxu0 0.0
        %2268 = vmatmul.mubr.f32.gmra.mrb[0].mxu0 %v2201
        %v2269 = vpop.f32.mrb[0].mxu0
        %v2270 = vadd.f32 0.0, %v2269
        %v2271 = vpop.f32.mrb[0].mxu0
        %2272 = vdwg.mxu0
        %v2274 = vsel %vm1688, %v1673, 0
        %2276 = vmatprep.subr.mxu0 0.0
        %2277 = vmatpush1.msra.mxu0 %v311
        %2278 = vmatprep.subr.mxu0 0.0
        %2279 = vmatpush1.msra.mxu0 %v312
        %2280 = vmatprep.subr.mxu0 0.0
        %2281 = vmatpush1.msra.mxu0 %v313
        %2282 = vmatprep.subr.mxu0 0.0
        %2283 = vmatpush1.msra.mxu0 %v314
        %2284 = vmatprep.subr.mxu0 0.0
        %2285 = vmatpush1.msra.mxu0 %v315
        %2286 = vmatprep.subr.mxu0 0.0
        %2287 = vmatpush1.msra.mxu0 %v316
        %2288 = vmatprep.subr.mxu0 0.0
        %2289 = vmatpush1.msra.mxu0 %v317
        %2290 = vmatprep.subr.mxu0 0.0
        %2291 = vmatpush1.msra.mxu0 %v318
        %2292 = vmatprep.subr.mxu0 0.0
        %2293 = vmatpush1.msra.mxu0 0.0
        %2294 = vmatprep.subr.mxu0 0.0
        %2295 = vmatpush1.msra.mxu0 0.0
        %2296 = vmatprep.subr.mxu0 0.0
        %2297 = vmatpush1.msra.mxu0 0.0
        %2298 = vmatprep.subr.mxu0 0.0
        %2299 = vmatpush1.msra.mxu0 0.0
        %2300 = vmatprep.subr.mxu0 0.0
        %2301 = vmatpush1.msra.mxu0 0.0
        %2302 = vmatprep.subr.mxu0 0.0
        %2303 = vmatpush1.msra.mxu0 0.0
        %2304 = vmatprep.subr.mxu0 0.0
        %2305 = vmatpush1.msra.mxu0 0.0
        %2306 = vmatprep.subr.mxu0 0.0
        %2307 = vmatpush1.msra.mxu0 0.0
        %2308 = vmatprep.subr.mxu0 0.0
        %2309 = vmatpush1.msra.mxu0 0.0
        %2310 = vmatprep.subr.mxu0 0.0
        %2311 = vmatpush1.msra.mxu0 0.0
        %2312 = vmatprep.subr.mxu0 0.0
        %2313 = vmatpush1.msra.mxu0 0.0
        %2314 = vmatprep.subr.mxu0 0.0
        %2315 = vmatpush1.msra.mxu0 0.0
        %2316 = vmatprep.subr.mxu0 0.0
        %2317 = vmatpush1.msra.mxu0 0.0
        %2318 = vmatprep.subr.mxu0 0.0
        %2319 = vmatpush1.msra.mxu0 0.0
        %2320 = vmatprep.subr.mxu0 0.0
        %2321 = vmatpush1.msra.mxu0 0.0
        %2322 = vmatprep.subr.mxu0 0.0
        %2323 = vmatpush1.msra.mxu0 0.0
        %2324 = vmatprep.subr.mxu0 0.0
        %2325 = vmatpush1.msra.mxu0 0.0
        %2326 = vmatprep.subr.mxu0 0.0
        %2327 = vmatpush1.msra.mxu0 0.0
        %2328 = vmatprep.subr.mxu0 0.0
        %2329 = vmatpush1.msra.mxu0 0.0
        %2330 = vmatprep.subr.mxu0 0.0
        %2331 = vmatpush1.msra.mxu0 0.0
        %2332 = vmatprep.subr.mxu0 0.0
        %2333 = vmatpush1.msra.mxu0 0.0
        %2334 = vmatprep.subr.mxu0 0.0
        %2335 = vmatpush1.msra.mxu0 0.0
        %2336 = vmatprep.subr.mxu0 0.0
        %2337 = vmatpush1.msra.mxu0 0.0
        %2338 = vmatprep.subr.mxu0 0.0
        %2339 = vmatpush1.msra.mxu0 0.0
        %2340 = vmatprep.mubr.f32.mxu0 0.0
        %2341 = vmatmul.mubr.f32.gmra.mrb[0].mxu0 %v2274
        %v2342 = vpop.f32.mrb[0].mxu0
        %v2343 = vadd.f32 0.0, %v2342
        %v2344 = vpop.f32.mrb[0].mxu0
        %2345 = vdwg.mxu0
        %v2347 = vsel %vm1688, %v1675, 0
        %2349 = vmatprep.subr.mxu0 0.0
        %2350 = vmatpush1.msra.mxu0 %v319
        %2351 = vmatprep.subr.mxu0 0.0
        %2352 = vmatpush1.msra.mxu0 %v320
        %2353 = vmatprep.subr.mxu0 0.0
        %2354 = vmatpush1.msra.mxu0 %v321
        %2355 = vmatprep.subr.mxu0 0.0
        %2356 = vmatpush1.msra.mxu0 %v322
        %2357 = vmatprep.subr.mxu0 0.0
        %2358 = vmatpush1.msra.mxu0 %v323
        %2359 = vmatprep.subr.mxu0 0.0
        %2360 = vmatpush1.msra.mxu0 %v324
        %2361 = vmatprep.subr.mxu0 0.0
        %2362 = vmatpush1.msra.mxu0 %v325
        %2363 = vmatprep.subr.mxu0 0.0
        %2364 = vmatpush1.msra.mxu0 %v326
        %2365 = vmatprep.subr.mxu0 0.0
        %2366 = vmatpush1.msra.mxu0 0.0
        %2367 = vmatprep.subr.mxu0 0.0
        %2368 = vmatpush1.msra.mxu0 0.0
        %2369 = vmatprep.subr.mxu0 0.0
        %2370 = vmatpush1.msra.mxu0 0.0
        %2371 = vmatprep.subr.mxu0 0.0
        %2372 = vmatpush1.msra.mxu0 0.0
        %2373 = vmatprep.subr.mxu0 0.0
        %2374 = vmatpush1.msra.mxu0 0.0
        %2375 = vmatprep.subr.mxu0 0.0
        %2376 = vmatpush1.msra.mxu0 0.0
        %2377 = vmatprep.subr.mxu0 0.0
        %2378 = vmatpush1.msra.mxu0 0.0
        %2379 = vmatprep.subr.mxu0 0.0
        %2380 = vmatpush1.msra.mxu0 0.0
        %2381 = vmatprep.subr.mxu0 0.0
        %2382 = vmatpush1.msra.mxu0 0.0
        %2383 = vmatprep.subr.mxu0 0.0
        %2384 = vmatpush1.msra.mxu0 0.0
        %2385 = vmatprep.subr.mxu0 0.0
        %2386 = vmatpush1.msra.mxu0 0.0
        %2387 = vmatprep.subr.mxu0 0.0
        %2388 = vmatpush1.msra.mxu0 0.0
        %2389 = vmatprep.subr.mxu0 0.0
        %2390 = vmatpush1.msra.mxu0 0.0
        %2391 = vmatprep.subr.mxu0 0.0
        %2392 = vmatpush1.msra.mxu0 0.0
        %2393 = vmatprep.subr.mxu0 0.0
        %2394 = vmatpush1.msra.mxu0 0.0
        %2395 = vmatprep.subr.mxu0 0.0
        %2396 = vmatpush1.msra.mxu0 0.0
        %2397 = vmatprep.subr.mxu0 0.0
        %2398 = vmatpush1.msra.mxu0 0.0
        %2399 = vmatprep.subr.mxu0 0.0
        %2400 = vmatpush1.msra.mxu0 0.0
        %2401 = vmatprep.subr.mxu0 0.0
        %2402 = vmatpush1.msra.mxu0 0.0
        %2403 = vmatprep.subr.mxu0 0.0
        %2404 = vmatpush1.msra.mxu0 0.0
        %2405 = vmatprep.subr.mxu0 0.0
        %2406 = vmatpush1.msra.mxu0 0.0
        %2407 = vmatprep.subr.mxu0 0.0
        %2408 = vmatpush1.msra.mxu0 0.0
        %2409 = vmatprep.subr.mxu0 0.0
        %2410 = vmatpush1.msra.mxu0 0.0
        %2411 = vmatprep.subr.mxu0 0.0
        %2412 = vmatpush1.msra.mxu0 0.0
        %2413 = vmatprep.mubr.f32.mxu0 0.0
        %2414 = vmatmul.mubr.f32.gmra.mrb[0].mxu0 %v2347
        %v2415 = vpop.f32.mrb[0].mxu0
        %v2416 = vadd.f32 0.0, %v2415
        %v2417 = vpop.f32.mrb[0].mxu0
        %2418 = vdwg.mxu0
        %v2420 = vsel %vm1688, %v1677, 0
        %2422 = vmatprep.subr.mxu0 0.0
        %2423 = vmatpush1.msra.mxu0 %v327
        %2424 = vmatprep.subr.mxu0 0.0
        %2425 = vmatpush1.msra.mxu0 %v328
        %2426 = vmatprep.subr.mxu0 0.0
        %2427 = vmatpush1.msra.mxu0 %v329
        %2428 = vmatprep.subr.mxu0 0.0
        %2429 = vmatpush1.msra.mxu0 %v330
        %2430 = vmatprep.subr.mxu0 0.0
        %2431 = vmatpush1.msra.mxu0 %v331
        %2432 = vmatprep.subr.mxu0 0.0
        %2433 = vmatpush1.msra.mxu0 %v332
        %2434 = vmatprep.subr.mxu0 0.0
        %2435 = vmatpush1.msra.mxu0 %v333
        %2436 = vmatprep.subr.mxu0 0.0
        %2437 = vmatpush1.msra.mxu0 %v334
        %2438 = vmatprep.subr.mxu0 0.0
        %2439 = vmatpush1.msra.mxu0 0.0
        %2440 = vmatprep.subr.mxu0 0.0
        %2441 = vmatpush1.msra.mxu0 0.0
        %2442 = vmatprep.subr.mxu0 0.0
        %2443 = vmatpush1.msra.mxu0 0.0
        %2444 = vmatprep.subr.mxu0 0.0
        %2445 = vmatpush1.msra.mxu0 0.0
        %2446 = vmatprep.subr.mxu0 0.0
        %2447 = vmatpush1.msra.mxu0 0.0
        %2448 = vmatprep.subr.mxu0 0.0
        %2449 = vmatpush1.msra.mxu0 0.0
        %2450 = vmatprep.subr.mxu0 0.0
        %2451 = vmatpush1.msra.mxu0 0.0
        %2452 = vmatprep.subr.mxu0 0.0
        %2453 = vmatpush1.msra.mxu0 0.0
        %2454 = vmatprep.subr.mxu0 0.0
        %2455 = vmatpush1.msra.mxu0 0.0
        %2456 = vmatprep.subr.mxu0 0.0
        %2457 = vmatpush1.msra.mxu0 0.0
        %2458 = vmatprep.subr.mxu0 0.0
        %2459 = vmatpush1.msra.mxu0 0.0
        %2460 = vmatprep.subr.mxu0 0.0
        %2461 = vmatpush1.msra.mxu0 0.0
        %2462 = vmatprep.subr.mxu0 0.0
        %2463 = vmatpush1.msra.mxu0 0.0
        %2464 = vmatprep.subr.mxu0 0.0
        %2465 = vmatpush1.msra.mxu0 0.0
        %2466 = vmatprep.subr.mxu0 0.0
        %2467 = vmatpush1.msra.mxu0 0.0
        %2468 = vmatprep.subr.mxu0 0.0
        %2469 = vmatpush1.msra.mxu0 0.0
        %2470 = vmatprep.subr.mxu0 0.0
        %2471 = vmatpush1.msra.mxu0 0.0
        %2472 = vmatprep.subr.mxu0 0.0
        %2473 = vmatpush1.msra.mxu0 0.0
        %2474 = vmatprep.subr.mxu0 0.0
        %2475 = vmatpush1.msra.mxu0 0.0
        %2476 = vmatprep.subr.mxu0 0.0
        %2477 = vmatpush1.msra.mxu0 0.0
        %2478 = vmatprep.subr.mxu0 0.0
        %2479 = vmatpush1.msra.mxu0 0.0
        %2480 = vmatprep.subr.mxu0 0.0
        %2481 = vmatpush1.msra.mxu0 0.0
        %2482 = vmatprep.subr.mxu0 0.0
        %2483 = vmatpush1.msra.mxu0 0.0
        %2484 = vmatprep.subr.mxu0 0.0
        %2485 = vmatpush1.msra.mxu0 0.0
        %2486 = vmatprep.mubr.f32.mxu0 0.0
        %2487 = vmatmul.mubr.f32.gmra.mrb[0].mxu0 %v2420
        %v2488 = vpop.f32.mrb[0].mxu0
        %v2489 = vadd.f32 0.0, %v2488
        %v2490 = vpop.f32.mrb[0].mxu0
        %2491 = vdwg.mxu0
        %v2493 = vsel %vm1688, %v1679, 0
        %2495 = vmatprep.subr.mxu0 0.0
        %2496 = vmatpush1.msra.mxu0 %v335
        %2497 = vmatprep.subr.mxu0 0.0
        %2498 = vmatpush1.msra.mxu0 %v336
        %2499 = vmatprep.subr.mxu0 0.0
        %2500 = vmatpush1.msra.mxu0 %v337
        %2501 = vmatprep.subr.mxu0 0.0
        %2502 = vmatpush1.msra.mxu0 %v338
        %2503 = vmatprep.subr.mxu0 0.0
        %2504 = vmatpush1.msra.mxu0 %v339
        %2505 = vmatprep.subr.mxu0 0.0
        %2506 = vmatpush1.msra.mxu0 %v340
        %2507 = vmatprep.subr.mxu0 0.0
        %2508 = vmatpush1.msra.mxu0 %v341
        %2509 = vmatprep.subr.mxu0 0.0
        %2510 = vmatpush1.msra.mxu0 %v342
        %2511 = vmatprep.subr.mxu0 0.0
        %2512 = vmatpush1.msra.mxu0 0.0
        %2513 = vmatprep.subr.mxu0 0.0
        %2514 = vmatpush1.msra.mxu0 0.0
        %2515 = vmatprep.subr.mxu0 0.0
        %2516 = vmatpush1.msra.mxu0 0.0
        %2517 = vmatprep.subr.mxu0 0.0
        %2518 = vmatpush1.msra.mxu0 0.0
        %2519 = vmatprep.subr.mxu0 0.0
        %2520 = vmatpush1.msra.mxu0 0.0
        %2521 = vmatprep.subr.mxu0 0.0
        %2522 = vmatpush1.msra.mxu0 0.0
        %2523 = vmatprep.subr.mxu0 0.0
        %2524 = vmatpush1.msra.mxu0 0.0
        %2525 = vmatprep.subr.mxu0 0.0
        %2526 = vmatpush1.msra.mxu0 0.0
        %2527 = vmatprep.subr.mxu0 0.0
        %2528 = vmatpush1.msra.mxu0 0.0
        %2529 = vmatprep.subr.mxu0 0.0
        %2530 = vmatpush1.msra.mxu0 0.0
        %2531 = vmatprep.subr.mxu0 0.0
        %2532 = vmatpush1.msra.mxu0 0.0
        %2533 = vmatprep.subr.mxu0 0.0
        %2534 = vmatpush1.msra.mxu0 0.0
        %2535 = vmatprep.subr.mxu0 0.0
        %2536 = vmatpush1.msra.mxu0 0.0
        %2537 = vmatprep.subr.mxu0 0.0
        %2538 = vmatpush1.msra.mxu0 0.0
        %2539 = vmatprep.subr.mxu0 0.0
        %2540 = vmatpush1.msra.mxu0 0.0
        %2541 = vmatprep.subr.mxu0 0.0
        %2542 = vmatpush1.msra.mxu0 0.0
        %2543 = vmatprep.subr.mxu0 0.0
        %2544 = vmatpush1.msra.mxu0 0.0
        %2545 = vmatprep.subr.mxu0 0.0
        %2546 = vmatpush1.msra.mxu0 0.0
        %2547 = vmatprep.subr.mxu0 0.0
        %2548 = vmatpush1.msra.mxu0 0.0
        %2549 = vmatprep.subr.mxu0 0.0
        %2550 = vmatpush1.msra.mxu0 0.0
        %2551 = vmatprep.subr.mxu0 0.0
        %2552 = vmatpush1.msra.mxu0 0.0
        %2553 = vmatprep.subr.mxu0 0.0
        %2554 = vmatpush1.msra.mxu0 0.0
        %2555 = vmatprep.subr.mxu0 0.0
        %2556 = vmatpush1.msra.mxu0 0.0
        %2557 = vmatprep.subr.mxu0 0.0
        %2558 = vmatpush1.msra.mxu0 0.0
        %2559 = vmatprep.mubr.f32.mxu0 0.0
        %2560 = vmatmul.mubr.f32.gmra.mrb[0].mxu0 %v2493
        %v2561 = vpop.f32.mrb[0].mxu0
        %v2562 = vadd.f32 0.0, %v2561
        %v2563 = vpop.f32.mrb[0].mxu0
        %2564 = vdwg.mxu0
        %v2566 = vsel %vm1688, %v1681, 0
        %2568 = vmatprep.subr.mxu0 0.0
        %2569 = vmatpush1.msra.mxu0 %v343
        %2570 = vmatprep.subr.mxu0 0.0
        %2571 = vmatpush1.msra.mxu0 %v344
        %2572 = vmatprep.subr.mxu0 0.0
        %2573 = vmatpush1.msra.mxu0 %v345
        %2574 = vmatprep.subr.mxu0 0.0
        %2575 = vmatpush1.msra.mxu0 %v346
        %2576 = vmatprep.subr.mxu0 0.0
        %2577 = vmatpush1.msra.mxu0 %v347
        %2578 = vmatprep.subr.mxu0 0.0
        %2579 = vmatpush1.msra.mxu0 %v348
        %2580 = vmatprep.subr.mxu0 0.0
        %2581 = vmatpush1.msra.mxu0 %v349
        %2582 = vmatprep.subr.mxu0 0.0
        %2583 = vmatpush1.msra.mxu0 %v350
        %2584 = vmatprep.subr.mxu0 0.0
        %2585 = vmatpush1.msra.mxu0 0.0
        %2586 = vmatprep.subr.mxu0 0.0
        %2587 = vmatpush1.msra.mxu0 0.0
        %2588 = vmatprep.subr.mxu0 0.0
        %2589 = vmatpush1.msra.mxu0 0.0
        %2590 = vmatprep.subr.mxu0 0.0
        %2591 = vmatpush1.msra.mxu0 0.0
        %2592 = vmatprep.subr.mxu0 0.0
        %2593 = vmatpush1.msra.mxu0 0.0
        %2594 = vmatprep.subr.mxu0 0.0
        %2595 = vmatpush1.msra.mxu0 0.0
        %2596 = vmatprep.subr.mxu0 0.0
        %2597 = vmatpush1.msra.mxu0 0.0
        %2598 = vmatprep.subr.mxu0 0.0
        %2599 = vmatpush1.msra.mxu0 0.0
        %2600 = vmatprep.subr.mxu0 0.0
        %2601 = vmatpush1.msra.mxu0 0.0
        %2602 = vmatprep.subr.mxu0 0.0
        %2603 = vmatpush1.msra.mxu0 0.0
        %2604 = vmatprep.subr.mxu0 0.0
        %2605 = vmatpush1.msra.mxu0 0.0
        %2606 = vmatprep.subr.mxu0 0.0
        %2607 = vmatpush1.msra.mxu0 0.0
        %2608 = vmatprep.subr.mxu0 0.0
        %2609 = vmatpush1.msra.mxu0 0.0
        %2610 = vmatprep.subr.mxu0 0.0
        %2611 = vmatpush1.msra.mxu0 0.0
        %2612 = vmatprep.subr.mxu0 0.0
        %2613 = vmatpush1.msra.mxu0 0.0
        %2614 = vmatprep.subr.mxu0 0.0
        %2615 = vmatpush1.msra.mxu0 0.0
        %2616 = vmatprep.subr.mxu0 0.0
        %2617 = vmatpush1.msra.mxu0 0.0
        %2618 = vmatprep.subr.mxu0 0.0
        %2619 = vmatpush1.msra.mxu0 0.0
        %2620 = vmatprep.subr.mxu0 0.0
        %2621 = vmatpush1.msra.mxu0 0.0
        %2622 = vmatprep.subr.mxu0 0.0
        %2623 = vmatpush1.msra.mxu0 0.0
        %2624 = vmatprep.subr.mxu0 0.0
        %2625 = vmatpush1.msra.mxu0 0.0
        %2626 = vmatprep.subr.mxu0 0.0
        %2627 = vmatpush1.msra.mxu0 0.0
        %2628 = vmatprep.subr.mxu0 0.0
        %2629 = vmatpush1.msra.mxu0 0.0
        %2630 = vmatprep.subr.mxu0 0.0
        %2631 = vmatpush1.msra.mxu0 0.0
        %2632 = vmatprep.mubr.f32.mxu0 0.0
        %2633 = vmatmul.mubr.f32.gmra.mrb[0].mxu0 %v2566
        %v2634 = vpop.f32.mrb[0].mxu0
        %v2635 = vadd.f32 0.0, %v2634
        %v2636 = vpop.f32.mrb[0].mxu0
        %2637 = vdwg.mxu0
        %v2639 = vsel %vm1688, %v1683, 0
        %2641 = vmatprep.subr.mxu0 0.0
        %2642 = vmatpush1.msra.mxu0 %v351
        %2643 = vmatprep.subr.mxu0 0.0
        %2644 = vmatpush1.msra.mxu0 %v352
        %2645 = vmatprep.subr.mxu0 0.0
        %2646 = vmatpush1.msra.mxu0 %v353
        %2647 = vmatprep.subr.mxu0 0.0
        %2648 = vmatpush1.msra.mxu0 %v354
        %2649 = vmatprep.subr.mxu0 0.0
        %2650 = vmatpush1.msra.mxu0 %v355
        %2651 = vmatprep.subr.mxu0 0.0
        %2652 = vmatpush1.msra.mxu0 %v356
        %2653 = vmatprep.subr.mxu0 0.0
        %2654 = vmatpush1.msra.mxu0 %v357
        %2655 = vmatprep.subr.mxu0 0.0
        %2656 = vmatpush1.msra.mxu0 %v358
        %2657 = vmatprep.subr.mxu0 0.0
        %2658 = vmatpush1.msra.mxu0 0.0
        %2659 = vmatprep.subr.mxu0 0.0
        %2660 = vmatpush1.msra.mxu0 0.0
        %2661 = vmatprep.subr.mxu0 0.0
        %2662 = vmatpush1.msra.mxu0 0.0
        %2663 = vmatprep.subr.mxu0 0.0
        %2664 = vmatpush1.msra.mxu0 0.0
        %2665 = vmatprep.subr.mxu0 0.0
        %2666 = vmatpush1.msra.mxu0 0.0
        %2667 = vmatprep.subr.mxu0 0.0
        %2668 = vmatpush1.msra.mxu0 0.0
        %2669 = vmatprep.subr.mxu0 0.0
        %2670 = vmatpush1.msra.mxu0 0.0
        %2671 = vmatprep.subr.mxu0 0.0
        %2672 = vmatpush1.msra.mxu0 0.0
        %2673 = vmatprep.subr.mxu0 0.0
        %2674 = vmatpush1.msra.mxu0 0.0
        %2675 = vmatprep.subr.mxu0 0.0
        %2676 = vmatpush1.msra.mxu0 0.0
        %2677 = vmatprep.subr.mxu0 0.0
        %2678 = vmatpush1.msra.mxu0 0.0
        %2679 = vmatprep.subr.mxu0 0.0
        %2680 = vmatpush1.msra.mxu0 0.0
        %2681 = vmatprep.subr.mxu0 0.0
        %2682 = vmatpush1.msra.mxu0 0.0
        %2683 = vmatprep.subr.mxu0 0.0
        %2684 = vmatpush1.msra.mxu0 0.0
        %2685 = vmatprep.subr.mxu0 0.0
        %2686 = vmatpush1.msra.mxu0 0.0
        %2687 = vmatprep.subr.mxu0 0.0
        %2688 = vmatpush1.msra.mxu0 0.0
        %2689 = vmatprep.subr.mxu0 0.0
        %2690 = vmatpush1.msra.mxu0 0.0
        %2691 = vmatprep.subr.mxu0 0.0
        %2692 = vmatpush1.msra.mxu0 0.0
        %2693 = vmatprep.subr.mxu0 0.0
        %2694 = vmatpush1.msra.mxu0 0.0
        %2695 = vmatprep.subr.mxu0 0.0
        %2696 = vmatpush1.msra.mxu0 0.0
        %2697 = vmatprep.subr.mxu0 0.0
        %2698 = vmatpush1.msra.mxu0 0.0
        %2699 = vmatprep.subr.mxu0 0.0
        %2700 = vmatpush1.msra.mxu0 0.0
        %2701 = vmatprep.subr.mxu0 0.0
        %2702 = vmatpush1.msra.mxu0 0.0
        %2703 = vmatprep.subr.mxu0 0.0
        %2704 = vmatpush1.msra.mxu0 0.0
        %2705 = vmatprep.mubr.f32.mxu0 0.0
        %2706 = vmatmul.mubr.f32.gmra.mrb[0].mxu0 %v2639
        %v2707 = vpop.f32.mrb[0].mxu0
        %v2708 = vadd.f32 0.0, %v2707
        %v2709 = vpop.f32.mrb[0].mxu0
        %2710 = vdwg.mxu0
        %v2712 = vsel %vm1688, %v1685, 0
        %2714 = vmatprep.subr.mxu0 0.0
        %2715 = vmatpush1.msra.mxu0 %v359
        %2716 = vmatprep.subr.mxu0 0.0
        %2717 = vmatpush1.msra.mxu0 %v360
        %2718 = vmatprep.subr.mxu0 0.0
        %2719 = vmatpush1.msra.mxu0 %v361
        %2720 = vmatprep.subr.mxu0 0.0
        %2721 = vmatpush1.msra.mxu0 %v362
        %2722 = vmatprep.subr.mxu0 0.0
        %2723 = vmatpush1.msra.mxu0 %v363
        %2724 = vmatprep.subr.mxu0 0.0
        %2725 = vmatpush1.msra.mxu0 %v364
        %2726 = vmatprep.subr.mxu0 0.0
        %2727 = vmatpush1.msra.mxu0 %v365
        %2728 = vmatprep.subr.mxu0 0.0
        %2729 = vmatpush1.msra.mxu0 %v366
        %2730 = vmatprep.subr.mxu0 0.0
        %2731 = vmatpush1.msra.mxu0 0.0
        %2732 = vmatprep.subr.mxu0 0.0
        %2733 = vmatpush1.msra.mxu0 0.0
        %2734 = vmatprep.subr.mxu0 0.0
        %2735 = vmatpush1.msra.mxu0 0.0
        %2736 = vmatprep.subr.mxu0 0.0
        %2737 = vmatpush1.msra.mxu0 0.0
        %2738 = vmatprep.subr.mxu0 0.0
        %2739 = vmatpush1.msra.mxu0 0.0
        %2740 = vmatprep.subr.mxu0 0.0
        %2741 = vmatpush1.msra.mxu0 0.0
        %2742 = vmatprep.subr.mxu0 0.0
        %2743 = vmatpush1.msra.mxu0 0.0
        %2744 = vmatprep.subr.mxu0 0.0
        %2745 = vmatpush1.msra.mxu0 0.0
        %2746 = vmatprep.subr.mxu0 0.0
        %2747 = vmatpush1.msra.mxu0 0.0
        %2748 = vmatprep.subr.mxu0 0.0
        %2749 = vmatpush1.msra.mxu0 0.0
        %2750 = vmatprep.subr.mxu0 0.0
        %2751 = vmatpush1.msra.mxu0 0.0
        %2752 = vmatprep.subr.mxu0 0.0
        %2753 = vmatpush1.msra.mxu0 0.0
        %2754 = vmatprep.subr.mxu0 0.0
        %2755 = vmatpush1.msra.mxu0 0.0
        %2756 = vmatprep.subr.mxu0 0.0
        %2757 = vmatpush1.msra.mxu0 0.0
        %2758 = vmatprep.subr.mxu0 0.0
        %2759 = vmatpush1.msra.mxu0 0.0
        %2760 = vmatprep.subr.mxu0 0.0
        %2761 = vmatpush1.msra.mxu0 0.0
        %2762 = vmatprep.subr.mxu0 0.0
        %2763 = vmatpush1.msra.mxu0 0.0
        %2764 = vmatprep.subr.mxu0 0.0
        %2765 = vmatpush1.msra.mxu0 0.0
        %2766 = vmatprep.subr.mxu0 0.0
        %2767 = vmatpush1.msra.mxu0 0.0
        %2768 = vmatprep.subr.mxu0 0.0
        %2769 = vmatpush1.msra.mxu0 0.0
        %2770 = vmatprep.subr.mxu0 0.0
        %2771 = vmatpush1.msra.mxu0 0.0
        %2772 = vmatprep.subr.mxu0 0.0
        %2773 = vmatpush1.msra.mxu0 0.0
        %2774 = vmatprep.subr.mxu0 0.0
        %2775 = vmatpush1.msra.mxu0 0.0
        %2776 = vmatprep.subr.mxu0 0.0
        %2777 = vmatpush1.msra.mxu0 0.0
        %2778 = vmatprep.mubr.f32.mxu0 0.0
        %2779 = vmatmul.mubr.f32.gmra.mrb[0].mxu0 %v2712
        %v2780 = vpop.f32.mrb[0].mxu0
        %v2781 = vadd.f32 0.0, %v2780
        %v2782 = vpop.f32.mrb[0].mxu0
        %2783 = vdwg.mxu0
        %v2785 = vsel %vm1688, %v1687, 0
        %2787 = vmatprep.subr.mxu0 0.0
        %2788 = vmatpush1.msra.mxu0 %v367
        %2789 = vmatprep.subr.mxu0 0.0
        %2790 = vmatpush1.msra.mxu0 %v368
        %2791 = vmatprep.subr.mxu0 0.0
        %2792 = vmatpush1.msra.mxu0 %v369
        %2793 = vmatprep.subr.mxu0 0.0
        %2794 = vmatpush1.msra.mxu0 %v370
        %2795 = vmatprep.subr.mxu0 0.0
        %2796 = vmatpush1.msra.mxu0 %v371
        %2797 = vmatprep.subr.mxu0 0.0
        %2798 = vmatpush1.msra.mxu0 %v372
        %2799 = vmatprep.subr.mxu0 0.0
        %2800 = vmatpush1.msra.mxu0 %v373
        %2801 = vmatprep.subr.mxu0 0.0
        %2802 = vmatpush1.msra.mxu0 %v374
        %2803 = vmatprep.subr.mxu0 0.0
        %2804 = vmatpush1.msra.mxu0 0.0
        %2805 = vmatprep.subr.mxu0 0.0
        %2806 = vmatpush1.msra.mxu0 0.0
        %2807 = vmatprep.subr.mxu0 0.0
        %2808 = vmatpush1.msra.mxu0 0.0
        %2809 = vmatprep.subr.mxu0 0.0
        %2810 = vmatpush1.msra.mxu0 0.0
        %2811 = vmatprep.subr.mxu0 0.0
        %2812 = vmatpush1.msra.mxu0 0.0
        %2813 = vmatprep.subr.mxu0 0.0
        %2814 = vmatpush1.msra.mxu0 0.0
        %2815 = vmatprep.subr.mxu0 0.0
        %2816 = vmatpush1.msra.mxu0 0.0
        %2817 = vmatprep.subr.mxu0 0.0
        %2818 = vmatpush1.msra.mxu0 0.0
        %2819 = vmatprep.subr.mxu0 0.0
        %2820 = vmatpush1.msra.mxu0 0.0
        %2821 = vmatprep.subr.mxu0 0.0
        %2822 = vmatpush1.msra.mxu0 0.0
        %2823 = vmatprep.subr.mxu0 0.0
        %2824 = vmatpush1.msra.mxu0 0.0
        %2825 = vmatprep.subr.mxu0 0.0
        %2826 = vmatpush1.msra.mxu0 0.0
        %2827 = vmatprep.subr.mxu0 0.0
        %2828 = vmatpush1.msra.mxu0 0.0
        %2829 = vmatprep.subr.mxu0 0.0
        %2830 = vmatpush1.msra.mxu0 0.0
        %2831 = vmatprep.subr.mxu0 0.0
        %2832 = vmatpush1.msra.mxu0 0.0
        %2833 = vmatprep.subr.mxu0 0.0
        %2834 = vmatpush1.msra.mxu0 0.0
        %2835 = vmatprep.subr.mxu0 0.0
        %2836 = vmatpush1.msra.mxu0 0.0
        %2837 = vmatprep.subr.mxu0 0.0
        %2838 = vmatpush1.msra.mxu0 0.0
        %2839 = vmatprep.subr.mxu0 0.0
        %2840 = vmatpush1.msra.mxu0 0.0
        %2841 = vmatprep.subr.mxu0 0.0
        %2842 = vmatpush1.msra.mxu0 0.0
        %2843 = vmatprep.subr.mxu0 0.0
        %2844 = vmatpush1.msra.mxu0 0.0
        %2845 = vmatprep.subr.mxu0 0.0
        %2846 = vmatpush1.msra.mxu0 0.0
        %2847 = vmatprep.subr.mxu0 0.0
        %2848 = vmatpush1.msra.mxu0 0.0
        %2849 = vmatprep.subr.mxu0 0.0
        %2850 = vmatpush1.msra.mxu0 0.0
        %2851 = vmatprep.mubr.f32.mxu0 0.0
        %2852 = vmatmul.mubr.f32.gmra.mrb[0].mxu0 %v2785
        %v2853 = vpop.f32.mrb[0].mxu0
        %v2854 = vadd.f32 0.0, %v2853
        %v2855 = vpop.f32.mrb[0].mxu0
        %2856 = vdwg.mxu0
        %v2857 = vld [vmem:[#allocation7] sm:$0xff]
        %v2858 = vld [vmem:[#allocation7 + $0x8] sm:$0xff]
        %v2859 = vld [vmem:[#allocation7 + $0x10] sm:$0xff]
        %v2860 = vld [vmem:[#allocation7 + $0x18] sm:$0xff]
        %v2861 = vld [vmem:[#allocation7 + $0x20] sm:$0xff]
        %v2862 = vld [vmem:[#allocation7 + $0x28] sm:$0xff]
        %v2863 = vld [vmem:[#allocation7 + $0x30] sm:$0xff]
        %v2864 = vld [vmem:[#allocation7 + $0x38] sm:$0xff]
        %v2865 = vld [vmem:[#allocation7 + $0x40] sm:$0xff]
        %v2866 = vld [vmem:[#allocation7 + $0x48] sm:$0xff]
        %v2867 = vld [vmem:[#allocation7 + $0x50] sm:$0xff]
        %v2868 = vld [vmem:[#allocation7 + $0x58] sm:$0xff]
        %v2869 = vld [vmem:[#allocation7 + $0x60] sm:$0xff]
        %v2870 = vld [vmem:[#allocation7 + $0x68] sm:$0xff]
        %v2871 = vld [vmem:[#allocation7 + $0x70] sm:$0xff]
        %v2872 = vld [vmem:[#allocation7 + $0x78] sm:$0xff]
        %v2873 = vld [vmem:[#allocation7 + $0x80] sm:$0xff]
        %v2874 = vld [vmem:[#allocation7 + $0x88] sm:$0xff]
        %v2875 = vld [vmem:[#allocation7 + $0x90] sm:$0xff]
        %v2876 = vld [vmem:[#allocation7 + $0x98] sm:$0xff]
        %v2877 = vld [vmem:[#allocation7 + $0xa0] sm:$0xff]
        %v2878 = vld [vmem:[#allocation7 + $0xa8] sm:$0xff]
        %v2879 = vld [vmem:[#allocation7 + $0xb0] sm:$0xff]
        %v2880 = vld [vmem:[#allocation7 + $0xb8] sm:$0xff]
        %v2881 = vld [vmem:[#allocation7 + $0xc0] sm:$0xff]
        %v2882 = vld [vmem:[#allocation7 + $0xc8] sm:$0xff]
        %v2883 = vld [vmem:[#allocation7 + $0xd0] sm:$0xff]
        %v2884 = vld [vmem:[#allocation7 + $0xd8] sm:$0xff]
        %v2885 = vld [vmem:[#allocation7 + $0xe0] sm:$0xff]
        %v2886 = vld [vmem:[#allocation7 + $0xe8] sm:$0xff]
        %v2887 = vld [vmem:[#allocation7 + $0xf0] sm:$0xff]
        %v2888 = vld [vmem:[#allocation7 + $0xf8] sm:$0xff]
        %v2905 = vrot.slane %v1832, 7
        %vm2906 = vcmask 1041409
        %v2907 = vsel %vm2906, %v2905, %v1759
        %v2908 = vrot.slane %v1905, 6
        %vm2909 = vcmask 1042434
        %v2910 = vsel %vm2909, %v2908, %v2907
        %v2911 = vrot.slane %v1978, 5
        %vm2912 = vcmask 1043459
        %v2913 = vsel %vm2912, %v2911, %v2910
        %v2914 = vrot.slane %v2051, 4
        %vm2915 = vcmask 1044484
        %v2916 = vsel %vm2915, %v2914, %v2913
        %v2917 = vrot.slane %v2124, 3
        %vm2918 = vcmask 1045509
        %v2919 = vsel %vm2918, %v2917, %v2916
        %v2920 = vrot.slane %v2197, 2
        %vm2921 = vcmask 1046534
        %v2922 = vsel %vm2921, %v2920, %v2919
        %v2923 = vrot.slane %v2270, 1
        %vm2924 = vcmask 1047559
        %v2925 = vsel %vm2924, %v2923, %v2922
        %v2926 = vrot.slane %v2416, 7
        %v2927 = vsel %vm2906, %v2926, %v2343
        %v2928 = vrot.slane %v2489, 6
        %v2929 = vsel %vm2909, %v2928, %v2927
        %v2930 = vrot.slane %v2562, 5
        %v2931 = vsel %vm2912, %v2930, %v2929
        %v2932 = vrot.slane %v2635, 4
        %v2933 = vsel %vm2915, %v2932, %v2931
        %v2934 = vrot.slane %v2708, 3
        %v2935 = vsel %vm2918, %v2934, %v2933
        %v2936 = vrot.slane %v2781, 2
        %v2937 = vsel %vm2921, %v2936, %v2935
        %v2938 = vrot.slane %v2854, 1
        %v2939 = vsel %vm2924, %v2938, %v2937
        %2942 = vmatprep.subr.mxu0 0.0
        %2943 = vmatpush1.msra.mxu0 %v2873
        %2944 = vmatprep.subr.mxu0 0.0
        %2945 = vmatpush1.msra.mxu0 %v2874
        %2946 = vmatprep.subr.mxu0 0.0
        %2947 = vmatpush1.msra.mxu0 %v2875
        %2948 = vmatprep.subr.mxu0 0.0
        %2949 = vmatpush1.msra.mxu0 %v2876
        %2950 = vmatprep.subr.mxu0 0.0
        %2951 = vmatpush1.msra.mxu0 %v2877
        %2952 = vmatprep.subr.mxu0 0.0
        %2953 = vmatpush1.msra.mxu0 %v2878
        %2954 = vmatprep.subr.mxu0 0.0
        %2955 = vmatpush1.msra.mxu0 %v2879
        %2956 = vmatprep.subr.mxu0 0.0
        %2957 = vmatpush1.msra.mxu0 %v2880
        %2958 = vmatprep.subr.mxu0 0.0
        %2959 = vmatpush1.msra.mxu0 %v2881
        %2960 = vmatprep.subr.mxu0 0.0
        %2961 = vmatpush1.msra.mxu0 %v2882
        %2962 = vmatprep.subr.mxu0 0.0
        %2963 = vmatpush1.msra.mxu0 %v2883
        %2964 = vmatprep.subr.mxu0 0.0
        %2965 = vmatpush1.msra.mxu0 %v2884
        %2966 = vmatprep.subr.mxu0 0.0
        %2967 = vmatpush1.msra.mxu0 %v2885
        %2968 = vmatprep.subr.mxu0 0.0
        %2969 = vmatpush1.msra.mxu0 %v2886
        %2970 = vmatprep.subr.mxu0 0.0
        %2971 = vmatpush1.msra.mxu0 %v2887
        %2972 = vmatprep.subr.mxu0 0.0
        %2973 = vmatpush1.msra.mxu0 %v2888
        %2974 = vmatprep.subr.mxu0 0.0
        %2975 = vmatpush1.msra.mxu0 0.0
        %2976 = vmatprep.subr.mxu0 0.0
        %2977 = vmatpush1.msra.mxu0 0.0
        %2978 = vmatprep.subr.mxu0 0.0
        %2979 = vmatpush1.msra.mxu0 0.0
        %2980 = vmatprep.subr.mxu0 0.0
        %2981 = vmatpush1.msra.mxu0 0.0
        %2982 = vmatprep.subr.mxu0 0.0
        %2983 = vmatpush1.msra.mxu0 0.0
        %2984 = vmatprep.subr.mxu0 0.0
        %2985 = vmatpush1.msra.mxu0 0.0
        %2986 = vmatprep.subr.mxu0 0.0
        %2987 = vmatpush1.msra.mxu0 0.0
        %2988 = vmatprep.subr.mxu0 0.0
        %2989 = vmatpush1.msra.mxu0 0.0
        %2990 = vmatprep.subr.mxu0 0.0
        %2991 = vmatpush1.msra.mxu0 0.0
        %2992 = vmatprep.subr.mxu0 0.0
        %2993 = vmatpush1.msra.mxu0 0.0
        %2994 = vmatprep.subr.mxu0 0.0
        %2995 = vmatpush1.msra.mxu0 0.0
        %2996 = vmatprep.subr.mxu0 0.0
        %2997 = vmatpush1.msra.mxu0 0.0
        %2998 = vmatprep.subr.mxu0 0.0
        %2999 = vmatpush1.msra.mxu0 0.0
        %3000 = vmatprep.subr.mxu0 0.0
        %3001 = vmatpush1.msra.mxu0 0.0
        %3002 = vmatprep.subr.mxu0 0.0
        %3003 = vmatpush1.msra.mxu0 0.0
        %3004 = vmatprep.subr.mxu0 0.0
        %3005 = vmatpush1.msra.mxu0 0.0
        %3006 = vmatprep.mubr.f32.mxu0 0.0
        %3007 = vmatmul.mubr.f32.gmra.mrb[0].mxu0 %v2925
        %v3008 = vpop.f32.mrb[0].mxu0
        %v3009 = vadd.f32 0.0, %v3008
        %v3010 = vpop.f32.mrb[0].mxu0
        %3011 = vmatprep.mubr.f32.mxu0 0.0
        %3012 = vmatmul.mubr.f32.gmra.mrb[0].mxu0 %v2939
        %v3013 = vpop.f32.mrb[0].mxu0
        %v3014 = vadd.f32 0.0, %v3013
        %v3015 = vpop.f32.mrb[0].mxu0
        %3016 = vdwg.mxu0
        %v3033 = vcombine.low %v375, %v376
        %v3034 = vcombine.low %v377, %v378
        %v3035 = vcombine.low %v379, %v380
        %v3036 = vcombine.low %v381, %v382
        %v3038 = vunpack.c.l.s4 1966171168
        %v3039 = vunpack.c.0.s8 %v3038
        %v3040 = vlaneseq
        %v3041 = vshrl.u32 %v3040, 7
        %v3042 = vsub.s32 %v3039, %v3041
        %v3043 = vrot.slane %v3033, %v3042
        %v3045 = vunpack.c.l.s4 1966171168
        %v3046 = vunpack.c.0.s8 %v3045
        %v3047 = vlaneseq
        %v3048 = vshrl.u32 %v3047, 7
        %v3049 = vsub.s32 %v3046, %v3048
        %v3050 = vrot.slane %v3034, %v3049
        %v3052 = vunpack.c.l.s4 1966171168
        %v3053 = vunpack.c.0.s8 %v3052
        %v3054 = vlaneseq
        %v3055 = vshrl.u32 %v3054, 7
        %v3056 = vsub.s32 %v3053, %v3055
        %v3057 = vrot.slane %v3035, %v3056
        %v3059 = vunpack.c.l.s4 1966171168
        %v3060 = vunpack.c.0.s8 %v3059
        %v3061 = vlaneseq
        %v3062 = vshrl.u32 %v3061, 7
        %v3063 = vsub.s32 %v3060, %v3062
        %v3064 = vrot.slane %v3036, %v3063
        %v3065 = vcombine.low %v3043, %v3050
        %v3066 = vcombine.low %v3057, %v3064
        %v3068 = vunpack.c.l.s4 1966171168
        %v3069 = vunpack.c.0.s8 %v3068
        %v3070 = vlaneseq
        %v3071 = vshrl.u32 %v3070, 7
        %v3072 = vsub.s32 %v3069, %v3071
        %v3073 = vrot.slane %v3065, %v3072
        %v3075 = vunpack.c.l.s4 1966171168
        %v3076 = vunpack.c.0.s8 %v3075
        %v3077 = vlaneseq
        %v3078 = vshrl.u32 %v3077, 7
        %v3079 = vsub.s32 %v3076, %v3078
        %v3080 = vrot.slane %v3066, %v3079
        %v3081 = vcombine.low %v3073, %v3080
        %v3082 = vcombine.low %v383, %v384
        %v3083 = vcombine.low %v385, %v386
        %v3084 = vcombine.low %v387, %v388
        %v3085 = vcombine.low %v389, %v390
        %v3087 = vunpack.c.l.s4 1966171168
        %v3088 = vunpack.c.0.s8 %v3087
        %v3089 = vlaneseq
        %v3090 = vshrl.u32 %v3089, 7
        %v3091 = vsub.s32 %v3088, %v3090
        %v3092 = vrot.slane %v3082, %v3091
        %v3094 = vunpack.c.l.s4 1966171168
        %v3095 = vunpack.c.0.s8 %v3094
        %v3096 = vlaneseq
        %v3097 = vshrl.u32 %v3096, 7
        %v3098 = vsub.s32 %v3095, %v3097
        %v3099 = vrot.slane %v3083, %v3098
        %v3101 = vunpack.c.l.s4 1966171168
        %v3102 = vunpack.c.0.s8 %v3101
        %v3103 = vlaneseq
        %v3104 = vshrl.u32 %v3103, 7
        %v3105 = vsub.s32 %v3102, %v3104
        %v3106 = vrot.slane %v3084, %v3105
        %v3108 = vunpack.c.l.s4 1966171168
        %v3109 = vunpack.c.0.s8 %v3108
        %v3110 = vlaneseq
        %v3111 = vshrl.u32 %v3110, 7
        %v3112 = vsub.s32 %v3109, %v3111
        %v3113 = vrot.slane %v3085, %v3112
        %v3114 = vcombine.low %v3092, %v3099
        %v3115 = vcombine.low %v3106, %v3113
        %v3117 = vunpack.c.l.s4 1966171168
        %v3118 = vunpack.c.0.s8 %v3117
        %v3119 = vlaneseq
        %v3120 = vshrl.u32 %v3119, 7
        %v3121 = vsub.s32 %v3118, %v3120
        %v3122 = vrot.slane %v3114, %v3121
        %v3124 = vunpack.c.l.s4 1966171168
        %v3125 = vunpack.c.0.s8 %v3124
        %v3126 = vlaneseq
        %v3127 = vshrl.u32 %v3126, 7
        %v3128 = vsub.s32 %v3125, %v3127
        %v3129 = vrot.slane %v3115, %v3128
        %v3130 = vcombine.low %v3122, %v3129
        %3133 = vmatprep.subr.mxu0 0.0
        %3134 = vmatpush1.msra.mxu0 %v2857
        %3135 = vmatprep.subr.mxu0 0.0
        %3136 = vmatpush1.msra.mxu0 %v2858
        %3137 = vmatprep.subr.mxu0 0.0
        %3138 = vmatpush1.msra.mxu0 %v2859
        %3139 = vmatprep.subr.mxu0 0.0
        %3140 = vmatpush1.msra.mxu0 %v2860
        %3141 = vmatprep.subr.mxu0 0.0
        %3142 = vmatpush1.msra.mxu0 %v2861
        %3143 = vmatprep.subr.mxu0 0.0
        %3144 = vmatpush1.msra.mxu0 %v2862
        %3145 = vmatprep.subr.mxu0 0.0
        %3146 = vmatpush1.msra.mxu0 %v2863
        %3147 = vmatprep.subr.mxu0 0.0
        %3148 = vmatpush1.msra.mxu0 %v2864
        %3149 = vmatprep.subr.mxu0 0.0
        %3150 = vmatpush1.msra.mxu0 %v2865
        %3151 = vmatprep.subr.mxu0 0.0
        %3152 = vmatpush1.msra.mxu0 %v2866
        %3153 = vmatprep.subr.mxu0 0.0
        %3154 = vmatpush1.msra.mxu0 %v2867
        %3155 = vmatprep.subr.mxu0 0.0
        %3156 = vmatpush1.msra.mxu0 %v2868
        %3157 = vmatprep.subr.mxu0 0.0
        %3158 = vmatpush1.msra.mxu0 %v2869
        %3159 = vmatprep.subr.mxu0 0.0
        %3160 = vmatpush1.msra.mxu0 %v2870
        %3161 = vmatprep.subr.mxu0 0.0
        %3162 = vmatpush1.msra.mxu0 %v2871
        %3163 = vmatprep.subr.mxu0 0.0
        %3164 = vmatpush1.msra.mxu0 %v2872
        %3165 = vmatprep.subr.mxu0 0.0
        %3166 = vmatpush1.msra.mxu0 0.0
        %3167 = vmatprep.subr.mxu0 0.0
        %3168 = vmatpush1.msra.mxu0 0.0
        %3169 = vmatprep.subr.mxu0 0.0
        %3170 = vmatpush1.msra.mxu0 0.0
        %3171 = vmatprep.subr.mxu0 0.0
        %3172 = vmatpush1.msra.mxu0 0.0
        %3173 = vmatprep.subr.mxu0 0.0
        %3174 = vmatpush1.msra.mxu0 0.0
        %3175 = vmatprep.subr.mxu0 0.0
        %3176 = vmatpush1.msra.mxu0 0.0
        %3177 = vmatprep.subr.mxu0 0.0
        %3178 = vmatpush1.msra.mxu0 0.0
        %3179 = vmatprep.subr.mxu0 0.0
        %3180 = vmatpush1.msra.mxu0 0.0
        %3181 = vmatprep.subr.mxu0 0.0
        %3182 = vmatpush1.msra.mxu0 0.0
        %3183 = vmatprep.subr.mxu0 0.0
        %3184 = vmatpush1.msra.mxu0 0.0
        %3185 = vmatprep.subr.mxu0 0.0
        %3186 = vmatpush1.msra.mxu0 0.0
        %3187 = vmatprep.subr.mxu0 0.0
        %3188 = vmatpush1.msra.mxu0 0.0
        %3189 = vmatprep.subr.mxu0 0.0
        %3190 = vmatpush1.msra.mxu0 0.0
        %3191 = vmatprep.subr.mxu0 0.0
        %3192 = vmatpush1.msra.mxu0 0.0
        %3193 = vmatprep.subr.mxu0 0.0
        %3194 = vmatpush1.msra.mxu0 0.0
        %3195 = vmatprep.subr.mxu0 0.0
        %3196 = vmatpush1.msra.mxu0 0.0
        %3197 = vmatprep.mubr.f32.mxu0 0.0
        %3198 = vmatmul.mubr.f32.gmra.mrb[0].mxu0 %v3081
        %v3199 = vpop.f32.mrb[0].mxu0
        %v3200 = vadd.f32 %v3009, %v3199
        %v3201 = vpop.f32.mrb[0].mxu0
        %3202 = vmatprep.mubr.f32.mxu0 0.0
        %3203 = vmatmul.mubr.f32.gmra.mrb[0].mxu0 %v3130
        %v3204 = vpop.f32.mrb[0].mxu0
        %v3205 = vadd.f32 %v3014, %v3204
        %v3206 = vpop.f32.mrb[0].mxu0
        %3207 = vdwg.mxu0
        %v3210 = vcombine.high %v3200, %v3200
        %v3212 = vunpack.c.l.s4 1966171168
        %v3213 = vunpack.c.0.s8 %v3212
        %v3214 = vlaneseq
        %v3215 = vshrl.u32 %v3214, 7
        %v3216 = vsub.s32 %v3213, %v3215
        %v3217 = vrot.slane %v3200, %v3216
        %v3219 = vunpack.c.l.s4 1966171168
        %v3220 = vunpack.c.0.s8 %v3219
        %v3221 = vlaneseq
        %v3222 = vshrl.u32 %v3221, 7
        %v3223 = vsub.s32 %v3220, %v3222
        %v3224 = vrot.slane %v3210, %v3223
        %v3225 = vcombine.high %v3217, %v3217
        %v3226 = vcombine.high %v3224, %v3224
        %v3228 = vunpack.c.l.s4 1966171168
        %v3229 = vunpack.c.0.s8 %v3228
        %v3230 = vlaneseq
        %v3231 = vshrl.u32 %v3230, 7
        %v3232 = vsub.s32 %v3229, %v3231
        %v3233 = vrot.slane %v3217, %v3232
        %v3235 = vunpack.c.l.s4 1966171168
        %v3236 = vunpack.c.0.s8 %v3235
        %v3237 = vlaneseq
        %v3238 = vshrl.u32 %v3237, 7
        %v3239 = vsub.s32 %v3236, %v3238
        %v3240 = vrot.slane %v3224, %v3239
        %v3242 = vunpack.c.l.s4 1966171168
        %v3243 = vunpack.c.0.s8 %v3242
        %v3244 = vlaneseq
        %v3245 = vshrl.u32 %v3244, 7
        %v3246 = vsub.s32 %v3243, %v3245
        %v3247 = vrot.slane %v3225, %v3246
        %v3249 = vunpack.c.l.s4 1966171168
        %v3250 = vunpack.c.0.s8 %v3249
        %v3251 = vlaneseq
        %v3252 = vshrl.u32 %v3251, 7
        %v3253 = vsub.s32 %v3250, %v3252
        %v3254 = vrot.slane %v3226, %v3253
        %v3255 = vcombine.high %v3233, %v3233
        %v3256 = vcombine.high %v3240, %v3240
        %v3257 = vcombine.high %v3247, %v3247
        %v3258 = vcombine.high %v3254, %v3254
        %v3259 = vcombine.high %v3205, %v3205
        %v3261 = vunpack.c.l.s4 1966171168
        %v3262 = vunpack.c.0.s8 %v3261
        %v3263 = vlaneseq
        %v3264 = vshrl.u32 %v3263, 7
        %v3265 = vsub.s32 %v3262, %v3264
        %v3266 = vrot.slane %v3205, %v3265
        %v3268 = vunpack.c.l.s4 1966171168
        %v3269 = vunpack.c.0.s8 %v3268
        %v3270 = vlaneseq
        %v3271 = vshrl.u32 %v3270, 7
        %v3272 = vsub.s32 %v3269, %v3271
        %v3273 = vrot.slane %v3259, %v3272
        %v3274 = vcombine.high %v3266, %v3266
        %v3275 = vcombine.high %v3273, %v3273
        %v3277 = vunpack.c.l.s4 1966171168
        %v3278 = vunpack.c.0.s8 %v3277
        %v3279 = vlaneseq
        %v3280 = vshrl.u32 %v3279, 7
        %v3281 = vsub.s32 %v3278, %v3280
        %v3282 = vrot.slane %v3266, %v3281
        %v3284 = vunpack.c.l.s4 1966171168
        %v3285 = vunpack.c.0.s8 %v3284
        %v3286 = vlaneseq
        %v3287 = vshrl.u32 %v3286, 7
        %v3288 = vsub.s32 %v3285, %v3287
        %v3289 = vrot.slane %v3273, %v3288
        %v3291 = vunpack.c.l.s4 1966171168
        %v3292 = vunpack.c.0.s8 %v3291
        %v3293 = vlaneseq
        %v3294 = vshrl.u32 %v3293, 7
        %v3295 = vsub.s32 %v3292, %v3294
        %v3296 = vrot.slane %v3274, %v3295
        %v3298 = vunpack.c.l.s4 1966171168
        %v3299 = vunpack.c.0.s8 %v3298
        %v3300 = vlaneseq
        %v3301 = vshrl.u32 %v3300, 7
        %v3302 = vsub.s32 %v3299, %v3301
        %v3303 = vrot.slane %v3275, %v3302
        %v3304 = vcombine.high %v3282, %v3282
        %v3305 = vcombine.high %v3289, %v3289
        %v3306 = vcombine.high %v3296, %v3296
        %v3307 = vcombine.high %v3303, %v3303
        %v3324 = vtanh.pop %v3233
        %v3325 = vtanh.pop %v3247
        %v3326 = vtanh.pop %v3255
        %v3327 = vtanh.pop %v3257
        %v3328 = vtanh.pop %v3240
        %v3329 = vtanh.pop %v3254
        %v3330 = vtanh.pop %v3256
        %v3331 = vtanh.pop %v3258
        %v3332 = vtanh.pop %v3282
        %v3333 = vtanh.pop %v3296
        %v3334 = vtanh.pop %v3304
        %v3335 = vtanh.pop %v3306
        %v3336 = vtanh.pop %v3289
        %v3337 = vtanh.pop %v3303
        %v3338 = vtanh.pop %v3305
        %v3339 = vtanh.pop %v3307
        %3340 = vst [vmem:[%s243] sm:$0x1] %v3324
        %3341 = vst [vmem:[%s243 + $0x1] sm:$0x1] %v3325
        %3342 = vst [vmem:[%s243 + $0x2] sm:$0x1] %v3326
        %3343 = vst [vmem:[%s243 + $0x3] sm:$0x1] %v3327
        %3344 = vst [vmem:[%s243 + $0x4] sm:$0x1] %v3328
        %3345 = vst [vmem:[%s243 + $0x5] sm:$0x1] %v3329
        %3346 = vst [vmem:[%s243 + $0x6] sm:$0x1] %v3330
        %3347 = vst [vmem:[%s243 + $0x7] sm:$0x1] %v3331
        %3348 = vst [vmem:[%s243 + $0x8] sm:$0x1] %v3332
        %3349 = vst [vmem:[%s243 + $0x9] sm:$0x1] %v3333
        %3350 = vst [vmem:[%s243 + $0xa] sm:$0x1] %v3334
        %3351 = vst [vmem:[%s243 + $0xb] sm:$0x1] %v3335
        %3352 = vst [vmem:[%s243 + $0xc] sm:$0x1] %v3336
        %3353 = vst [vmem:[%s243 + $0xd] sm:$0x1] %v3337
        %3354 = vst [vmem:[%s243 + $0xe] sm:$0x1] %v3338
        %3355 = vst [vmem:[%s243 + $0xf] sm:$0x1] %v3339
        %s3356 = sand.u32 %s104, 1
        %s3357 = scalar_lea.sflag [#allocation4], %s3356
        %s3358 = sand.u32 %s104, 1
        %s3359 = smul.addr %s3358, 16
        %s3360 = scalar_lea.vmem [#allocation8], %s3359
        // Predicated region
        $region45: #{tpu_custom_call.1} parent=31 // pred_check
          %p3361 = pneg %p114
        $region46: #{tpu_custom_call.1} parent=31 // pred_check_branch
          %3363 = sbr.rel (%p3361) target = $region48
        $region47: #{tpu_custom_call.1} parent=31 // pred_region
          %s3364 = smul.u32 16, %s23
          %s3366 = ssub.s32 256, 256
          %3367 = vsyncadd %s3357, %s3366
          %s3368 = smul.addr %s3364, 16
          %s3369 = scalar_lea.hbm %s3, %s3368
          %s3370 = sshll.u32 %s3360, 4
          %s3371 = int_to_ptr.vmem [resolvable:$true] %s3370
          %3376 = dma.vmem_to_hbm [thread:$0]  %s3371, 256, %s3369, %s3357, 16, 16, 1
        $region48: #{tpu_custom_call.1} parent=31 // pred_fallthru
          _
      $region32: #{tpu_custom_call.1} parent=5 // pred_fallthru
        _
      %p3377 = scmp.le.s32.totalorder 2, %s18
      // Predicated region
      $region49: #{tpu_custom_call.1} parent=5 // pred_check
        %p3378 = pneg %p3377
      $region50: #{tpu_custom_call.1} parent=5 // pred_check_branch
        %3380 = sbr.rel (%p3378) target = $region52
      $region51: #{tpu_custom_call.1} parent=5 // pred_region
        %s3381 = ssub.s32 %s18, 2
        // Predicated region
        $region53: #{tpu_custom_call.1} parent=51 // pred_check
          %p3382 = pneg %p120
        $region54: #{tpu_custom_call.1} parent=51 // pred_check_branch
          %3384 = sbr.rel (%p3382) target = $region56
        $region55: #{tpu_custom_call.1} parent=51 // pred_region
          %s3385 = sand.u32 %s105, 1
          %s3386 = scalar_lea.sflag [#allocation4], %s3385
          %s3387 = sand.u32 %s105, 1
          %s3388 = smul.addr %s3387, 16
          %s3389 = scalar_lea.vmem [#allocation8], %s3388
          %3390 = dma.done %s3386, 256
        $region56: #{tpu_custom_call.1} parent=51 // pred_fallthru
          _
      $region52: #{tpu_custom_call.1} parent=5 // pred_fallthru
        _
    $region6: #{tpu_custom_call.1} parent=1 // loop_footer
      %s22 = sadd.s32 1, %s18
    $region7: #{tpu_custom_call.1} parent=1 // loop_footer_branch
      %17 = sbr.rel target = $region3
    $region8: #{tpu_custom_call.1} parent=1 // loop_exit
      _
    %3391 = vsyncpa [#allocation3], 1
    %s3392 = scalar_lea.sflag [#allocation3], 1
    %3393 = vsyncpa %s3392, 1
    %3394 = vsyncpa [#allocation6], 1
    %s3395 = scalar_lea.sflag [#allocation6], 1
    %3396 = vsyncpa %s3395, 1
    %3397 = vsyncpa [#allocation4], 1
    %s3398 = scalar_lea.sflag [#allocation4], 1
    %3399 = vsyncpa %s3398, 1

</llo_original>
